<compile_context>
chip_gen: v7x
topology: tpu7x:2x2x1
jax: 0.10.0
libtpu: 0.0.40
codegen_flags: <defaults>
</compile_context>

<pallas_src>
import functools

import jax
import jax.numpy as jnp
import numpy as np
from jax import lax
from jax.experimental import pallas as pl
from jax.experimental.pallas import tpu as pltpu


# ---------------------------------------------------------------------------
# fc kernel: y = x @ W + b, tiled over the output-feature dim when large.
# ---------------------------------------------------------------------------
def _fc_kernel(x_ref, w_ref, b_ref, o_ref):
    o_ref[...] = (
        jnp.dot(x_ref[...], w_ref[...], preferred_element_type=jnp.float32)
        + b_ref[...]
    )


def _pick_tile(F, cap=4096):
    if F <= cap:
        return F
    for cand in (4096, 2048, 1024, 512, 256, 128):
        if F % cand == 0:
            return cand
    return F


def fc_forward(x, w, b):
    B, L = x.shape
    F = w.shape[1]
    tn = _pick_tile(F)
    return pl.pallas_call(
        _fc_kernel,
        out_shape=jax.ShapeDtypeStruct((B, F), jnp.float32),
        grid=(F // tn,),
        in_specs=[
            pl.BlockSpec((B, L), lambda j: (0, 0)),     # latent block: loaded once
            pl.BlockSpec((L, tn), lambda j: (0, j)),    # weight streamed over F tiles
            pl.BlockSpec((1, tn), lambda j: (0, j)),
        ],
        out_specs=pl.BlockSpec((B, tn), lambda j: (0, j)),
        compiler_params=pltpu.CompilerParams(dimension_semantics=("parallel",)),
    )(x, w, b.reshape(1, F))


# ---------------------------------------------------------------------------
# One ConvTranspose2d(k=4, s=2, p=1) stage on row-major activations.
#
#   x    : (H, W*cin)       row m of the input image, channels fastest.
#   wc   : (W*cin, 2*Nout)  banded "center" weights  [even rows (ky=1) | odd rows (ky=2)]
#   wn   : (W*cin, 2*Nout)  banded row-neighbour weights [ky=3 | ky=0]
#   brow : (1, Nout)        bias tiled over the 2W output columns.
#   out  : (2H, Nout)       with Nout = 2*W*cout == the next stage's row width.
#
# The +-1 input-row shift and the even/odd output-row interleave are folded
# into 0/1 routing matrices applied on the MXU (no rolls, no strided stores,
# out-of-image rows drop out of the routing matrices automatically).
# ---------------------------------------------------------------------------
def _stage_val(x, wc, wn, brow, *, H, Nout, act):
    f32 = jnp.float32
    zc = jnp.dot(x, wc, preferred_element_type=f32)   # (H, 2*Nout)
    zn = jnp.dot(x, wn, preferred_element_type=f32)   # (H, 2*Nout)

    oy = lax.broadcasted_iota(jnp.int32, (2 * H, H), 0)
    j = lax.broadcasted_iota(jnp.int32, (2 * H, H), 1)
    r_ec = jnp.where(oy == 2 * j, 1.0, 0.0).astype(f32)      # x[m]   -> row 2m   (ky=1)
    r_oc = jnp.where(oy == 2 * j + 1, 1.0, 0.0).astype(f32)  # x[m]   -> row 2m+1 (ky=2)
    r_eu = jnp.where(oy == 2 * j + 2, 1.0, 0.0).astype(f32)  # x[m-1] -> row 2m   (ky=3)
    r_od = jnp.where(oy == 2 * j - 1, 1.0, 0.0).astype(f32)  # x[m+1] -> row 2m+1 (ky=0)

    y = jnp.dot(r_ec, zc[:, :Nout], preferred_element_type=f32)
    y = y + jnp.dot(r_oc, zc[:, Nout:], preferred_element_type=f32)
    y = y + jnp.dot(r_eu, zn[:, :Nout], preferred_element_type=f32)
    y = y + jnp.dot(r_od, zn[:, Nout:], preferred_element_type=f32)
    y = y + brow
    if act == "relu":
        return jnp.maximum(y, 0.0)
    return 1.0 / (1.0 + jnp.exp(-y))                  # exact sigmoid (EUP exp + divide)


# ---------------------------------------------------------------------------
# Fused decoder kernel: all three deconv stages in one pallas_call, grid=(B,).
# Weights use constant-index BlockSpecs (fetched once); intermediates stay in
# VMEM; the output block (1, 128, 128*cout) is lane- and sublane-dense.
# ---------------------------------------------------------------------------
def _decoder_kernel(x_ref, wc1_ref, wn1_ref, br1_ref, wc2_ref, wn2_ref, br2_ref,
                    wc3_ref, wn3_ref, br3_ref, o_ref, *, N1, N2, N3):
    h = x_ref[0]                                                    # (16, 16*c1)
    h = _stage_val(h, wc1_ref[...], wn1_ref[...], br1_ref[...],
                   H=16, Nout=N1, act="relu")                       # (32, 32*c2)
    h = _stage_val(h, wc2_ref[...], wn2_ref[...], br2_ref[...],
                   H=32, Nout=N2, act="relu")                       # (64, 64*c3)
    h = _stage_val(h, wc3_ref[...], wn3_ref[...], br3_ref[...],
                   H=64, Nout=N3, act="sigmoid")                    # (128, 128*cout)
    o_ref[0] = h


def decode_forward(x, wc1, wn1, br1, wc2, wn2, br2, wc3, wn3, br3):
    B, H1, Wc1 = x.shape
    assert H1 == 16, "Decoder2D's fc always maps to a 16x16 grid"
    N1 = wc1.shape[1] // 2
    N2 = wc2.shape[1] // 2
    N3 = wc3.shape[1] // 2
    kernel = functools.partial(_decoder_kernel, N1=N1, N2=N2, N3=N3)
    cmap = lambda b: (0, 0)   # constant block index -> weight DMA'd once per call
    return pl.pallas_call(
        kernel,
        out_shape=jax.ShapeDtypeStruct((B, 128, N3), jnp.float32),
        grid=(B,),
        in_specs=[
            pl.BlockSpec((1, H1, Wc1), lambda b: (b, 0, 0)),
            pl.BlockSpec(wc1.shape, cmap), pl.BlockSpec(wn1.shape, cmap),
            pl.BlockSpec(br1.shape, cmap),
            pl.BlockSpec(wc2.shape, cmap), pl.BlockSpec(wn2.shape, cmap),
            pl.BlockSpec(br2.shape, cmap),
            pl.BlockSpec(wc3.shape, cmap), pl.BlockSpec(wn3.shape, cmap),
            pl.BlockSpec(br3.shape, cmap),
        ],
        out_specs=pl.BlockSpec((1, 128, N3), lambda b: (b, 0, 0)),
        compiler_params=pltpu.CompilerParams(dimension_semantics=("parallel",)),
    )(x, wc1, wn1, br1, wc2, wn2, br2, wc3, wn3, br3)


# ---------------------------------------------------------------------------
# Host-side weight preparation: banded row-matmul weights.
#
# ConvTranspose2d(k4, s2, p1): output (oy, ox) = (2m+py, 2n+px) uses kernel
# indices ky = oy - 2*iy + 1, kx = ox - 2*ix + 1 for the valid input pixels.
# ---------------------------------------------------------------------------
def make_band_pair(w, W):
    """w: (cin, cout, 4, 4) -> (wc, wn), each (W*cin, 2*Nout), Nout = 2*W*cout."""
    w = np.asarray(w, np.float32)
    cin, cout = w.shape[0], w.shape[1]
    Nout = 2 * W * cout

    def band(ky):
        b = np.zeros((W * cin, Nout), np.float32)
        for n in range(W):
            for px in (0, 1):
                for ix in (n - 1, n, n + 1):
                    if not 0 <= ix < W:
                        continue
                    kx = 2 * n + px - 2 * ix + 1
                    if 0 <= kx < 4:
                        b[ix * cin:(ix + 1) * cin,
                          (2 * n + px) * cout:(2 * n + px + 1) * cout] = w[:, :, ky, kx]
        return b

    wc = np.concatenate([band(1), band(2)], axis=1)   # center taps  (even | odd rows)
    wn = np.concatenate([band(3), band(0)], axis=1)   # neighbour taps (even | odd rows)
    return jnp.asarray(wc), jnp.asarray(wn)


# ---------------------------------------------------------------------------
# Pure-JAX reference (NCHW, identical math) used only for verification.
# ---------------------------------------------------------------------------
def _conv_transpose_ref(x, w, b, act):
    rhs = jnp.transpose(jnp.flip(w, (2, 3)), (1, 0, 2, 3))   # (cout, cin, 4, 4)
    y = lax.conv_general_dilated(
        x, rhs,
        window_strides=(1, 1),
        padding=[(2, 2), (2, 2)],
        lhs_dilation=(2, 2),
        dimension_numbers=("NCHW", "OIHW", "NCHW"),
    ) + b.reshape(1, -1, 1, 1)
    return jnp.maximum(y, 0.0) if act == "relu" else jax.nn.sigmoid(y)


class Decoder2DPallas:
    """Pallas port of Decoder2D (fc -> 3x ConvTranspose2d k4 s2 p1)."""

    def __init__(self, latent_dim=256, base_channels=32, out_channels=1, *, key):
        c1, c2, c3 = base_channels * 4, base_channels * 2, base_channels
        self.latent_dim = latent_dim
        self.c1, self.c2, self.c3, self.cout = c1, c2, c3, out_channels
        F = c1 * 16 * 16
        ks = jax.random.split(key, 8)

        def init(k, shape, fan_in):
            return (jax.random.normal(k, shape, dtype=jnp.float32)
                    / np.sqrt(float(fan_in))).astype(jnp.float32)

        # Logical (PyTorch-convention) parameters.
        self.w_fc = init(ks[0], (latent_dim, F), latent_dim)
        self.b_fc = init(ks[1], (F,), latent_dim)
        self.w1 = init(ks[2], (c1, c2, 4, 4), c1 * 16)
        self.b1 = init(ks[3], (c2,), c1 * 16)
        self.w2 = init(ks[4], (c2, c3, 4, 4), c2 * 16)
        self.b2 = init(ks[5], (c3,), c2 * 16)
        self.w3 = init(ks[6], (c3, out_channels, 4, 4), c3 * 16)
        self.b3 = init(ks[7], (out_channels,), c3 * 16)

        # Kernel-layout parameters ------------------------------------------
        # fc columns pre-permuted to (row, col, channel) order so the fc
        # output reshapes straight into the deconv row layout (no transpose).
        wf, bf = np.asarray(self.w_fc), np.asarray(self.b_fc)
        self.w_fc_k = jnp.asarray(
            wf.reshape(latent_dim, c1, 16, 16).transpose(0, 2, 3, 1).reshape(latent_dim, F))
        self.b_fc_k = jnp.asarray(
            bf.reshape(c1, 16, 16).transpose(1, 2, 0).reshape(F))

        def bias_row(b, W):
            return jnp.asarray(np.tile(np.asarray(b, np.float32), 2 * W)[None, :])

        # TODO(synk): for large channel counts (e.g. the base_channels=32 default)
        # these band matrices no longer fit VMEM; that regime needs a K/N-tiled
        # tap-matmul variant instead of the VMEM-resident banded layout.
        self.wc1, self.wn1 = make_band_pair(self.w1, 16)
        self.wc2, self.wn2 = make_band_pair(self.w2, 32)
        self.wc3, self.wn3 = make_band_pair(self.w3, 64)
        self.brow1 = bias_row(self.b1, 16)
        self.brow2 = bias_row(self.b2, 32)
        self.brow3 = bias_row(self.b3, 64)

    def __call__(self, x):
        B = x.shape[0]
        y = fc_forward(x, self.w_fc_k, self.b_fc_k)       # (B, 16*16*c1)
        y = y.reshape(B, 16, 16 * self.c1)                # only XLA reshape (tiny)
        y = decode_forward(y, self.wc1, self.wn1, self.brow1,
                           self.wc2, self.wn2, self.brow2,
                           self.wc3, self.wn3, self.brow3)   # (B, 128, 128*cout)
        if self.cout == 1:
            return y.reshape(B, 1, 128, 128)
        return y.reshape(B, 128, 128, self.cout).transpose(0, 3, 1, 2)

    def reference(self, x):
        B = x.shape[0]
        y = x @ self.w_fc + self.b_fc
        y = y.reshape(B, self.c1, 16, 16)
        y = _conv_transpose_ref(y, self.w1, self.b1, "relu")
        y = _conv_transpose_ref(y, self.w2, self.b2, "relu")
        y = _conv_transpose_ref(y, self.w3, self.b3, "sigmoid")
        return y


if __name__ == "__main__":
    B, latent_dim, base_channels, out_channels = 2, 32, 4, 1
    key = jax.random.PRNGKey(0)
    x_key, p_key = jax.random.split(key)
    x = jax.random.normal(x_key, (B, latent_dim), dtype=jnp.float32)

    model = Decoder2DPallas(latent_dim=latent_dim, base_channels=base_channels,
                            out_channels=out_channels, key=p_key)

    fwd = jax.jit(lambda v: model(v))
    out = jax.block_until_ready(fwd(x))
    assert out.shape == (B, out_channels, 128, 128), out.shape

    ref = jax.block_until_ready(model.reference(x))
    np.testing.assert_allclose(np.asarray(out), np.asarray(ref),
                               rtol=5e-3, atol=5e-3)

    print("KERNEL_OK")
</pallas_src>

<mosaic_0001>
module attributes {stable_mosaic.version = 11 : i64} {
  func.func @_fc_kernel(%arg0: i32, %arg1: memref<2x32xf32, #tpu.memory_space<vmem>>, %arg2: memref<32x4096xf32, #tpu.memory_space<vmem>>, %arg3: memref<1x4096xf32, #tpu.memory_space<vmem>>, %arg4: memref<2x4096xf32, #tpu.memory_space<vmem>>) attributes {dimension_semantics = [#tpu.dimension_semantics<parallel>], iteration_bounds = array<i64: 1>, scalar_prefetch = 0 : i64, scratch_operands = 0 : i64, tpu.core_type = #tpu.core_type<tc>, window_params = [{pipeline_mode = #tpu.pipeline_mode<synchronous>, transform_indices = @transform_0, window_bounds = array<i64: 2, 32>}, {transform_indices = @transform_1, window_bounds = array<i64: 32, 4096>}, {transform_indices = @transform_2, window_bounds = array<i64: 1, 4096>}, {transform_indices = @transform_3, window_bounds = array<i64: 2, 4096>}]} {
    %c0 = arith.constant 0 : index
    %c0_0 = arith.constant 0 : index
    %0 = vector.load %arg1[%c0, %c0_0] : memref<2x32xf32, #tpu.memory_space<vmem>>, vector<2x32xf32>
    %c0_1 = arith.constant 0 : index
    %c0_2 = arith.constant 0 : index
    %1 = vector.load %arg2[%c0_1, %c0_2] : memref<32x4096xf32, #tpu.memory_space<vmem>>, vector<32x4096xf32>
    %cst = arith.constant dense<0.000000e+00> : vector<2x4096xf32>
    %2 = tpu.matmul %0, %1, %cst {dimension_numbers = #tpu.dot_dimension_numbers<[1], [0], [0], [1], [0, 0, 1, 1], [], []>} : vector<2x32xf32>, vector<32x4096xf32>, vector<2x4096xf32> -> vector<2x4096xf32>
    %c0_3 = arith.constant 0 : index
    %c0_4 = arith.constant 0 : index
    %3 = vector.load %arg3[%c0_3, %c0_4] : memref<1x4096xf32, #tpu.memory_space<vmem>>, vector<1x4096xf32>
    %4 = vector.broadcast %3 : vector<1x4096xf32> to vector<2x4096xf32>
    %5 = arith.addf %2, %4 : vector<2x4096xf32>
    %c0_5 = arith.constant 0 : index
    %c0_6 = arith.constant 0 : index
    %6 = vector.load %arg4[%c0_5, %c0_6] : memref<2x4096xf32, #tpu.memory_space<vmem>>, vector<2x4096xf32>
    tpu.vector_store %arg4[%c0_5, %c0_6], %5 {strides = array<i32>} : memref<2x4096xf32, #tpu.memory_space<vmem>>, vector<2x4096xf32>,
    return
  }
  func.func @transform_0(%arg0: i32) -> (i32, i32) {
    %c0_i32 = arith.constant 0 : i32
    %c0_i32_0 = arith.constant 0 : i32
    %c0_i32_1 = arith.constant 0 : i32
    return %c0_i32, %c0_i32_0 : i32, i32
  }
  func.func @transform_1(%arg0: i32) -> (i32, i32) {
    %c0_i32 = arith.constant 0 : i32
    %c0_i32_0 = arith.constant 0 : i32
    return %c0_i32, %arg0 : i32, i32
  }
  func.func @transform_2(%arg0: i32) -> (i32, i32) {
    %c0_i32 = arith.constant 0 : i32
    %c0_i32_0 = arith.constant 0 : i32
    return %c0_i32, %arg0 : i32, i32
  }
  func.func @transform_3(%arg0: i32) -> (i32, i32) {
    %c0_i32 = arith.constant 0 : i32
    %c0_i32_0 = arith.constant 0 : i32
    return %c0_i32, %arg0 : i32, i32
  }
}

module attributes {stable_mosaic.version = 11 : i64} {
  func.func @_decoder_kernel(%arg0: i32, %arg1: memref<1x16x256xf32, #tpu.memory_space<vmem>>, %arg2: memref<256x512xf32, #tpu.memory_space<vmem>>, %arg3: memref<256x512xf32, #tpu.memory_space<vmem>>, %arg4: memref<1x256xf32, #tpu.memory_space<vmem>>, %arg5: memref<256x512xf32, #tpu.memory_space<vmem>>, %arg6: memref<256x512xf32, #tpu.memory_space<vmem>>, %arg7: memref<1x256xf32, #tpu.memory_space<vmem>>, %arg8: memref<256x256xf32, #tpu.memory_space<vmem>>, %arg9: memref<256x256xf32, #tpu.memory_space<vmem>>, %arg10: memref<1x128xf32, #tpu.memory_space<vmem>>, %arg11: memref<1x128x128xf32, #tpu.memory_space<vmem>>) attributes {dimension_semantics = [#tpu.dimension_semantics<parallel>], iteration_bounds = array<i64: 2>, scalar_prefetch = 0 : i64, scratch_operands = 0 : i64, tpu.core_type = #tpu.core_type<tc>, window_params = [{transform_indices = @transform_0, window_bounds = array<i64: 1, 16, 256>}, {pipeline_mode = #tpu.pipeline_mode<synchronous>, transform_indices = @transform_1, window_bounds = array<i64: 256, 512>}, {pipeline_mode = #tpu.pipeline_mode<synchronous>, transform_indices = @transform_2, window_bounds = array<i64: 256, 512>}, {pipeline_mode = #tpu.pipeline_mode<synchronous>, transform_indices = @transform_3, window_bounds = array<i64: 1, 256>}, {pipeline_mode = #tpu.pipeline_mode<synchronous>, transform_indices = @transform_4, window_bounds = array<i64: 256, 512>}, {pipeline_mode = #tpu.pipeline_mode<synchronous>, transform_indices = @transform_5, window_bounds = array<i64: 256, 512>}, {pipeline_mode = #tpu.pipeline_mode<synchronous>, transform_indices = @transform_6, window_bounds = array<i64: 1, 256>}, {pipeline_mode = #tpu.pipeline_mode<synchronous>, transform_indices = @transform_7, window_bounds = array<i64: 256, 256>}, {pipeline_mode = #tpu.pipeline_mode<synchronous>, transform_indices = @transform_8, window_bounds = array<i64: 256, 256>}, {pipeline_mode = #tpu.pipeline_mode<synchronous>, transform_indices = @transform_9, window_bounds = array<i64: 1, 128>}, {transform_indices = @transform_10, window_bounds = array<i64: 1, 128, 128>}]} {
    %c0 = arith.constant 0 : index
    %c0_0 = arith.constant 0 : index
    %c0_1 = arith.constant 0 : index
    %0 = vector.load %arg1[%c0, %c0_0, %c0_1] : memref<1x16x256xf32, #tpu.memory_space<vmem>>, vector<1x16x256xf32>
    %1 = vector.shape_cast %0 : vector<1x16x256xf32> to vector<16x256xf32>
    %c0_2 = arith.constant 0 : index
    %c0_3 = arith.constant 0 : index
    %2 = vector.load %arg2[%c0_2, %c0_3] : memref<256x512xf32, #tpu.memory_space<vmem>>, vector<256x512xf32>
    %c0_4 = arith.constant 0 : index
    %c0_5 = arith.constant 0 : index
    %3 = vector.load %arg3[%c0_4, %c0_5] : memref<256x512xf32, #tpu.memory_space<vmem>>, vector<256x512xf32>
    %c0_6 = arith.constant 0 : index
    %c0_7 = arith.constant 0 : index
    %4 = vector.load %arg4[%c0_6, %c0_7] : memref<1x256xf32, #tpu.memory_space<vmem>>, vector<1x256xf32>
    %cst = arith.constant dense<0.000000e+00> : vector<16x512xf32>
    %5 = tpu.matmul %1, %2, %cst {dimension_numbers = #tpu.dot_dimension_numbers<[1], [0], [0], [1], [0, 0, 1, 1], [], []>} : vector<16x256xf32>, vector<256x512xf32>, vector<16x512xf32> -> vector<16x512xf32>
    %cst_8 = arith.constant dense<0.000000e+00> : vector<16x512xf32>
    %6 = tpu.matmul %1, %3, %cst_8 {dimension_numbers = #tpu.dot_dimension_numbers<[1], [0], [0], [1], [0, 0, 1, 1], [], []>} : vector<16x256xf32>, vector<256x512xf32>, vector<16x512xf32> -> vector<16x512xf32>
    %7 = tpu.iota {dimensions = array<i32: 0>} : vector<32x16xi32>
    %8 = tpu.iota {dimensions = array<i32: 1>} : vector<32x16xi32>
    %c2_i32 = arith.constant 2 : i32
    %9 = vector.broadcast %c2_i32 : i32 to vector<32x16xi32>
    %10 = arith.muli %9, %8 : vector<32x16xi32>
    %11 = arith.cmpi eq, %7, %10 : vector<32x16xi32>
    %cst_9 = arith.constant 1.000000e+00 : f32
    %cst_10 = arith.constant 0.000000e+00 : f32
    %12 = vector.broadcast %cst_9 : f32 to vector<32x16xf32>
    %13 = vector.broadcast %cst_10 : f32 to vector<32x16xf32>
    %14 = arith.select %11, %12, %13 : vector<32x16xi1>, vector<32x16xf32>
    %c2_i32_11 = arith.constant 2 : i32
    %15 = vector.broadcast %c2_i32_11 : i32 to vector<32x16xi32>
    %16 = arith.muli %15, %8 : vector<32x16xi32>
    %c1_i32 = arith.constant 1 : i32
    %17 = vector.broadcast %c1_i32 : i32 to vector<32x16xi32>
    %18 = arith.addi %16, %17 : vector<32x16xi32>
    %19 = arith.cmpi eq, %7, %18 : vector<32x16xi32>
    %cst_12 = arith.constant 1.000000e+00 : f32
    %cst_13 = arith.constant 0.000000e+00 : f32
    %20 = vector.broadcast %cst_12 : f32 to vector<32x16xf32>
    %21 = vector.broadcast %cst_13 : f32 to vector<32x16xf32>
    %22 = arith.select %19, %20, %21 : vector<32x16xi1>, vector<32x16xf32>
    %c2_i32_14 = arith.constant 2 : i32
    %23 = vector.broadcast %c2_i32_14 : i32 to vector<32x16xi32>
    %24 = arith.muli %23, %8 : vector<32x16xi32>
    %c2_i32_15 = arith.constant 2 : i32
    %25 = vector.broadcast %c2_i32_15 : i32 to vector<32x16xi32>
    %26 = arith.addi %24, %25 : vector<32x16xi32>
    %27 = arith.cmpi eq, %7, %26 : vector<32x16xi32>
    %cst_16 = arith.constant 1.000000e+00 : f32
    %cst_17 = arith.constant 0.000000e+00 : f32
    %28 = vector.broadcast %cst_16 : f32 to vector<32x16xf32>
    %29 = vector.broadcast %cst_17 : f32 to vector<32x16xf32>
    %30 = arith.select %27, %28, %29 : vector<32x16xi1>, vector<32x16xf32>
    %c2_i32_18 = arith.constant 2 : i32
    %31 = vector.broadcast %c2_i32_18 : i32 to vector<32x16xi32>
    %32 = arith.muli %31, %8 : vector<32x16xi32>
    %c1_i32_19 = arith.constant 1 : i32
    %33 = vector.broadcast %c1_i32_19 : i32 to vector<32x16xi32>
    %34 = arith.subi %32, %33 : vector<32x16xi32>
    %35 = arith.cmpi eq, %7, %34 : vector<32x16xi32>
    %cst_20 = arith.constant 1.000000e+00 : f32
    %cst_21 = arith.constant 0.000000e+00 : f32
    %36 = vector.broadcast %cst_20 : f32 to vector<32x16xf32>
    %37 = vector.broadcast %cst_21 : f32 to vector<32x16xf32>
    %38 = arith.select %35, %36, %37 : vector<32x16xi1>, vector<32x16xf32>
    %39 = vector.extract_strided_slice %5 {offsets = [0, 0], sizes = [16, 256], strides = [1, 1]} : vector<16x512xf32> to vector<16x256xf32>
    %cst_22 = arith.constant dense<0.000000e+00> : vector<32x256xf32>
    %40 = tpu.matmul %14, %39, %cst_22 {dimension_numbers = #tpu.dot_dimension_numbers<[1], [0], [0], [1], [0, 0, 1, 1], [], []>} : vector<32x16xf32>, vector<16x256xf32>, vector<32x256xf32> -> vector<32x256xf32>
    %41 = vector.extract_strided_slice %5 {offsets = [0, 256], sizes = [16, 256], strides = [1, 1]} : vector<16x512xf32> to vector<16x256xf32>
    %cst_23 = arith.constant dense<0.000000e+00> : vector<32x256xf32>
    %42 = tpu.matmul %22, %41, %cst_23 {dimension_numbers = #tpu.dot_dimension_numbers<[1], [0], [0], [1], [0, 0, 1, 1], [], []>} : vector<32x16xf32>, vector<16x256xf32>, vector<32x256xf32> -> vector<32x256xf32>
    %43 = arith.addf %40, %42 : vector<32x256xf32>
    %44 = vector.extract_strided_slice %6 {offsets = [0, 0], sizes = [16, 256], strides = [1, 1]} : vector<16x512xf32> to vector<16x256xf32>
    %cst_24 = arith.constant dense<0.000000e+00> : vector<32x256xf32>
    %45 = tpu.matmul %30, %44, %cst_24 {dimension_numbers = #tpu.dot_dimension_numbers<[1], [0], [0], [1], [0, 0, 1, 1], [], []>} : vector<32x16xf32>, vector<16x256xf32>, vector<32x256xf32> -> vector<32x256xf32>
    %46 = arith.addf %43, %45 : vector<32x256xf32>
    %47 = vector.extract_strided_slice %6 {offsets = [0, 256], sizes = [16, 256], strides = [1, 1]} : vector<16x512xf32> to vector<16x256xf32>
    %cst_25 = arith.constant dense<0.000000e+00> : vector<32x256xf32>
    %48 = tpu.matmul %38, %47, %cst_25 {dimension_numbers = #tpu.dot_dimension_numbers<[1], [0], [0], [1], [0, 0, 1, 1], [], []>} : vector<32x16xf32>, vector<16x256xf32>, vector<32x256xf32> -> vector<32x256xf32>
    %49 = arith.addf %46, %48 : vector<32x256xf32>
    %50 = vector.broadcast %4 : vector<1x256xf32> to vector<32x256xf32>
    %51 = arith.addf %49, %50 : vector<32x256xf32>
    %cst_26 = arith.constant 0.000000e+00 : f32
    %52 = vector.broadcast %cst_26 : f32 to vector<32x256xf32>
    %53 = arith.maximumf %51, %52 : vector<32x256xf32>
    %c0_27 = arith.constant 0 : index
    %c0_28 = arith.constant 0 : index
    %54 = vector.load %arg5[%c0_27, %c0_28] : memref<256x512xf32, #tpu.memory_space<vmem>>, vector<256x512xf32>
    %c0_29 = arith.constant 0 : index
    %c0_30 = arith.constant 0 : index
    %55 = vector.load %arg6[%c0_29, %c0_30] : memref<256x512xf32, #tpu.memory_space<vmem>>, vector<256x512xf32>
    %c0_31 = arith.constant 0 : index
    %c0_32 = arith.constant 0 : index
    %56 = vector.load %arg7[%c0_31, %c0_32] : memref<1x256xf32, #tpu.memory_space<vmem>>, vector<1x256xf32>
    %cst_33 = arith.constant dense<0.000000e+00> : vector<32x512xf32>
    %57 = tpu.matmul %53, %54, %cst_33 {dimension_numbers = #tpu.dot_dimension_numbers<[1], [0], [0], [1], [0, 0, 1, 1], [], []>} : vector<32x256xf32>, vector<256x512xf32>, vector<32x512xf32> -> vector<32x512xf32>
    %cst_34 = arith.constant dense<0.000000e+00> : vector<32x512xf32>
    %58 = tpu.matmul %53, %55, %cst_34 {dimension_numbers = #tpu.dot_dimension_numbers<[1], [0], [0], [1], [0, 0, 1, 1], [], []>} : vector<32x256xf32>, vector<256x512xf32>, vector<32x512xf32> -> vector<32x512xf32>
    %59 = tpu.iota {dimensions = array<i32: 0>} : vector<64x32xi32>
    %60 = tpu.iota {dimensions = array<i32: 1>} : vector<64x32xi32>
    %c2_i32_35 = arith.constant 2 : i32
    %61 = vector.broadcast %c2_i32_35 : i32 to vector<64x32xi32>
    %62 = arith.muli %61, %60 : vector<64x32xi32>
    %63 = arith.cmpi eq, %59, %62 : vector<64x32xi32>
    %cst_36 = arith.constant 1.000000e+00 : f32
    %cst_37 = arith.constant 0.000000e+00 : f32
    %64 = vector.broadcast %cst_36 : f32 to vector<64x32xf32>
    %65 = vector.broadcast %cst_37 : f32 to vector<64x32xf32>
    %66 = arith.select %63, %64, %65 : vector<64x32xi1>, vector<64x32xf32>
    %c2_i32_38 = arith.constant 2 : i32
    %67 = vector.broadcast %c2_i32_38 : i32 to vector<64x32xi32>
    %68 = arith.muli %67, %60 : vector<64x32xi32>
    %c1_i32_39 = arith.constant 1 : i32
    %69 = vector.broadcast %c1_i32_39 : i32 to vector<64x32xi32>
    %70 = arith.addi %68, %69 : vector<64x32xi32>
    %71 = arith.cmpi eq, %59, %70 : vector<64x32xi32>
    %cst_40 = arith.constant 1.000000e+00 : f32
    %cst_41 = arith.constant 0.000000e+00 : f32
    %72 = vector.broadcast %cst_40 : f32 to vector<64x32xf32>
    %73 = vector.broadcast %cst_41 : f32 to vector<64x32xf32>
    %74 = arith.select %71, %72, %73 : vector<64x32xi1>, vector<64x32xf32>
    %c2_i32_42 = arith.constant 2 : i32
    %75 = vector.broadcast %c2_i32_42 : i32 to vector<64x32xi32>
    %76 = arith.muli %75, %60 : vector<64x32xi32>
    %c2_i32_43 = arith.constant 2 : i32
    %77 = vector.broadcast %c2_i32_43 : i32 to vector<64x32xi32>
    %78 = arith.addi %76, %77 : vector<64x32xi32>
    %79 = arith.cmpi eq, %59, %78 : vector<64x32xi32>
    %cst_44 = arith.constant 1.000000e+00 : f32
    %cst_45 = arith.constant 0.000000e+00 : f32
    %80 = vector.broadcast %cst_44 : f32 to vector<64x32xf32>
    %81 = vector.broadcast %cst_45 : f32 to vector<64x32xf32>
    %82 = arith.select %79, %80, %81 : vector<64x32xi1>, vector<64x32xf32>
    %c2_i32_46 = arith.constant 2 : i32
    %83 = vector.broadcast %c2_i32_46 : i32 to vector<64x32xi32>
    %84 = arith.muli %83, %60 : vector<64x32xi32>
    %c1_i32_47 = arith.constant 1 : i32
    %85 = vector.broadcast %c1_i32_47 : i32 to vector<64x32xi32>
    %86 = arith.subi %84, %85 : vector<64x32xi32>
    %87 = arith.cmpi eq, %59, %86 : vector<64x32xi32>
    %cst_48 = arith.constant 1.000000e+00 : f32
    %cst_49 = arith.constant 0.000000e+00 : f32
    %88 = vector.broadcast %cst_48 : f32 to vector<64x32xf32>
    %89 = vector.broadcast %cst_49 : f32 to vector<64x32xf32>
    %90 = arith.select %87, %88, %89 : vector<64x32xi1>, vector<64x32xf32>
    %91 = vector.extract_strided_slice %57 {offsets = [0, 0], sizes = [32, 256], strides = [1, 1]} : vector<32x512xf32> to vector<32x256xf32>
    %cst_50 = arith.constant dense<0.000000e+00> : vector<64x256xf32>
    %92 = tpu.matmul %66, %91, %cst_50 {dimension_numbers = #tpu.dot_dimension_numbers<[1], [0], [0], [1], [0, 0, 1, 1], [], []>} : vector<64x32xf32>, vector<32x256xf32>, vector<64x256xf32> -> vector<64x256xf32>
    %93 = vector.extract_strided_slice %57 {offsets = [0, 256], sizes = [32, 256], strides = [1, 1]} : vector<32x512xf32> to vector<32x256xf32>
    %cst_51 = arith.constant dense<0.000000e+00> : vector<64x256xf32>
    %94 = tpu.matmul %74, %93, %cst_51 {dimension_numbers = #tpu.dot_dimension_numbers<[1], [0], [0], [1], [0, 0, 1, 1], [], []>} : vector<64x32xf32>, vector<32x256xf32>, vector<64x256xf32> -> vector<64x256xf32>
    %95 = arith.addf %92, %94 : vector<64x256xf32>
    %96 = vector.extract_strided_slice %58 {offsets = [0, 0], sizes = [32, 256], strides = [1, 1]} : vector<32x512xf32> to vector<32x256xf32>
    %cst_52 = arith.constant dense<0.000000e+00> : vector<64x256xf32>
    %97 = tpu.matmul %82, %96, %cst_52 {dimension_numbers = #tpu.dot_dimension_numbers<[1], [0], [0], [1], [0, 0, 1, 1], [], []>} : vector<64x32xf32>, vector<32x256xf32>, vector<64x256xf32> -> vector<64x256xf32>
    %98 = arith.addf %95, %97 : vector<64x256xf32>
    %99 = vector.extract_strided_slice %58 {offsets = [0, 256], sizes = [32, 256], strides = [1, 1]} : vector<32x512xf32> to vector<32x256xf32>
    %cst_53 = arith.constant dense<0.000000e+00> : vector<64x256xf32>
    %100 = tpu.matmul %90, %99, %cst_53 {dimension_numbers = #tpu.dot_dimension_numbers<[1], [0], [0], [1], [0, 0, 1, 1], [], []>} : vector<64x32xf32>, vector<32x256xf32>, vector<64x256xf32> -> vector<64x256xf32>
    %101 = arith.addf %98, %100 : vector<64x256xf32>
    %102 = vector.broadcast %56 : vector<1x256xf32> to vector<64x256xf32>
    %103 = arith.addf %101, %102 : vector<64x256xf32>
    %cst_54 = arith.constant 0.000000e+00 : f32
    %104 = vector.broadcast %cst_54 : f32 to vector<64x256xf32>
    %105 = arith.maximumf %103, %104 : vector<64x256xf32>
    %c0_55 = arith.constant 0 : index
    %c0_56 = arith.constant 0 : index
    %106 = vector.load %arg8[%c0_55, %c0_56] : memref<256x256xf32, #tpu.memory_space<vmem>>, vector<256x256xf32>
    %c0_57 = arith.constant 0 : index
    %c0_58 = arith.constant 0 : index
    %107 = vector.load %arg9[%c0_57, %c0_58] : memref<256x256xf32, #tpu.memory_space<vmem>>, vector<256x256xf32>
    %c0_59 = arith.constant 0 : index
    %c0_60 = arith.constant 0 : index
    %108 = vector.load %arg10[%c0_59, %c0_60] : memref<1x128xf32, #tpu.memory_space<vmem>>, vector<1x128xf32>
    %cst_61 = arith.constant dense<0.000000e+00> : vector<64x256xf32>
    %109 = tpu.matmul %105, %106, %cst_61 {dimension_numbers = #tpu.dot_dimension_numbers<[1], [0], [0], [1], [0, 0, 1, 1], [], []>} : vector<64x256xf32>, vector<256x256xf32>, vector<64x256xf32> -> vector<64x256xf32>
    %cst_62 = arith.constant dense<0.000000e+00> : vector<64x256xf32>
    %110 = tpu.matmul %105, %107, %cst_62 {dimension_numbers = #tpu.dot_dimension_numbers<[1], [0], [0], [1], [0, 0, 1, 1], [], []>} : vector<64x256xf32>, vector<256x256xf32>, vector<64x256xf32> -> vector<64x256xf32>
    %111 = tpu.iota {dimensions = array<i32: 0>} : vector<128x64xi32>
    %112 = tpu.iota {dimensions = array<i32: 1>} : vector<128x64xi32>
    %c2_i32_63 = arith.constant 2 : i32
    %113 = vector.broadcast %c2_i32_63 : i32 to vector<128x64xi32>
    %114 = arith.muli %113, %112 : vector<128x64xi32>
    %115 = arith.cmpi eq, %111, %114 : vector<128x64xi32>
    %cst_64 = arith.constant 1.000000e+00 : f32
    %cst_65 = arith.constant 0.000000e+00 : f32
    %116 = vector.broadcast %cst_64 : f32 to vector<128x64xf32>
    %117 = vector.broadcast %cst_65 : f32 to vector<128x64xf32>
    %118 = arith.select %115, %116, %117 : vector<128x64xi1>, vector<128x64xf32>
    %c2_i32_66 = arith.constant 2 : i32
    %119 = vector.broadcast %c2_i32_66 : i32 to vector<128x64xi32>
    %120 = arith.muli %119, %112 : vector<128x64xi32>
    %c1_i32_67 = arith.constant 1 : i32
    %121 = vector.broadcast %c1_i32_67 : i32 to vector<128x64xi32>
    %122 = arith.addi %120, %121 : vector<128x64xi32>
    %123 = arith.cmpi eq, %111, %122 : vector<128x64xi32>
    %cst_68 = arith.constant 1.000000e+00 : f32
    %cst_69 = arith.constant 0.000000e+00 : f32
    %124 = vector.broadcast %cst_68 : f32 to vector<128x64xf32>
    %125 = vector.broadcast %cst_69 : f32 to vector<128x64xf32>
    %126 = arith.select %123, %124, %125 : vector<128x64xi1>, vector<128x64xf32>
    %c2_i32_70 = arith.constant 2 : i32
    %127 = vector.broadcast %c2_i32_70 : i32 to vector<128x64xi32>
    %128 = arith.muli %127, %112 : vector<128x64xi32>
    %c2_i32_71 = arith.constant 2 : i32
    %129 = vector.broadcast %c2_i32_71 : i32 to vector<128x64xi32>
    %130 = arith.addi %128, %129 : vector<128x64xi32>
    %131 = arith.cmpi eq, %111, %130 : vector<128x64xi32>
    %cst_72 = arith.constant 1.000000e+00 : f32
    %cst_73 = arith.constant 0.000000e+00 : f32
    %132 = vector.broadcast %cst_72 : f32 to vector<128x64xf32>
    %133 = vector.broadcast %cst_73 : f32 to vector<128x64xf32>
    %134 = arith.select %131, %132, %133 : vector<128x64xi1>, vector<128x64xf32>
    %c2_i32_74 = arith.constant 2 : i32
    %135 = vector.broadcast %c2_i32_74 : i32 to vector<128x64xi32>
    %136 = arith.muli %135, %112 : vector<128x64xi32>
    %c1_i32_75 = arith.constant 1 : i32
    %137 = vector.broadcast %c1_i32_75 : i32 to vector<128x64xi32>
    %138 = arith.subi %136, %137 : vector<128x64xi32>
    %139 = arith.cmpi eq, %111, %138 : vector<128x64xi32>
    %cst_76 = arith.constant 1.000000e+00 : f32
    %cst_77 = arith.constant 0.000000e+00 : f32
    %140 = vector.broadcast %cst_76 : f32 to vector<128x64xf32>
    %141 = vector.broadcast %cst_77 : f32 to vector<128x64xf32>
    %142 = arith.select %139, %140, %141 : vector<128x64xi1>, vector<128x64xf32>
    %143 = vector.extract_strided_slice %109 {offsets = [0, 0], sizes = [64, 128], strides = [1, 1]} : vector<64x256xf32> to vector<64x128xf32>
    %cst_78 = arith.constant dense<0.000000e+00> : vector<128x128xf32>
    %144 = tpu.matmul %118, %143, %cst_78 {dimension_numbers = #tpu.dot_dimension_numbers<[1], [0], [0], [1], [0, 0, 1, 1], [], []>} : vector<128x64xf32>, vector<64x128xf32>, vector<128x128xf32> -> vector<128x128xf32>
    %145 = vector.extract_strided_slice %109 {offsets = [0, 128], sizes = [64, 128], strides = [1, 1]} : vector<64x256xf32> to vector<64x128xf32>
    %cst_79 = arith.constant dense<0.000000e+00> : vector<128x128xf32>
    %146 = tpu.matmul %126, %145, %cst_79 {dimension_numbers = #tpu.dot_dimension_numbers<[1], [0], [0], [1], [0, 0, 1, 1], [], []>} : vector<128x64xf32>, vector<64x128xf32>, vector<128x128xf32> -> vector<128x128xf32>
    %147 = arith.addf %144, %146 : vector<128x128xf32>
    %148 = vector.extract_strided_slice %110 {offsets = [0, 0], sizes = [64, 128], strides = [1, 1]} : vector<64x256xf32> to vector<64x128xf32>
    %cst_80 = arith.constant dense<0.000000e+00> : vector<128x128xf32>
    %149 = tpu.matmul %134, %148, %cst_80 {dimension_numbers = #tpu.dot_dimension_numbers<[1], [0], [0], [1], [0, 0, 1, 1], [], []>} : vector<128x64xf32>, vector<64x128xf32>, vector<128x128xf32> -> vector<128x128xf32>
    %150 = arith.addf %147, %149 : vector<128x128xf32>
    %151 = vector.extract_strided_slice %110 {offsets = [0, 128], sizes = [64, 128], strides = [1, 1]} : vector<64x256xf32> to vector<64x128xf32>
    %cst_81 = arith.constant dense<0.000000e+00> : vector<128x128xf32>
    %152 = tpu.matmul %142, %151, %cst_81 {dimension_numbers = #tpu.dot_dimension_numbers<[1], [0], [0], [1], [0, 0, 1, 1], [], []>} : vector<128x64xf32>, vector<64x128xf32>, vector<128x128xf32> -> vector<128x128xf32>
    %153 = arith.addf %150, %152 : vector<128x128xf32>
    %154 = vector.broadcast %108 : vector<1x128xf32> to vector<128x128xf32>
    %155 = arith.addf %153, %154 : vector<128x128xf32>
    %cst_82 = arith.constant 0.000000e+00 : f32
    %156 = vector.broadcast %cst_82 : f32 to vector<128x128xf32>
    %157 = arith.subf %156, %155 : vector<128x128xf32>
    %158 = math.exp %157 : vector<128x128xf32>
    %cst_83 = arith.constant 1.000000e+00 : f32
    %159 = vector.broadcast %cst_83 : f32 to vector<128x128xf32>
    %160 = arith.addf %159, %158 : vector<128x128xf32>
    %cst_84 = arith.constant 1.000000e+00 : f32
    %161 = vector.broadcast %cst_84 : f32 to vector<128x128xf32>
    %162 = arith.divf %161, %160 : vector<128x128xf32>
    %c0_85 = arith.constant 0 : index
    %c0_86 = arith.constant 0 : index
    %c0_87 = arith.constant 0 : index
    %163 = vector.load %arg11[%c0_85, %c0_86, %c0_87] : memref<1x128x128xf32, #tpu.memory_space<vmem>>, vector<1x128x128xf32>
    %164 = vector.shape_cast %163 : vector<1x128x128xf32> to vector<128x128xf32>
    %165 = vector.shape_cast %162 : vector<128x128xf32> to vector<1x128x128xf32>
    tpu.vector_store %arg11[%c0_85, %c0_86, %c0_87], %165 {strides = array<i32>} : memref<1x128x128xf32, #tpu.memory_space<vmem>>, vector<1x128x128xf32>,
    return
  }
  func.func @transform_0(%arg0: i32) -> (i32, i32, i32) {
    %c0_i32 = arith.constant 0 : i32
    %c0_i32_0 = arith.constant 0 : i32
    %c0_i32_1 = arith.constant 0 : i32
    return %arg0, %c0_i32, %c0_i32_0 : i32, i32, i32
  }
  func.func @transform_1(%arg0: i32) -> (i32, i32) {
    %c0_i32 = arith.constant 0 : i32
    %c0_i32_0 = arith.constant 0 : i32
    %c0_i32_1 = arith.constant 0 : i32
    return %c0_i32, %c0_i32_0 : i32, i32
  }
  func.func @transform_2(%arg0: i32) -> (i32, i32) {
    %c0_i32 = arith.constant 0 : i32
    %c0_i32_0 = arith.constant 0 : i32
    %c0_i32_1 = arith.constant 0 : i32
    return %c0_i32, %c0_i32_0 : i32, i32
  }
  func.func @transform_3(%arg0: i32) -> (i32, i32) {
    %c0_i32 = arith.constant 0 : i32
    %c0_i32_0 = arith.constant 0 : i32
    %c0_i32_1 = arith.constant 0 : i32
    return %c0_i32, %c0_i32_0 : i32, i32
  }
  func.func @transform_4(%arg0: i32) -> (i32, i32) {
    %c0_i32 = arith.constant 0 : i32
    %c0_i32_0 = arith.constant 0 : i32
    %c0_i32_1 = arith.constant 0 : i32
    return %c0_i32, %c0_i32_0 : i32, i32
  }
  func.func @transform_5(%arg0: i32) -> (i32, i32) {
    %c0_i32 = arith.constant 0 : i32
    %c0_i32_0 = arith.constant 0 : i32
    %c0_i32_1 = arith.constant 0 : i32
    return %c0_i32, %c0_i32_0 : i32, i32
  }
  func.func @transform_6(%arg0: i32) -> (i32, i32) {
    %c0_i32 = arith.constant 0 : i32
    %c0_i32_0 = arith.constant 0 : i32
    %c0_i32_1 = arith.constant 0 : i32
    return %c0_i32, %c0_i32_0 : i32, i32
  }
  func.func @transform_7(%arg0: i32) -> (i32, i32) {
    %c0_i32 = arith.constant 0 : i32
    %c0_i32_0 = arith.constant 0 : i32
    %c0_i32_1 = arith.constant 0 : i32
    return %c0_i32, %c0_i32_0 : i32, i32
  }
  func.func @transform_8(%arg0: i32) -> (i32, i32) {
    %c0_i32 = arith.constant 0 : i32
    %c0_i32_0 = arith.constant 0 : i32
    %c0_i32_1 = arith.constant 0 : i32
    return %c0_i32, %c0_i32_0 : i32, i32
  }
  func.func @transform_9(%arg0: i32) -> (i32, i32) {
    %c0_i32 = arith.constant 0 : i32
    %c0_i32_0 = arith.constant 0 : i32
    %c0_i32_1 = arith.constant 0 : i32
    return %c0_i32, %c0_i32_0 : i32, i32
  }
  func.func @transform_10(%arg0: i32) -> (i32, i32, i32) {
    %c0_i32 = arith.constant 0 : i32
    %c0_i32_0 = arith.constant 0 : i32
    %c0_i32_1 = arith.constant 0 : i32
    return %arg0, %c0_i32, %c0_i32_0 : i32, i32, i32
  }
}

</mosaic_0001>

<llo_original>
// kernel: _lambda_.2
$region0: #{_lambda_.2}
  #allocation0 [shape = 'u32[]', space=smem, size = 0x4, offset = 0x4, fixed_abs, tag = 'smem constant byte address 0x4 - core index']
  #allocation1 [shape = 'u32[144,128]{1,0:T(1,128)}', space=vmem, size = 0x12000, scoped, tag = 'internal scratch']
  %s0 = inlined_call_operand.hbm [shape: f32[2,32], index: 0, kind: input, shape index: {}]
  %s1 = inlined_call_operand.hbm [shape: f32[32,4096], index: 1, kind: input, shape index: {}]
  %s2 = inlined_call_operand.vmem [shape: f32[1,4096], index: 2, kind: input, shape index: {}]
  %s3 = inlined_call_operand.vmem [shape: f32[2,4096], index: 3, kind: output, shape index: {}]
  %s4 = sld [smem:[#allocation0]]
  $region30: #{_lambda_.2} parent=0
    _
  %s6 = ssub.s32 1, %s4
  %s7 = scalar_select 0, %s6, %s4
  $region1: #{_lambda_.2} parent=0
    #allocation2 [shape = 'u8[1024]{0}', space=vmem, size = 0x400, scoped, tag = 'input window, operand 0, single buffered']
    #allocation3 [shape = 's32[1]{0}', space=sflag, size = 0x4, scoped, tag = 'scoped memory for _lambda_.2']
    #allocation4 [shape = 'u8[524288]{0}', space=vmem, size = 0x80000, scoped, tag = 'input window, operand 1, single buffered']
    #allocation5 [shape = 's32[1]{0}', space=sflag, size = 0x4, scoped, tag = 'scoped memory for _lambda_.2']
    %8 = vsyncpa [#allocation3], 0
    %9 = vsyncpa [#allocation5], 0
    // Predicated region
    $region2: #{_lambda_.2} parent=1 // pred_check
      _
    $region3: #{_lambda_.2} parent=1 // pred_check_branch
      %11 = sbr.rel (0) target = $region5
    $region4: #{_lambda_.2} parent=1 // pred_region
      %s13 = ssub.s32 32, 32
      %14 = vsyncadd [#allocation3], %s13
      %s16 = sshll.u32 [#allocation2], 4
      %s17 = int_to_ptr.vmem [resolvable:$true] %s16
      %19 = dma.hbm_to_vmem [thread:$0]  %s0, 32, %s17, [#allocation3]
    $region5: #{_lambda_.2} parent=1 // pred_fallthru
      _
    // Predicated region
    $region6: #{_lambda_.2} parent=1 // pred_check
      _
    $region7: #{_lambda_.2} parent=1 // pred_check_branch
      %21 = sbr.rel (0) target = $region9
    $region8: #{_lambda_.2} parent=1 // pred_region
      %s23 = ssub.s32 16384, 16384
      %24 = vsyncadd [#allocation5], %s23
      %s25 = sshll.u32 [#allocation4], 4
      %s26 = int_to_ptr.vmem [resolvable:$true] %s25
      %31 = dma.hbm_to_vmem [thread:$0]  %s1, 16384, %s26, [#allocation5], 4096, 4096, 256
    $region9: #{_lambda_.2} parent=1 // pred_fallthru
      _
    // Predicated region
    $region10: #{_lambda_.2} parent=1 // pred_check
      _
    $region11: #{_lambda_.2} parent=1 // pred_check_branch
      %33 = sbr.rel (0) target = $region13
    $region12: #{_lambda_.2} parent=1 // pred_region
      _
    $region13: #{_lambda_.2} parent=1 // pred_fallthru
      _
    // Predicated region
    $region14: #{_lambda_.2} parent=1 // pred_check
      _
    $region15: #{_lambda_.2} parent=1 // pred_check_branch
      %35 = sbr.rel (0) target = $region17
    $region16: #{_lambda_.2} parent=1 // pred_region
      %36 = dma.done [#allocation3], 32
    $region17: #{_lambda_.2} parent=1 // pred_fallthru
      _
    // Predicated region
    $region18: #{_lambda_.2} parent=1 // pred_check
      _
    $region19: #{_lambda_.2} parent=1 // pred_check_branch
      %38 = sbr.rel (0) target = $region21
    $region20: #{_lambda_.2} parent=1 // pred_region
      %39 = dma.done [#allocation5], 16384
    $region21: #{_lambda_.2} parent=1 // pred_fallthru
      _
    %v40 = vld [vmem:[#allocation2] sm:$0x3]
    %v41 = vld [vmem:[#allocation4] sm:$0xff]
    %v42 = vld [vmem:[#allocation4 + $0x8] sm:$0xff]
    %v43 = vld [vmem:[#allocation4 + $0x10] sm:$0xff]
    %v44 = vld [vmem:[#allocation4 + $0x18] sm:$0xff]
    %v45 = vld [vmem:[#allocation4 + $0x20] sm:$0xff]
    %v46 = vld [vmem:[#allocation4 + $0x28] sm:$0xff]
    %v47 = vld [vmem:[#allocation4 + $0x30] sm:$0xff]
    %v48 = vld [vmem:[#allocation4 + $0x38] sm:$0xff]
    %v49 = vld [vmem:[#allocation4 + $0x40] sm:$0xff]
    %v50 = vld [vmem:[#allocation4 + $0x48] sm:$0xff]
    %v51 = vld [vmem:[#allocation4 + $0x50] sm:$0xff]
    %v52 = vld [vmem:[#allocation4 + $0x58] sm:$0xff]
    %v53 = vld [vmem:[#allocation4 + $0x60] sm:$0xff]
    %v54 = vld [vmem:[#allocation4 + $0x68] sm:$0xff]
    %v55 = vld [vmem:[#allocation4 + $0x70] sm:$0xff]
    %v56 = vld [vmem:[#allocation4 + $0x78] sm:$0xff]
    %v57 = vld [vmem:[#allocation4 + $0x80] sm:$0xff]
    %v58 = vld [vmem:[#allocation4 + $0x88] sm:$0xff]
    %v59 = vld [vmem:[#allocation4 + $0x90] sm:$0xff]
    %v60 = vld [vmem:[#allocation4 + $0x98] sm:$0xff]
    %v61 = vld [vmem:[#allocation4 + $0xa0] sm:$0xff]
    %v62 = vld [vmem:[#allocation4 + $0xa8] sm:$0xff]
    %v63 = vld [vmem:[#allocation4 + $0xb0] sm:$0xff]
    %v64 = vld [vmem:[#allocation4 + $0xb8] sm:$0xff]
    %v65 = vld [vmem:[#allocation4 + $0xc0] sm:$0xff]
    %v66 = vld [vmem:[#allocation4 + $0xc8] sm:$0xff]
    %v67 = vld [vmem:[#allocation4 + $0xd0] sm:$0xff]
    %v68 = vld [vmem:[#allocation4 + $0xd8] sm:$0xff]
    %v69 = vld [vmem:[#allocation4 + $0xe0] sm:$0xff]
    %v70 = vld [vmem:[#allocation4 + $0xe8] sm:$0xff]
    %v71 = vld [vmem:[#allocation4 + $0xf0] sm:$0xff]
    %v72 = vld [vmem:[#allocation4 + $0xf8] sm:$0xff]
    %v73 = vld [vmem:[#allocation4 + $0x100] sm:$0xff]
    %v74 = vld [vmem:[#allocation4 + $0x108] sm:$0xff]
    %v75 = vld [vmem:[#allocation4 + $0x110] sm:$0xff]
    %v76 = vld [vmem:[#allocation4 + $0x118] sm:$0xff]
    %v77 = vld [vmem:[#allocation4 + $0x120] sm:$0xff]
    %v78 = vld [vmem:[#allocation4 + $0x128] sm:$0xff]
    %v79 = vld [vmem:[#allocation4 + $0x130] sm:$0xff]
    %v80 = vld [vmem:[#allocation4 + $0x138] sm:$0xff]
    %v81 = vld [vmem:[#allocation4 + $0x140] sm:$0xff]
    %v82 = vld [vmem:[#allocation4 + $0x148] sm:$0xff]
    %v83 = vld [vmem:[#allocation4 + $0x150] sm:$0xff]
    %v84 = vld [vmem:[#allocation4 + $0x158] sm:$0xff]
    %v85 = vld [vmem:[#allocation4 + $0x160] sm:$0xff]
    %v86 = vld [vmem:[#allocation4 + $0x168] sm:$0xff]
    %v87 = vld [vmem:[#allocation4 + $0x170] sm:$0xff]
    %v88 = vld [vmem:[#allocation4 + $0x178] sm:$0xff]
    %v89 = vld [vmem:[#allocation4 + $0x180] sm:$0xff]
    %v90 = vld [vmem:[#allocation4 + $0x188] sm:$0xff]
    %v91 = vld [vmem:[#allocation4 + $0x190] sm:$0xff]
    %v92 = vld [vmem:[#allocation4 + $0x198] sm:$0xff]
    %v93 = vld [vmem:[#allocation4 + $0x1a0] sm:$0xff]
    %v94 = vld [vmem:[#allocation4 + $0x1a8] sm:$0xff]
    %v95 = vld [vmem:[#allocation4 + $0x1b0] sm:$0xff]
    %v96 = vld [vmem:[#allocation4 + $0x1b8] sm:$0xff]
    %v97 = vld [vmem:[#allocation4 + $0x1c0] sm:$0xff]
    %v98 = vld [vmem:[#allocation4 + $0x1c8] sm:$0xff]
    %v99 = vld [vmem:[#allocation4 + $0x1d0] sm:$0xff]
    %v100 = vld [vmem:[#allocation4 + $0x1d8] sm:$0xff]
    %v101 = vld [vmem:[#allocation4 + $0x1e0] sm:$0xff]
    %v102 = vld [vmem:[#allocation4 + $0x1e8] sm:$0xff]
    %v103 = vld [vmem:[#allocation4 + $0x1f0] sm:$0xff]
    %v104 = vld [vmem:[#allocation4 + $0x1f8] sm:$0xff]
    %v105 = vld [vmem:[#allocation4 + $0x200] sm:$0xff]
    %v106 = vld [vmem:[#allocation4 + $0x208] sm:$0xff]
    %v107 = vld [vmem:[#allocation4 + $0x210] sm:$0xff]
    %v108 = vld [vmem:[#allocation4 + $0x218] sm:$0xff]
    %v109 = vld [vmem:[#allocation4 + $0x220] sm:$0xff]
    %v110 = vld [vmem:[#allocation4 + $0x228] sm:$0xff]
    %v111 = vld [vmem:[#allocation4 + $0x230] sm:$0xff]
    %v112 = vld [vmem:[#allocation4 + $0x238] sm:$0xff]
    %v113 = vld [vmem:[#allocation4 + $0x240] sm:$0xff]
    %v114 = vld [vmem:[#allocation4 + $0x248] sm:$0xff]
    %v115 = vld [vmem:[#allocation4 + $0x250] sm:$0xff]
    %v116 = vld [vmem:[#allocation4 + $0x258] sm:$0xff]
    %v117 = vld [vmem:[#allocation4 + $0x260] sm:$0xff]
    %v118 = vld [vmem:[#allocation4 + $0x268] sm:$0xff]
    %v119 = vld [vmem:[#allocation4 + $0x270] sm:$0xff]
    %v120 = vld [vmem:[#allocation4 + $0x278] sm:$0xff]
    %v121 = vld [vmem:[#allocation4 + $0x280] sm:$0xff]
    %v122 = vld [vmem:[#allocation4 + $0x288] sm:$0xff]
    %v123 = vld [vmem:[#allocation4 + $0x290] sm:$0xff]
    %v124 = vld [vmem:[#allocation4 + $0x298] sm:$0xff]
    %v125 = vld [vmem:[#allocation4 + $0x2a0] sm:$0xff]
    %v126 = vld [vmem:[#allocation4 + $0x2a8] sm:$0xff]
    %v127 = vld [vmem:[#allocation4 + $0x2b0] sm:$0xff]
    %v128 = vld [vmem:[#allocation4 + $0x2b8] sm:$0xff]
    %v129 = vld [vmem:[#allocation4 + $0x2c0] sm:$0xff]
    %v130 = vld [vmem:[#allocation4 + $0x2c8] sm:$0xff]
    %v131 = vld [vmem:[#allocation4 + $0x2d0] sm:$0xff]
    %v132 = vld [vmem:[#allocation4 + $0x2d8] sm:$0xff]
    %v133 = vld [vmem:[#allocation4 + $0x2e0] sm:$0xff]
    %v134 = vld [vmem:[#allocation4 + $0x2e8] sm:$0xff]
    %v135 = vld [vmem:[#allocation4 + $0x2f0] sm:$0xff]
    %v136 = vld [vmem:[#allocation4 + $0x2f8] sm:$0xff]
    %v137 = vld [vmem:[#allocation4 + $0x300] sm:$0xff]
    %v138 = vld [vmem:[#allocation4 + $0x308] sm:$0xff]
    %v139 = vld [vmem:[#allocation4 + $0x310] sm:$0xff]
    %v140 = vld [vmem:[#allocation4 + $0x318] sm:$0xff]
    %v141 = vld [vmem:[#allocation4 + $0x320] sm:$0xff]
    %v142 = vld [vmem:[#allocation4 + $0x328] sm:$0xff]
    %v143 = vld [vmem:[#allocation4 + $0x330] sm:$0xff]
    %v144 = vld [vmem:[#allocation4 + $0x338] sm:$0xff]
    %v145 = vld [vmem:[#allocation4 + $0x340] sm:$0xff]
    %v146 = vld [vmem:[#allocation4 + $0x348] sm:$0xff]
    %v147 = vld [vmem:[#allocation4 + $0x350] sm:$0xff]
    %v148 = vld [vmem:[#allocation4 + $0x358] sm:$0xff]
    %v149 = vld [vmem:[#allocation4 + $0x360] sm:$0xff]
    %v150 = vld [vmem:[#allocation4 + $0x368] sm:$0xff]
    %v151 = vld [vmem:[#allocation4 + $0x370] sm:$0xff]
    %v152 = vld [vmem:[#allocation4 + $0x378] sm:$0xff]
    %v153 = vld [vmem:[#allocation4 + $0x380] sm:$0xff]
    %v154 = vld [vmem:[#allocation4 + $0x388] sm:$0xff]
    %v155 = vld [vmem:[#allocation4 + $0x390] sm:$0xff]
    %v156 = vld [vmem:[#allocation4 + $0x398] sm:$0xff]
    %v157 = vld [vmem:[#allocation4 + $0x3a0] sm:$0xff]
    %v158 = vld [vmem:[#allocation4 + $0x3a8] sm:$0xff]
    %v159 = vld [vmem:[#allocation4 + $0x3b0] sm:$0xff]
    %v160 = vld [vmem:[#allocation4 + $0x3b8] sm:$0xff]
    %v161 = vld [vmem:[#allocation4 + $0x3c0] sm:$0xff]
    %v162 = vld [vmem:[#allocation4 + $0x3c8] sm:$0xff]
    %v163 = vld [vmem:[#allocation4 + $0x3d0] sm:$0xff]
    %v164 = vld [vmem:[#allocation4 + $0x3d8] sm:$0xff]
    %v165 = vld [vmem:[#allocation4 + $0x3e0] sm:$0xff]
    %v166 = vld [vmem:[#allocation4 + $0x3e8] sm:$0xff]
    %v167 = vld [vmem:[#allocation4 + $0x3f0] sm:$0xff]
    %v168 = vld [vmem:[#allocation4 + $0x3f8] sm:$0xff]
    %v169 = vld [vmem:[%s2] sm:$0xff]
    %v170 = vld [vmem:[%s2 + $0x8] sm:$0xff]
    %v171 = vld [vmem:[%s2 + $0x10] sm:$0xff]
    %v172 = vld [vmem:[%s2 + $0x18] sm:$0xff]
    %v177 = vlaneseq
    %v178 = vshrl.u32 %v177, 7
    %v179 = vsub.s32 0, %v178
    %v180 = vrot.slane %v169, %v179
    %v181 = vlaneseq
    %v182 = vshrl.u32 %v181, 7
    %v183 = vsub.s32 1, %v182
    %v184 = vrot.slane %v169, %v183
    %v185 = vlaneseq
    %v186 = vshrl.u32 %v185, 7
    %v187 = vsub.s32 2, %v186
    %v188 = vrot.slane %v169, %v187
    %v189 = vlaneseq
    %v190 = vshrl.u32 %v189, 7
    %v191 = vsub.s32 3, %v190
    %v192 = vrot.slane %v169, %v191
    %v193 = vlaneseq
    %v194 = vshrl.u32 %v193, 7
    %v195 = vsub.s32 4, %v194
    %v196 = vrot.slane %v169, %v195
    %v197 = vlaneseq
    %v198 = vshrl.u32 %v197, 7
    %v199 = vsub.s32 5, %v198
    %v200 = vrot.slane %v169, %v199
    %v201 = vlaneseq
    %v202 = vshrl.u32 %v201, 7
    %v203 = vsub.s32 6, %v202
    %v204 = vrot.slane %v169, %v203
    %v205 = vlaneseq
    %v206 = vshrl.u32 %v205, 7
    %v207 = vsub.s32 7, %v206
    %v208 = vrot.slane %v169, %v207
    %v209 = vlaneseq
    %v210 = vshrl.u32 %v209, 7
    %v211 = vsub.s32 0, %v210
    %v212 = vrot.slane %v170, %v211
    %v213 = vlaneseq
    %v214 = vshrl.u32 %v213, 7
    %v215 = vsub.s32 1, %v214
    %v216 = vrot.slane %v170, %v215
    %v217 = vlaneseq
    %v218 = vshrl.u32 %v217, 7
    %v219 = vsub.s32 2, %v218
    %v220 = vrot.slane %v170, %v219
    %v221 = vlaneseq
    %v222 = vshrl.u32 %v221, 7
    %v223 = vsub.s32 3, %v222
    %v224 = vrot.slane %v170, %v223
    %v225 = vlaneseq
    %v226 = vshrl.u32 %v225, 7
    %v227 = vsub.s32 4, %v226
    %v228 = vrot.slane %v170, %v227
    %v229 = vlaneseq
    %v230 = vshrl.u32 %v229, 7
    %v231 = vsub.s32 5, %v230
    %v232 = vrot.slane %v170, %v231
    %v233 = vlaneseq
    %v234 = vshrl.u32 %v233, 7
    %v235 = vsub.s32 6, %v234
    %v236 = vrot.slane %v170, %v235
    %v237 = vlaneseq
    %v238 = vshrl.u32 %v237, 7
    %v239 = vsub.s32 7, %v238
    %v240 = vrot.slane %v170, %v239
    %v241 = vlaneseq
    %v242 = vshrl.u32 %v241, 7
    %v243 = vsub.s32 0, %v242
    %v244 = vrot.slane %v171, %v243
    %v245 = vlaneseq
    %v246 = vshrl.u32 %v245, 7
    %v247 = vsub.s32 1, %v246
    %v248 = vrot.slane %v171, %v247
    %v249 = vlaneseq
    %v250 = vshrl.u32 %v249, 7
    %v251 = vsub.s32 2, %v250
    %v252 = vrot.slane %v171, %v251
    %v253 = vlaneseq
    %v254 = vshrl.u32 %v253, 7
    %v255 = vsub.s32 3, %v254
    %v256 = vrot.slane %v171, %v255
    %v257 = vlaneseq
    %v258 = vshrl.u32 %v257, 7
    %v259 = vsub.s32 4, %v258
    %v260 = vrot.slane %v171, %v259
    %v261 = vlaneseq
    %v262 = vshrl.u32 %v261, 7
    %v263 = vsub.s32 5, %v262
    %v264 = vrot.slane %v171, %v263
    %v265 = vlaneseq
    %v266 = vshrl.u32 %v265, 7
    %v267 = vsub.s32 6, %v266
    %v268 = vrot.slane %v171, %v267
    %v269 = vlaneseq
    %v270 = vshrl.u32 %v269, 7
    %v271 = vsub.s32 7, %v270
    %v272 = vrot.slane %v171, %v271
    %v273 = vlaneseq
    %v274 = vshrl.u32 %v273, 7
    %v275 = vsub.s32 0, %v274
    %v276 = vrot.slane %v172, %v275
    %v277 = vlaneseq
    %v278 = vshrl.u32 %v277, 7
    %v279 = vsub.s32 1, %v278
    %v280 = vrot.slane %v172, %v279
    %v281 = vlaneseq
    %v282 = vshrl.u32 %v281, 7
    %v283 = vsub.s32 2, %v282
    %v284 = vrot.slane %v172, %v283
    %v285 = vlaneseq
    %v286 = vshrl.u32 %v285, 7
    %v287 = vsub.s32 3, %v286
    %v288 = vrot.slane %v172, %v287
    %v289 = vlaneseq
    %v290 = vshrl.u32 %v289, 7
    %v291 = vsub.s32 4, %v290
    %v292 = vrot.slane %v172, %v291
    %v293 = vlaneseq
    %v294 = vshrl.u32 %v293, 7
    %v295 = vsub.s32 5, %v294
    %v296 = vrot.slane %v172, %v295
    %v297 = vlaneseq
    %v298 = vshrl.u32 %v297, 7
    %v299 = vsub.s32 6, %v298
    %v300 = vrot.slane %v172, %v299
    %v301 = vlaneseq
    %v302 = vshrl.u32 %v301, 7
    %v303 = vsub.s32 7, %v302
    %v304 = vrot.slane %v172, %v303
    %vm337 = vcmask 261120
    %v339 = vsel %vm337, %v40, 0
    %341 = vmatprep.subr.mxu0 %v42
    %342 = vmatpush1.msra.mxu0 %v41
    %343 = vmatprep.subr.mxu0 %v74
    %344 = vmatpush1.msra.mxu0 %v73
    %345 = vmatprep.subr.mxu0 %v106
    %346 = vmatpush1.msra.mxu0 %v105
    %347 = vmatprep.subr.mxu0 %v138
    %348 = vmatpush1.msra.mxu0 %v137
    %349 = vmatprep.subr.mxu0 0.0
    %350 = vmatpush1.msra.mxu0 0.0
    %351 = vmatprep.subr.mxu0 0.0
    %352 = vmatpush1.msra.mxu0 0.0
    %353 = vmatprep.subr.mxu0 0.0
    %354 = vmatpush1.msra.mxu0 0.0
    %355 = vmatprep.subr.mxu0 0.0
    %356 = vmatpush1.msra.mxu0 0.0
    %357 = vmatprep.subr.mxu0 0.0
    %358 = vmatpush1.msra.mxu0 0.0
    %359 = vmatprep.subr.mxu0 0.0
    %360 = vmatpush1.msra.mxu0 0.0
    %361 = vmatprep.subr.mxu0 0.0
    %362 = vmatpush1.msra.mxu0 0.0
    %363 = vmatprep.subr.mxu0 0.0
    %364 = vmatpush1.msra.mxu0 0.0
    %365 = vmatprep.subr.mxu0 0.0
    %366 = vmatpush1.msra.mxu0 0.0
    %367 = vmatprep.subr.mxu0 0.0
    %368 = vmatpush1.msra.mxu0 0.0
    %369 = vmatprep.subr.mxu0 0.0
    %370 = vmatpush1.msra.mxu0 0.0
    %371 = vmatprep.subr.mxu0 0.0
    %372 = vmatpush1.msra.mxu0 0.0
    %373 = vmatprep.subr.mxu0 0.0
    %374 = vmatpush1.msra.mxu0 0.0
    %375 = vmatprep.subr.mxu0 0.0
    %376 = vmatpush1.msra.mxu0 0.0
    %377 = vmatprep.subr.mxu0 0.0
    %378 = vmatpush1.msra.mxu0 0.0
    %379 = vmatprep.subr.mxu0 0.0
    %380 = vmatpush1.msra.mxu0 0.0
    %381 = vmatprep.subr.mxu0 0.0
    %382 = vmatpush1.msra.mxu0 0.0
    %383 = vmatprep.subr.mxu0 0.0
    %384 = vmatpush1.msra.mxu0 0.0
    %385 = vmatprep.subr.mxu0 0.0
    %386 = vmatpush1.msra.mxu0 0.0
    %387 = vmatprep.subr.mxu0 0.0
    %388 = vmatpush1.msra.mxu0 0.0
    %389 = vmatprep.subr.mxu0 0.0
    %390 = vmatpush1.msra.mxu0 0.0
    %391 = vmatprep.subr.mxu0 0.0
    %392 = vmatpush1.msra.mxu0 0.0
    %393 = vmatprep.subr.mxu0 0.0
    %394 = vmatpush1.msra.mxu0 0.0
    %395 = vmatprep.subr.mxu0 0.0
    %396 = vmatpush1.msra.mxu0 0.0
    %397 = vmatprep.subr.mxu0 0.0
    %398 = vmatpush1.msra.mxu0 0.0
    %399 = vmatprep.subr.mxu0 0.0
    %400 = vmatpush1.msra.mxu0 0.0
    %401 = vmatprep.subr.mxu0 0.0
    %402 = vmatpush1.msra.mxu0 0.0
    %403 = vmatprep.subr.mxu0 0.0
    %404 = vmatpush1.msra.mxu0 0.0
    %405 = vmatprep.mubr.f32.mxu0 0.0
    %406 = vmatmul.mubr.f32.gmra.mrb[0].mxu0 %v339
    %v407 = vpop.f32.mrb[0].mxu0
    %v408 = vadd.f32 %v180, %v407
    %v409 = vpop.f32.mrb[0].mxu0
    %v410 = vadd.f32 %v184, %v409
    %411 = vdwg.mxu0
    %412 = vmatprep.subr.mxu0 %v44
    %413 = vmatpush1.msra.mxu0 %v43
    %414 = vmatprep.subr.mxu0 %v76
    %415 = vmatpush1.msra.mxu0 %v75
    %416 = vmatprep.subr.mxu0 %v108
    %417 = vmatpush1.msra.mxu0 %v107
    %418 = vmatprep.subr.mxu0 %v140
    %419 = vmatpush1.msra.mxu0 %v139
    %420 = vmatprep.subr.mxu0 0.0
    %421 = vmatpush1.msra.mxu0 0.0
    %422 = vmatprep.subr.mxu0 0.0
    %423 = vmatpush1.msra.mxu0 0.0
    %424 = vmatprep.subr.mxu0 0.0
    %425 = vmatpush1.msra.mxu0 0.0
    %426 = vmatprep.subr.mxu0 0.0
    %427 = vmatpush1.msra.mxu0 0.0
    %428 = vmatprep.subr.mxu0 0.0
    %429 = vmatpush1.msra.mxu0 0.0
    %430 = vmatprep.subr.mxu0 0.0
    %431 = vmatpush1.msra.mxu0 0.0
    %432 = vmatprep.subr.mxu0 0.0
    %433 = vmatpush1.msra.mxu0 0.0
    %434 = vmatprep.subr.mxu0 0.0
    %435 = vmatpush1.msra.mxu0 0.0
    %436 = vmatprep.subr.mxu0 0.0
    %437 = vmatpush1.msra.mxu0 0.0
    %438 = vmatprep.subr.mxu0 0.0
    %439 = vmatpush1.msra.mxu0 0.0
    %440 = vmatprep.subr.mxu0 0.0
    %441 = vmatpush1.msra.mxu0 0.0
    %442 = vmatprep.subr.mxu0 0.0
    %443 = vmatpush1.msra.mxu0 0.0
    %444 = vmatprep.subr.mxu0 0.0
    %445 = vmatpush1.msra.mxu0 0.0
    %446 = vmatprep.subr.mxu0 0.0
    %447 = vmatpush1.msra.mxu0 0.0
    %448 = vmatprep.subr.mxu0 0.0
    %449 = vmatpush1.msra.mxu0 0.0
    %450 = vmatprep.subr.mxu0 0.0
    %451 = vmatpush1.msra.mxu0 0.0
    %452 = vmatprep.subr.mxu0 0.0
    %453 = vmatpush1.msra.mxu0 0.0
    %454 = vmatprep.subr.mxu0 0.0
    %455 = vmatpush1.msra.mxu0 0.0
    %456 = vmatprep.subr.mxu0 0.0
    %457 = vmatpush1.msra.mxu0 0.0
    %458 = vmatprep.subr.mxu0 0.0
    %459 = vmatpush1.msra.mxu0 0.0
    %460 = vmatprep.subr.mxu0 0.0
    %461 = vmatpush1.msra.mxu0 0.0
    %462 = vmatprep.subr.mxu0 0.0
    %463 = vmatpush1.msra.mxu0 0.0
    %464 = vmatprep.subr.mxu0 0.0
    %465 = vmatpush1.msra.mxu0 0.0
    %466 = vmatprep.subr.mxu0 0.0
    %467 = vmatpush1.msra.mxu0 0.0
    %468 = vmatprep.subr.mxu0 0.0
    %469 = vmatpush1.msra.mxu0 0.0
    %470 = vmatprep.subr.mxu0 0.0
    %471 = vmatpush1.msra.mxu0 0.0
    %472 = vmatprep.subr.mxu0 0.0
    %473 = vmatpush1.msra.mxu0 0.0
    %474 = vmatprep.subr.mxu0 0.0
    %475 = vmatpush1.msra.mxu0 0.0
    %476 = vmatprep.mubr.f32.mxu0 0.0
    %477 = vmatmul.mubr.f32.gmra.mrb[0].mxu0 %v339
    %v478 = vpop.f32.mrb[0].mxu0
    %v479 = vadd.f32 %v188, %v478
    %v480 = vpop.f32.mrb[0].mxu0
    %v481 = vadd.f32 %v192, %v480
    %482 = vdwg.mxu0
    %483 = vmatprep.subr.mxu0 %v46
    %484 = vmatpush1.msra.mxu0 %v45
    %485 = vmatprep.subr.mxu0 %v78
    %486 = vmatpush1.msra.mxu0 %v77
    %487 = vmatprep.subr.mxu0 %v110
    %488 = vmatpush1.msra.mxu0 %v109
    %489 = vmatprep.subr.mxu0 %v142
    %490 = vmatpush1.msra.mxu0 %v141
    %491 = vmatprep.subr.mxu0 0.0
    %492 = vmatpush1.msra.mxu0 0.0
    %493 = vmatprep.subr.mxu0 0.0
    %494 = vmatpush1.msra.mxu0 0.0
    %495 = vmatprep.subr.mxu0 0.0
    %496 = vmatpush1.msra.mxu0 0.0
    %497 = vmatprep.subr.mxu0 0.0
    %498 = vmatpush1.msra.mxu0 0.0
    %499 = vmatprep.subr.mxu0 0.0
    %500 = vmatpush1.msra.mxu0 0.0
    %501 = vmatprep.subr.mxu0 0.0
    %502 = vmatpush1.msra.mxu0 0.0
    %503 = vmatprep.subr.mxu0 0.0
    %504 = vmatpush1.msra.mxu0 0.0
    %505 = vmatprep.subr.mxu0 0.0
    %506 = vmatpush1.msra.mxu0 0.0
    %507 = vmatprep.subr.mxu0 0.0
    %508 = vmatpush1.msra.mxu0 0.0
    %509 = vmatprep.subr.mxu0 0.0
    %510 = vmatpush1.msra.mxu0 0.0
    %511 = vmatprep.subr.mxu0 0.0
    %512 = vmatpush1.msra.mxu0 0.0
    %513 = vmatprep.subr.mxu0 0.0
    %514 = vmatpush1.msra.mxu0 0.0
    %515 = vmatprep.subr.mxu0 0.0
    %516 = vmatpush1.msra.mxu0 0.0
    %517 = vmatprep.subr.mxu0 0.0
    %518 = vmatpush1.msra.mxu0 0.0
    %519 = vmatprep.subr.mxu0 0.0
    %520 = vmatpush1.msra.mxu0 0.0
    %521 = vmatprep.subr.mxu0 0.0
    %522 = vmatpush1.msra.mxu0 0.0
    %523 = vmatprep.subr.mxu0 0.0
    %524 = vmatpush1.msra.mxu0 0.0
    %525 = vmatprep.subr.mxu0 0.0
    %526 = vmatpush1.msra.mxu0 0.0
    %527 = vmatprep.subr.mxu0 0.0
    %528 = vmatpush1.msra.mxu0 0.0
    %529 = vmatprep.subr.mxu0 0.0
    %530 = vmatpush1.msra.mxu0 0.0
    %531 = vmatprep.subr.mxu0 0.0
    %532 = vmatpush1.msra.mxu0 0.0
    %533 = vmatprep.subr.mxu0 0.0
    %534 = vmatpush1.msra.mxu0 0.0
    %535 = vmatprep.subr.mxu0 0.0
    %536 = vmatpush1.msra.mxu0 0.0
    %537 = vmatprep.subr.mxu0 0.0
    %538 = vmatpush1.msra.mxu0 0.0
    %539 = vmatprep.subr.mxu0 0.0
    %540 = vmatpush1.msra.mxu0 0.0
    %541 = vmatprep.subr.mxu0 0.0
    %542 = vmatpush1.msra.mxu0 0.0
    %543 = vmatprep.subr.mxu0 0.0
    %544 = vmatpush1.msra.mxu0 0.0
    %545 = vmatprep.subr.mxu0 0.0
    %546 = vmatpush1.msra.mxu0 0.0
    %547 = vmatprep.mubr.f32.mxu0 0.0
    %548 = vmatmul.mubr.f32.gmra.mrb[0].mxu0 %v339
    %v549 = vpop.f32.mrb[0].mxu0
    %v550 = vadd.f32 %v196, %v549
    %v551 = vpop.f32.mrb[0].mxu0
    %v552 = vadd.f32 %v200, %v551
    %553 = vdwg.mxu0
    %554 = vmatprep.subr.mxu0 %v48
    %555 = vmatpush1.msra.mxu0 %v47
    %556 = vmatprep.subr.mxu0 %v80
    %557 = vmatpush1.msra.mxu0 %v79
    %558 = vmatprep.subr.mxu0 %v112
    %559 = vmatpush1.msra.mxu0 %v111
    %560 = vmatprep.subr.mxu0 %v144
    %561 = vmatpush1.msra.mxu0 %v143
    %562 = vmatprep.subr.mxu0 0.0
    %563 = vmatpush1.msra.mxu0 0.0
    %564 = vmatprep.subr.mxu0 0.0
    %565 = vmatpush1.msra.mxu0 0.0
    %566 = vmatprep.subr.mxu0 0.0
    %567 = vmatpush1.msra.mxu0 0.0
    %568 = vmatprep.subr.mxu0 0.0
    %569 = vmatpush1.msra.mxu0 0.0
    %570 = vmatprep.subr.mxu0 0.0
    %571 = vmatpush1.msra.mxu0 0.0
    %572 = vmatprep.subr.mxu0 0.0
    %573 = vmatpush1.msra.mxu0 0.0
    %574 = vmatprep.subr.mxu0 0.0
    %575 = vmatpush1.msra.mxu0 0.0
    %576 = vmatprep.subr.mxu0 0.0
    %577 = vmatpush1.msra.mxu0 0.0
    %578 = vmatprep.subr.mxu0 0.0
    %579 = vmatpush1.msra.mxu0 0.0
    %580 = vmatprep.subr.mxu0 0.0
    %581 = vmatpush1.msra.mxu0 0.0
    %582 = vmatprep.subr.mxu0 0.0
    %583 = vmatpush1.msra.mxu0 0.0
    %584 = vmatprep.subr.mxu0 0.0
    %585 = vmatpush1.msra.mxu0 0.0
    %586 = vmatprep.subr.mxu0 0.0
    %587 = vmatpush1.msra.mxu0 0.0
    %588 = vmatprep.subr.mxu0 0.0
    %589 = vmatpush1.msra.mxu0 0.0
    %590 = vmatprep.subr.mxu0 0.0
    %591 = vmatpush1.msra.mxu0 0.0
    %592 = vmatprep.subr.mxu0 0.0
    %593 = vmatpush1.msra.mxu0 0.0
    %594 = vmatprep.subr.mxu0 0.0
    %595 = vmatpush1.msra.mxu0 0.0
    %596 = vmatprep.subr.mxu0 0.0
    %597 = vmatpush1.msra.mxu0 0.0
    %598 = vmatprep.subr.mxu0 0.0
    %599 = vmatpush1.msra.mxu0 0.0
    %600 = vmatprep.subr.mxu0 0.0
    %601 = vmatpush1.msra.mxu0 0.0
    %602 = vmatprep.subr.mxu0 0.0
    %603 = vmatpush1.msra.mxu0 0.0
    %604 = vmatprep.subr.mxu0 0.0
    %605 = vmatpush1.msra.mxu0 0.0
    %606 = vmatprep.subr.mxu0 0.0
    %607 = vmatpush1.msra.mxu0 0.0
    %608 = vmatprep.subr.mxu0 0.0
    %609 = vmatpush1.msra.mxu0 0.0
    %610 = vmatprep.subr.mxu0 0.0
    %611 = vmatpush1.msra.mxu0 0.0
    %612 = vmatprep.subr.mxu0 0.0
    %613 = vmatpush1.msra.mxu0 0.0
    %614 = vmatprep.subr.mxu0 0.0
    %615 = vmatpush1.msra.mxu0 0.0
    %616 = vmatprep.subr.mxu0 0.0
    %617 = vmatpush1.msra.mxu0 0.0
    %618 = vmatprep.mubr.f32.mxu0 0.0
    %619 = vmatmul.mubr.f32.gmra.mrb[0].mxu0 %v339
    %v620 = vpop.f32.mrb[0].mxu0
    %v621 = vadd.f32 %v204, %v620
    %v622 = vpop.f32.mrb[0].mxu0
    %v623 = vadd.f32 %v208, %v622
    %624 = vdwg.mxu0
    %625 = vmatprep.subr.mxu0 %v50
    %626 = vmatpush1.msra.mxu0 %v49
    %627 = vmatprep.subr.mxu0 %v82
    %628 = vmatpush1.msra.mxu0 %v81
    %629 = vmatprep.subr.mxu0 %v114
    %630 = vmatpush1.msra.mxu0 %v113
    %631 = vmatprep.subr.mxu0 %v146
    %632 = vmatpush1.msra.mxu0 %v145
    %633 = vmatprep.subr.mxu0 0.0
    %634 = vmatpush1.msra.mxu0 0.0
    %635 = vmatprep.subr.mxu0 0.0
    %636 = vmatpush1.msra.mxu0 0.0
    %637 = vmatprep.subr.mxu0 0.0
    %638 = vmatpush1.msra.mxu0 0.0
    %639 = vmatprep.subr.mxu0 0.0
    %640 = vmatpush1.msra.mxu0 0.0
    %641 = vmatprep.subr.mxu0 0.0
    %642 = vmatpush1.msra.mxu0 0.0
    %643 = vmatprep.subr.mxu0 0.0
    %644 = vmatpush1.msra.mxu0 0.0
    %645 = vmatprep.subr.mxu0 0.0
    %646 = vmatpush1.msra.mxu0 0.0
    %647 = vmatprep.subr.mxu0 0.0
    %648 = vmatpush1.msra.mxu0 0.0
    %649 = vmatprep.subr.mxu0 0.0
    %650 = vmatpush1.msra.mxu0 0.0
    %651 = vmatprep.subr.mxu0 0.0
    %652 = vmatpush1.msra.mxu0 0.0
    %653 = vmatprep.subr.mxu0 0.0
    %654 = vmatpush1.msra.mxu0 0.0
    %655 = vmatprep.subr.mxu0 0.0
    %656 = vmatpush1.msra.mxu0 0.0
    %657 = vmatprep.subr.mxu0 0.0
    %658 = vmatpush1.msra.mxu0 0.0
    %659 = vmatprep.subr.mxu0 0.0
    %660 = vmatpush1.msra.mxu0 0.0
    %661 = vmatprep.subr.mxu0 0.0
    %662 = vmatpush1.msra.mxu0 0.0
    %663 = vmatprep.subr.mxu0 0.0
    %664 = vmatpush1.msra.mxu0 0.0
    %665 = vmatprep.subr.mxu0 0.0
    %666 = vmatpush1.msra.mxu0 0.0
    %667 = vmatprep.subr.mxu0 0.0
    %668 = vmatpush1.msra.mxu0 0.0
    %669 = vmatprep.subr.mxu0 0.0
    %670 = vmatpush1.msra.mxu0 0.0
    %671 = vmatprep.subr.mxu0 0.0
    %672 = vmatpush1.msra.mxu0 0.0
    %673 = vmatprep.subr.mxu0 0.0
    %674 = vmatpush1.msra.mxu0 0.0
    %675 = vmatprep.subr.mxu0 0.0
    %676 = vmatpush1.msra.mxu0 0.0
    %677 = vmatprep.subr.mxu0 0.0
    %678 = vmatpush1.msra.mxu0 0.0
    %679 = vmatprep.subr.mxu0 0.0
    %680 = vmatpush1.msra.mxu0 0.0
    %681 = vmatprep.subr.mxu0 0.0
    %682 = vmatpush1.msra.mxu0 0.0
    %683 = vmatprep.subr.mxu0 0.0
    %684 = vmatpush1.msra.mxu0 0.0
    %685 = vmatprep.subr.mxu0 0.0
    %686 = vmatpush1.msra.mxu0 0.0
    %687 = vmatprep.subr.mxu0 0.0
    %688 = vmatpush1.msra.mxu0 0.0
    %689 = vmatprep.mubr.f32.mxu0 0.0
    %690 = vmatmul.mubr.f32.gmra.mrb[0].mxu0 %v339
    %v691 = vpop.f32.mrb[0].mxu0
    %v692 = vadd.f32 %v212, %v691
    %v693 = vpop.f32.mrb[0].mxu0
    %v694 = vadd.f32 %v216, %v693
    %695 = vdwg.mxu0
    %696 = vmatprep.subr.mxu0 %v52
    %697 = vmatpush1.msra.mxu0 %v51
    %698 = vmatprep.subr.mxu0 %v84
    %699 = vmatpush1.msra.mxu0 %v83
    %700 = vmatprep.subr.mxu0 %v116
    %701 = vmatpush1.msra.mxu0 %v115
    %702 = vmatprep.subr.mxu0 %v148
    %703 = vmatpush1.msra.mxu0 %v147
    %704 = vmatprep.subr.mxu0 0.0
    %705 = vmatpush1.msra.mxu0 0.0
    %706 = vmatprep.subr.mxu0 0.0
    %707 = vmatpush1.msra.mxu0 0.0
    %708 = vmatprep.subr.mxu0 0.0
    %709 = vmatpush1.msra.mxu0 0.0
    %710 = vmatprep.subr.mxu0 0.0
    %711 = vmatpush1.msra.mxu0 0.0
    %712 = vmatprep.subr.mxu0 0.0
    %713 = vmatpush1.msra.mxu0 0.0
    %714 = vmatprep.subr.mxu0 0.0
    %715 = vmatpush1.msra.mxu0 0.0
    %716 = vmatprep.subr.mxu0 0.0
    %717 = vmatpush1.msra.mxu0 0.0
    %718 = vmatprep.subr.mxu0 0.0
    %719 = vmatpush1.msra.mxu0 0.0
    %720 = vmatprep.subr.mxu0 0.0
    %721 = vmatpush1.msra.mxu0 0.0
    %722 = vmatprep.subr.mxu0 0.0
    %723 = vmatpush1.msra.mxu0 0.0
    %724 = vmatprep.subr.mxu0 0.0
    %725 = vmatpush1.msra.mxu0 0.0
    %726 = vmatprep.subr.mxu0 0.0
    %727 = vmatpush1.msra.mxu0 0.0
    %728 = vmatprep.subr.mxu0 0.0
    %729 = vmatpush1.msra.mxu0 0.0
    %730 = vmatprep.subr.mxu0 0.0
    %731 = vmatpush1.msra.mxu0 0.0
    %732 = vmatprep.subr.mxu0 0.0
    %733 = vmatpush1.msra.mxu0 0.0
    %734 = vmatprep.subr.mxu0 0.0
    %735 = vmatpush1.msra.mxu0 0.0
    %736 = vmatprep.subr.mxu0 0.0
    %737 = vmatpush1.msra.mxu0 0.0
    %738 = vmatprep.subr.mxu0 0.0
    %739 = vmatpush1.msra.mxu0 0.0
    %740 = vmatprep.subr.mxu0 0.0
    %741 = vmatpush1.msra.mxu0 0.0
    %742 = vmatprep.subr.mxu0 0.0
    %743 = vmatpush1.msra.mxu0 0.0
    %744 = vmatprep.subr.mxu0 0.0
    %745 = vmatpush1.msra.mxu0 0.0
    %746 = vmatprep.subr.mxu0 0.0
    %747 = vmatpush1.msra.mxu0 0.0
    %748 = vmatprep.subr.mxu0 0.0
    %749 = vmatpush1.msra.mxu0 0.0
    %750 = vmatprep.subr.mxu0 0.0
    %751 = vmatpush1.msra.mxu0 0.0
    %752 = vmatprep.subr.mxu0 0.0
    %753 = vmatpush1.msra.mxu0 0.0
    %754 = vmatprep.subr.mxu0 0.0
    %755 = vmatpush1.msra.mxu0 0.0
    %756 = vmatprep.subr.mxu0 0.0
    %757 = vmatpush1.msra.mxu0 0.0
    %758 = vmatprep.subr.mxu0 0.0
    %759 = vmatpush1.msra.mxu0 0.0
    %760 = vmatprep.mubr.f32.mxu0 0.0
    %761 = vmatmul.mubr.f32.gmra.mrb[0].mxu0 %v339
    %v762 = vpop.f32.mrb[0].mxu0
    %v763 = vadd.f32 %v220, %v762
    %v764 = vpop.f32.mrb[0].mxu0
    %v765 = vadd.f32 %v224, %v764
    %766 = vdwg.mxu0
    %767 = vmatprep.subr.mxu0 %v54
    %768 = vmatpush1.msra.mxu0 %v53
    %769 = vmatprep.subr.mxu0 %v86
    %770 = vmatpush1.msra.mxu0 %v85
    %771 = vmatprep.subr.mxu0 %v118
    %772 = vmatpush1.msra.mxu0 %v117
    %773 = vmatprep.subr.mxu0 %v150
    %774 = vmatpush1.msra.mxu0 %v149
    %775 = vmatprep.subr.mxu0 0.0
    %776 = vmatpush1.msra.mxu0 0.0
    %777 = vmatprep.subr.mxu0 0.0
    %778 = vmatpush1.msra.mxu0 0.0
    %779 = vmatprep.subr.mxu0 0.0
    %780 = vmatpush1.msra.mxu0 0.0
    %781 = vmatprep.subr.mxu0 0.0
    %782 = vmatpush1.msra.mxu0 0.0
    %783 = vmatprep.subr.mxu0 0.0
    %784 = vmatpush1.msra.mxu0 0.0
    %785 = vmatprep.subr.mxu0 0.0
    %786 = vmatpush1.msra.mxu0 0.0
    %787 = vmatprep.subr.mxu0 0.0
    %788 = vmatpush1.msra.mxu0 0.0
    %789 = vmatprep.subr.mxu0 0.0
    %790 = vmatpush1.msra.mxu0 0.0
    %791 = vmatprep.subr.mxu0 0.0
    %792 = vmatpush1.msra.mxu0 0.0
    %793 = vmatprep.subr.mxu0 0.0
    %794 = vmatpush1.msra.mxu0 0.0
    %795 = vmatprep.subr.mxu0 0.0
    %796 = vmatpush1.msra.mxu0 0.0
    %797 = vmatprep.subr.mxu0 0.0
    %798 = vmatpush1.msra.mxu0 0.0
    %799 = vmatprep.subr.mxu0 0.0
    %800 = vmatpush1.msra.mxu0 0.0
    %801 = vmatprep.subr.mxu0 0.0
    %802 = vmatpush1.msra.mxu0 0.0
    %803 = vmatprep.subr.mxu0 0.0
    %804 = vmatpush1.msra.mxu0 0.0
    %805 = vmatprep.subr.mxu0 0.0
    %806 = vmatpush1.msra.mxu0 0.0
    %807 = vmatprep.subr.mxu0 0.0
    %808 = vmatpush1.msra.mxu0 0.0
    %809 = vmatprep.subr.mxu0 0.0
    %810 = vmatpush1.msra.mxu0 0.0
    %811 = vmatprep.subr.mxu0 0.0
    %812 = vmatpush1.msra.mxu0 0.0
    %813 = vmatprep.subr.mxu0 0.0
    %814 = vmatpush1.msra.mxu0 0.0
    %815 = vmatprep.subr.mxu0 0.0
    %816 = vmatpush1.msra.mxu0 0.0
    %817 = vmatprep.subr.mxu0 0.0
    %818 = vmatpush1.msra.mxu0 0.0
    %819 = vmatprep.subr.mxu0 0.0
    %820 = vmatpush1.msra.mxu0 0.0
    %821 = vmatprep.subr.mxu0 0.0
    %822 = vmatpush1.msra.mxu0 0.0
    %823 = vmatprep.subr.mxu0 0.0
    %824 = vmatpush1.msra.mxu0 0.0
    %825 = vmatprep.subr.mxu0 0.0
    %826 = vmatpush1.msra.mxu0 0.0
    %827 = vmatprep.subr.mxu0 0.0
    %828 = vmatpush1.msra.mxu0 0.0
    %829 = vmatprep.subr.mxu0 0.0
    %830 = vmatpush1.msra.mxu0 0.0
    %831 = vmatprep.mubr.f32.mxu0 0.0
    %832 = vmatmul.mubr.f32.gmra.mrb[0].mxu0 %v339
    %v833 = vpop.f32.mrb[0].mxu0
    %v834 = vadd.f32 %v228, %v833
    %v835 = vpop.f32.mrb[0].mxu0
    %v836 = vadd.f32 %v232, %v835
    %837 = vdwg.mxu0
    %838 = vmatprep.subr.mxu0 %v56
    %839 = vmatpush1.msra.mxu0 %v55
    %840 = vmatprep.subr.mxu0 %v88
    %841 = vmatpush1.msra.mxu0 %v87
    %842 = vmatprep.subr.mxu0 %v120
    %843 = vmatpush1.msra.mxu0 %v119
    %844 = vmatprep.subr.mxu0 %v152
    %845 = vmatpush1.msra.mxu0 %v151
    %846 = vmatprep.subr.mxu0 0.0
    %847 = vmatpush1.msra.mxu0 0.0
    %848 = vmatprep.subr.mxu0 0.0
    %849 = vmatpush1.msra.mxu0 0.0
    %850 = vmatprep.subr.mxu0 0.0
    %851 = vmatpush1.msra.mxu0 0.0
    %852 = vmatprep.subr.mxu0 0.0
    %853 = vmatpush1.msra.mxu0 0.0
    %854 = vmatprep.subr.mxu0 0.0
    %855 = vmatpush1.msra.mxu0 0.0
    %856 = vmatprep.subr.mxu0 0.0
    %857 = vmatpush1.msra.mxu0 0.0
    %858 = vmatprep.subr.mxu0 0.0
    %859 = vmatpush1.msra.mxu0 0.0
    %860 = vmatprep.subr.mxu0 0.0
    %861 = vmatpush1.msra.mxu0 0.0
    %862 = vmatprep.subr.mxu0 0.0
    %863 = vmatpush1.msra.mxu0 0.0
    %864 = vmatprep.subr.mxu0 0.0
    %865 = vmatpush1.msra.mxu0 0.0
    %866 = vmatprep.subr.mxu0 0.0
    %867 = vmatpush1.msra.mxu0 0.0
    %868 = vmatprep.subr.mxu0 0.0
    %869 = vmatpush1.msra.mxu0 0.0
    %870 = vmatprep.subr.mxu0 0.0
    %871 = vmatpush1.msra.mxu0 0.0
    %872 = vmatprep.subr.mxu0 0.0
    %873 = vmatpush1.msra.mxu0 0.0
    %874 = vmatprep.subr.mxu0 0.0
    %875 = vmatpush1.msra.mxu0 0.0
    %876 = vmatprep.subr.mxu0 0.0
    %877 = vmatpush1.msra.mxu0 0.0
    %878 = vmatprep.subr.mxu0 0.0
    %879 = vmatpush1.msra.mxu0 0.0
    %880 = vmatprep.subr.mxu0 0.0
    %881 = vmatpush1.msra.mxu0 0.0
    %882 = vmatprep.subr.mxu0 0.0
    %883 = vmatpush1.msra.mxu0 0.0
    %884 = vmatprep.subr.mxu0 0.0
    %885 = vmatpush1.msra.mxu0 0.0
    %886 = vmatprep.subr.mxu0 0.0
    %887 = vmatpush1.msra.mxu0 0.0
    %888 = vmatprep.subr.mxu0 0.0
    %889 = vmatpush1.msra.mxu0 0.0
    %890 = vmatprep.subr.mxu0 0.0
    %891 = vmatpush1.msra.mxu0 0.0
    %892 = vmatprep.subr.mxu0 0.0
    %893 = vmatpush1.msra.mxu0 0.0
    %894 = vmatprep.subr.mxu0 0.0
    %895 = vmatpush1.msra.mxu0 0.0
    %896 = vmatprep.subr.mxu0 0.0
    %897 = vmatpush1.msra.mxu0 0.0
    %898 = vmatprep.subr.mxu0 0.0
    %899 = vmatpush1.msra.mxu0 0.0
    %900 = vmatprep.subr.mxu0 0.0
    %901 = vmatpush1.msra.mxu0 0.0
    %902 = vmatprep.mubr.f32.mxu0 0.0
    %903 = vmatmul.mubr.f32.gmra.mrb[0].mxu0 %v339
    %v904 = vpop.f32.mrb[0].mxu0
    %v905 = vadd.f32 %v236, %v904
    %v906 = vpop.f32.mrb[0].mxu0
    %v907 = vadd.f32 %v240, %v906
    %908 = vdwg.mxu0
    %909 = vmatprep.subr.mxu0 %v58
    %910 = vmatpush1.msra.mxu0 %v57
    %911 = vmatprep.subr.mxu0 %v90
    %912 = vmatpush1.msra.mxu0 %v89
    %913 = vmatprep.subr.mxu0 %v122
    %914 = vmatpush1.msra.mxu0 %v121
    %915 = vmatprep.subr.mxu0 %v154
    %916 = vmatpush1.msra.mxu0 %v153
    %917 = vmatprep.subr.mxu0 0.0
    %918 = vmatpush1.msra.mxu0 0.0
    %919 = vmatprep.subr.mxu0 0.0
    %920 = vmatpush1.msra.mxu0 0.0
    %921 = vmatprep.subr.mxu0 0.0
    %922 = vmatpush1.msra.mxu0 0.0
    %923 = vmatprep.subr.mxu0 0.0
    %924 = vmatpush1.msra.mxu0 0.0
    %925 = vmatprep.subr.mxu0 0.0
    %926 = vmatpush1.msra.mxu0 0.0
    %927 = vmatprep.subr.mxu0 0.0
    %928 = vmatpush1.msra.mxu0 0.0
    %929 = vmatprep.subr.mxu0 0.0
    %930 = vmatpush1.msra.mxu0 0.0
    %931 = vmatprep.subr.mxu0 0.0
    %932 = vmatpush1.msra.mxu0 0.0
    %933 = vmatprep.subr.mxu0 0.0
    %934 = vmatpush1.msra.mxu0 0.0
    %935 = vmatprep.subr.mxu0 0.0
    %936 = vmatpush1.msra.mxu0 0.0
    %937 = vmatprep.subr.mxu0 0.0
    %938 = vmatpush1.msra.mxu0 0.0
    %939 = vmatprep.subr.mxu0 0.0
    %940 = vmatpush1.msra.mxu0 0.0
    %941 = vmatprep.subr.mxu0 0.0
    %942 = vmatpush1.msra.mxu0 0.0
    %943 = vmatprep.subr.mxu0 0.0
    %944 = vmatpush1.msra.mxu0 0.0
    %945 = vmatprep.subr.mxu0 0.0
    %946 = vmatpush1.msra.mxu0 0.0
    %947 = vmatprep.subr.mxu0 0.0
    %948 = vmatpush1.msra.mxu0 0.0
    %949 = vmatprep.subr.mxu0 0.0
    %950 = vmatpush1.msra.mxu0 0.0
    %951 = vmatprep.subr.mxu0 0.0
    %952 = vmatpush1.msra.mxu0 0.0
    %953 = vmatprep.subr.mxu0 0.0
    %954 = vmatpush1.msra.mxu0 0.0
    %955 = vmatprep.subr.mxu0 0.0
    %956 = vmatpush1.msra.mxu0 0.0
    %957 = vmatprep.subr.mxu0 0.0
    %958 = vmatpush1.msra.mxu0 0.0
    %959 = vmatprep.subr.mxu0 0.0
    %960 = vmatpush1.msra.mxu0 0.0
    %961 = vmatprep.subr.mxu0 0.0
    %962 = vmatpush1.msra.mxu0 0.0
    %963 = vmatprep.subr.mxu0 0.0
    %964 = vmatpush1.msra.mxu0 0.0
    %965 = vmatprep.subr.mxu0 0.0
    %966 = vmatpush1.msra.mxu0 0.0
    %967 = vmatprep.subr.mxu0 0.0
    %968 = vmatpush1.msra.mxu0 0.0
    %969 = vmatprep.subr.mxu0 0.0
    %970 = vmatpush1.msra.mxu0 0.0
    %971 = vmatprep.subr.mxu0 0.0
    %972 = vmatpush1.msra.mxu0 0.0
    %973 = vmatprep.mubr.f32.mxu0 0.0
    %974 = vmatmul.mubr.f32.gmra.mrb[0].mxu0 %v339
    %v975 = vpop.f32.mrb[0].mxu0
    %v976 = vadd.f32 %v244, %v975
    %v977 = vpop.f32.mrb[0].mxu0
    %v978 = vadd.f32 %v248, %v977
    %979 = vdwg.mxu0
    %980 = vmatprep.subr.mxu0 %v60
    %981 = vmatpush1.msra.mxu0 %v59
    %982 = vmatprep.subr.mxu0 %v92
    %983 = vmatpush1.msra.mxu0 %v91
    %984 = vmatprep.subr.mxu0 %v124
    %985 = vmatpush1.msra.mxu0 %v123
    %986 = vmatprep.subr.mxu0 %v156
    %987 = vmatpush1.msra.mxu0 %v155
    %988 = vmatprep.subr.mxu0 0.0
    %989 = vmatpush1.msra.mxu0 0.0
    %990 = vmatprep.subr.mxu0 0.0
    %991 = vmatpush1.msra.mxu0 0.0
    %992 = vmatprep.subr.mxu0 0.0
    %993 = vmatpush1.msra.mxu0 0.0
    %994 = vmatprep.subr.mxu0 0.0
    %995 = vmatpush1.msra.mxu0 0.0
    %996 = vmatprep.subr.mxu0 0.0
    %997 = vmatpush1.msra.mxu0 0.0
    %998 = vmatprep.subr.mxu0 0.0
    %999 = vmatpush1.msra.mxu0 0.0
    %1000 = vmatprep.subr.mxu0 0.0
    %1001 = vmatpush1.msra.mxu0 0.0
    %1002 = vmatprep.subr.mxu0 0.0
    %1003 = vmatpush1.msra.mxu0 0.0
    %1004 = vmatprep.subr.mxu0 0.0
    %1005 = vmatpush1.msra.mxu0 0.0
    %1006 = vmatprep.subr.mxu0 0.0
    %1007 = vmatpush1.msra.mxu0 0.0
    %1008 = vmatprep.subr.mxu0 0.0
    %1009 = vmatpush1.msra.mxu0 0.0
    %1010 = vmatprep.subr.mxu0 0.0
    %1011 = vmatpush1.msra.mxu0 0.0
    %1012 = vmatprep.subr.mxu0 0.0
    %1013 = vmatpush1.msra.mxu0 0.0
    %1014 = vmatprep.subr.mxu0 0.0
    %1015 = vmatpush1.msra.mxu0 0.0
    %1016 = vmatprep.subr.mxu0 0.0
    %1017 = vmatpush1.msra.mxu0 0.0
    %1018 = vmatprep.subr.mxu0 0.0
    %1019 = vmatpush1.msra.mxu0 0.0
    %1020 = vmatprep.subr.mxu0 0.0
    %1021 = vmatpush1.msra.mxu0 0.0
    %1022 = vmatprep.subr.mxu0 0.0
    %1023 = vmatpush1.msra.mxu0 0.0
    %1024 = vmatprep.subr.mxu0 0.0
    %1025 = vmatpush1.msra.mxu0 0.0
    %1026 = vmatprep.subr.mxu0 0.0
    %1027 = vmatpush1.msra.mxu0 0.0
    %1028 = vmatprep.subr.mxu0 0.0
    %1029 = vmatpush1.msra.mxu0 0.0
    %1030 = vmatprep.subr.mxu0 0.0
    %1031 = vmatpush1.msra.mxu0 0.0
    %1032 = vmatprep.subr.mxu0 0.0
    %1033 = vmatpush1.msra.mxu0 0.0
    %1034 = vmatprep.subr.mxu0 0.0
    %1035 = vmatpush1.msra.mxu0 0.0
    %1036 = vmatprep.subr.mxu0 0.0
    %1037 = vmatpush1.msra.mxu0 0.0
    %1038 = vmatprep.subr.mxu0 0.0
    %1039 = vmatpush1.msra.mxu0 0.0
    %1040 = vmatprep.subr.mxu0 0.0
    %1041 = vmatpush1.msra.mxu0 0.0
    %1042 = vmatprep.subr.mxu0 0.0
    %1043 = vmatpush1.msra.mxu0 0.0
    %1044 = vmatprep.mubr.f32.mxu0 0.0
    %1045 = vmatmul.mubr.f32.gmra.mrb[0].mxu0 %v339
    %v1046 = vpop.f32.mrb[0].mxu0
    %v1047 = vadd.f32 %v252, %v1046
    %v1048 = vpop.f32.mrb[0].mxu0
    %v1049 = vadd.f32 %v256, %v1048
    %1050 = vdwg.mxu0
    %1051 = vmatprep.subr.mxu0 %v62
    %1052 = vmatpush1.msra.mxu0 %v61
    %1053 = vmatprep.subr.mxu0 %v94
    %1054 = vmatpush1.msra.mxu0 %v93
    %1055 = vmatprep.subr.mxu0 %v126
    %1056 = vmatpush1.msra.mxu0 %v125
    %1057 = vmatprep.subr.mxu0 %v158
    %1058 = vmatpush1.msra.mxu0 %v157
    %1059 = vmatprep.subr.mxu0 0.0
    %1060 = vmatpush1.msra.mxu0 0.0
    %1061 = vmatprep.subr.mxu0 0.0
    %1062 = vmatpush1.msra.mxu0 0.0
    %1063 = vmatprep.subr.mxu0 0.0
    %1064 = vmatpush1.msra.mxu0 0.0
    %1065 = vmatprep.subr.mxu0 0.0
    %1066 = vmatpush1.msra.mxu0 0.0
    %1067 = vmatprep.subr.mxu0 0.0
    %1068 = vmatpush1.msra.mxu0 0.0
    %1069 = vmatprep.subr.mxu0 0.0
    %1070 = vmatpush1.msra.mxu0 0.0
    %1071 = vmatprep.subr.mxu0 0.0
    %1072 = vmatpush1.msra.mxu0 0.0
    %1073 = vmatprep.subr.mxu0 0.0
    %1074 = vmatpush1.msra.mxu0 0.0
    %1075 = vmatprep.subr.mxu0 0.0
    %1076 = vmatpush1.msra.mxu0 0.0
    %1077 = vmatprep.subr.mxu0 0.0
    %1078 = vmatpush1.msra.mxu0 0.0
    %1079 = vmatprep.subr.mxu0 0.0
    %1080 = vmatpush1.msra.mxu0 0.0
    %1081 = vmatprep.subr.mxu0 0.0
    %1082 = vmatpush1.msra.mxu0 0.0
    %1083 = vmatprep.subr.mxu0 0.0
    %1084 = vmatpush1.msra.mxu0 0.0
    %1085 = vmatprep.subr.mxu0 0.0
    %1086 = vmatpush1.msra.mxu0 0.0
    %1087 = vmatprep.subr.mxu0 0.0
    %1088 = vmatpush1.msra.mxu0 0.0
    %1089 = vmatprep.subr.mxu0 0.0
    %1090 = vmatpush1.msra.mxu0 0.0
    %1091 = vmatprep.subr.mxu0 0.0
    %1092 = vmatpush1.msra.mxu0 0.0
    %1093 = vmatprep.subr.mxu0 0.0
    %1094 = vmatpush1.msra.mxu0 0.0
    %1095 = vmatprep.subr.mxu0 0.0
    %1096 = vmatpush1.msra.mxu0 0.0
    %1097 = vmatprep.subr.mxu0 0.0
    %1098 = vmatpush1.msra.mxu0 0.0
    %1099 = vmatprep.subr.mxu0 0.0
    %1100 = vmatpush1.msra.mxu0 0.0
    %1101 = vmatprep.subr.mxu0 0.0
    %1102 = vmatpush1.msra.mxu0 0.0
    %1103 = vmatprep.subr.mxu0 0.0
    %1104 = vmatpush1.msra.mxu0 0.0
    %1105 = vmatprep.subr.mxu0 0.0
    %1106 = vmatpush1.msra.mxu0 0.0
    %1107 = vmatprep.subr.mxu0 0.0
    %1108 = vmatpush1.msra.mxu0 0.0
    %1109 = vmatprep.subr.mxu0 0.0
    %1110 = vmatpush1.msra.mxu0 0.0
    %1111 = vmatprep.subr.mxu0 0.0
    %1112 = vmatpush1.msra.mxu0 0.0
    %1113 = vmatprep.subr.mxu0 0.0
    %1114 = vmatpush1.msra.mxu0 0.0
    %1115 = vmatprep.mubr.f32.mxu0 0.0
    %1116 = vmatmul.mubr.f32.gmra.mrb[0].mxu0 %v339
    %v1117 = vpop.f32.mrb[0].mxu0
    %v1118 = vadd.f32 %v260, %v1117
    %v1119 = vpop.f32.mrb[0].mxu0
    %v1120 = vadd.f32 %v264, %v1119
    %1121 = vdwg.mxu0
    %1122 = vmatprep.subr.mxu0 %v64
    %1123 = vmatpush1.msra.mxu0 %v63
    %1124 = vmatprep.subr.mxu0 %v96
    %1125 = vmatpush1.msra.mxu0 %v95
    %1126 = vmatprep.subr.mxu0 %v128
    %1127 = vmatpush1.msra.mxu0 %v127
    %1128 = vmatprep.subr.mxu0 %v160
    %1129 = vmatpush1.msra.mxu0 %v159
    %1130 = vmatprep.subr.mxu0 0.0
    %1131 = vmatpush1.msra.mxu0 0.0
    %1132 = vmatprep.subr.mxu0 0.0
    %1133 = vmatpush1.msra.mxu0 0.0
    %1134 = vmatprep.subr.mxu0 0.0
    %1135 = vmatpush1.msra.mxu0 0.0
    %1136 = vmatprep.subr.mxu0 0.0
    %1137 = vmatpush1.msra.mxu0 0.0
    %1138 = vmatprep.subr.mxu0 0.0
    %1139 = vmatpush1.msra.mxu0 0.0
    %1140 = vmatprep.subr.mxu0 0.0
    %1141 = vmatpush1.msra.mxu0 0.0
    %1142 = vmatprep.subr.mxu0 0.0
    %1143 = vmatpush1.msra.mxu0 0.0
    %1144 = vmatprep.subr.mxu0 0.0
    %1145 = vmatpush1.msra.mxu0 0.0
    %1146 = vmatprep.subr.mxu0 0.0
    %1147 = vmatpush1.msra.mxu0 0.0
    %1148 = vmatprep.subr.mxu0 0.0
    %1149 = vmatpush1.msra.mxu0 0.0
    %1150 = vmatprep.subr.mxu0 0.0
    %1151 = vmatpush1.msra.mxu0 0.0
    %1152 = vmatprep.subr.mxu0 0.0
    %1153 = vmatpush1.msra.mxu0 0.0
    %1154 = vmatprep.subr.mxu0 0.0
    %1155 = vmatpush1.msra.mxu0 0.0
    %1156 = vmatprep.subr.mxu0 0.0
    %1157 = vmatpush1.msra.mxu0 0.0
    %1158 = vmatprep.subr.mxu0 0.0
    %1159 = vmatpush1.msra.mxu0 0.0
    %1160 = vmatprep.subr.mxu0 0.0
    %1161 = vmatpush1.msra.mxu0 0.0
    %1162 = vmatprep.subr.mxu0 0.0
    %1163 = vmatpush1.msra.mxu0 0.0
    %1164 = vmatprep.subr.mxu0 0.0
    %1165 = vmatpush1.msra.mxu0 0.0
    %1166 = vmatprep.subr.mxu0 0.0
    %1167 = vmatpush1.msra.mxu0 0.0
    %1168 = vmatprep.subr.mxu0 0.0
    %1169 = vmatpush1.msra.mxu0 0.0
    %1170 = vmatprep.subr.mxu0 0.0
    %1171 = vmatpush1.msra.mxu0 0.0
    %1172 = vmatprep.subr.mxu0 0.0
    %1173 = vmatpush1.msra.mxu0 0.0
    %1174 = vmatprep.subr.mxu0 0.0
    %1175 = vmatpush1.msra.mxu0 0.0
    %1176 = vmatprep.subr.mxu0 0.0
    %1177 = vmatpush1.msra.mxu0 0.0
    %1178 = vmatprep.subr.mxu0 0.0
    %1179 = vmatpush1.msra.mxu0 0.0
    %1180 = vmatprep.subr.mxu0 0.0
    %1181 = vmatpush1.msra.mxu0 0.0
    %1182 = vmatprep.subr.mxu0 0.0
    %1183 = vmatpush1.msra.mxu0 0.0
    %1184 = vmatprep.subr.mxu0 0.0
    %1185 = vmatpush1.msra.mxu0 0.0
    %1186 = vmatprep.mubr.f32.mxu0 0.0
    %1187 = vmatmul.mubr.f32.gmra.mrb[0].mxu0 %v339
    %v1188 = vpop.f32.mrb[0].mxu0
    %v1189 = vadd.f32 %v268, %v1188
    %v1190 = vpop.f32.mrb[0].mxu0
    %v1191 = vadd.f32 %v272, %v1190
    %1192 = vdwg.mxu0
    %1193 = vmatprep.subr.mxu0 %v66
    %1194 = vmatpush1.msra.mxu0 %v65
    %1195 = vmatprep.subr.mxu0 %v98
    %1196 = vmatpush1.msra.mxu0 %v97
    %1197 = vmatprep.subr.mxu0 %v130
    %1198 = vmatpush1.msra.mxu0 %v129
    %1199 = vmatprep.subr.mxu0 %v162
    %1200 = vmatpush1.msra.mxu0 %v161
    %1201 = vmatprep.subr.mxu0 0.0
    %1202 = vmatpush1.msra.mxu0 0.0
    %1203 = vmatprep.subr.mxu0 0.0
    %1204 = vmatpush1.msra.mxu0 0.0
    %1205 = vmatprep.subr.mxu0 0.0
    %1206 = vmatpush1.msra.mxu0 0.0
    %1207 = vmatprep.subr.mxu0 0.0
    %1208 = vmatpush1.msra.mxu0 0.0
    %1209 = vmatprep.subr.mxu0 0.0
    %1210 = vmatpush1.msra.mxu0 0.0
    %1211 = vmatprep.subr.mxu0 0.0
    %1212 = vmatpush1.msra.mxu0 0.0
    %1213 = vmatprep.subr.mxu0 0.0
    %1214 = vmatpush1.msra.mxu0 0.0
    %1215 = vmatprep.subr.mxu0 0.0
    %1216 = vmatpush1.msra.mxu0 0.0
    %1217 = vmatprep.subr.mxu0 0.0
    %1218 = vmatpush1.msra.mxu0 0.0
    %1219 = vmatprep.subr.mxu0 0.0
    %1220 = vmatpush1.msra.mxu0 0.0
    %1221 = vmatprep.subr.mxu0 0.0
    %1222 = vmatpush1.msra.mxu0 0.0
    %1223 = vmatprep.subr.mxu0 0.0
    %1224 = vmatpush1.msra.mxu0 0.0
    %1225 = vmatprep.subr.mxu0 0.0
    %1226 = vmatpush1.msra.mxu0 0.0
    %1227 = vmatprep.subr.mxu0 0.0
    %1228 = vmatpush1.msra.mxu0 0.0
    %1229 = vmatprep.subr.mxu0 0.0
    %1230 = vmatpush1.msra.mxu0 0.0
    %1231 = vmatprep.subr.mxu0 0.0
    %1232 = vmatpush1.msra.mxu0 0.0
    %1233 = vmatprep.subr.mxu0 0.0
    %1234 = vmatpush1.msra.mxu0 0.0
    %1235 = vmatprep.subr.mxu0 0.0
    %1236 = vmatpush1.msra.mxu0 0.0
    %1237 = vmatprep.subr.mxu0 0.0
    %1238 = vmatpush1.msra.mxu0 0.0
    %1239 = vmatprep.subr.mxu0 0.0
    %1240 = vmatpush1.msra.mxu0 0.0
    %1241 = vmatprep.subr.mxu0 0.0
    %1242 = vmatpush1.msra.mxu0 0.0
    %1243 = vmatprep.subr.mxu0 0.0
    %1244 = vmatpush1.msra.mxu0 0.0
    %1245 = vmatprep.subr.mxu0 0.0
    %1246 = vmatpush1.msra.mxu0 0.0
    %1247 = vmatprep.subr.mxu0 0.0
    %1248 = vmatpush1.msra.mxu0 0.0
    %1249 = vmatprep.subr.mxu0 0.0
    %1250 = vmatpush1.msra.mxu0 0.0
    %1251 = vmatprep.subr.mxu0 0.0
    %1252 = vmatpush1.msra.mxu0 0.0
    %1253 = vmatprep.subr.mxu0 0.0
    %1254 = vmatpush1.msra.mxu0 0.0
    %1255 = vmatprep.subr.mxu0 0.0
    %1256 = vmatpush1.msra.mxu0 0.0
    %1257 = vmatprep.mubr.f32.mxu0 0.0
    %1258 = vmatmul.mubr.f32.gmra.mrb[0].mxu0 %v339
    %v1259 = vpop.f32.mrb[0].mxu0
    %v1260 = vadd.f32 %v276, %v1259
    %v1261 = vpop.f32.mrb[0].mxu0
    %v1262 = vadd.f32 %v280, %v1261
    %1263 = vdwg.mxu0
    %1264 = vmatprep.subr.mxu0 %v68
    %1265 = vmatpush1.msra.mxu0 %v67
    %1266 = vmatprep.subr.mxu0 %v100
    %1267 = vmatpush1.msra.mxu0 %v99
    %1268 = vmatprep.subr.mxu0 %v132
    %1269 = vmatpush1.msra.mxu0 %v131
    %1270 = vmatprep.subr.mxu0 %v164
    %1271 = vmatpush1.msra.mxu0 %v163
    %1272 = vmatprep.subr.mxu0 0.0
    %1273 = vmatpush1.msra.mxu0 0.0
    %1274 = vmatprep.subr.mxu0 0.0
    %1275 = vmatpush1.msra.mxu0 0.0
    %1276 = vmatprep.subr.mxu0 0.0
    %1277 = vmatpush1.msra.mxu0 0.0
    %1278 = vmatprep.subr.mxu0 0.0
    %1279 = vmatpush1.msra.mxu0 0.0
    %1280 = vmatprep.subr.mxu0 0.0
    %1281 = vmatpush1.msra.mxu0 0.0
    %1282 = vmatprep.subr.mxu0 0.0
    %1283 = vmatpush1.msra.mxu0 0.0
    %1284 = vmatprep.subr.mxu0 0.0
    %1285 = vmatpush1.msra.mxu0 0.0
    %1286 = vmatprep.subr.mxu0 0.0
    %1287 = vmatpush1.msra.mxu0 0.0
    %1288 = vmatprep.subr.mxu0 0.0
    %1289 = vmatpush1.msra.mxu0 0.0
    %1290 = vmatprep.subr.mxu0 0.0
    %1291 = vmatpush1.msra.mxu0 0.0
    %1292 = vmatprep.subr.mxu0 0.0
    %1293 = vmatpush1.msra.mxu0 0.0
    %1294 = vmatprep.subr.mxu0 0.0
    %1295 = vmatpush1.msra.mxu0 0.0
    %1296 = vmatprep.subr.mxu0 0.0
    %1297 = vmatpush1.msra.mxu0 0.0
    %1298 = vmatprep.subr.mxu0 0.0
    %1299 = vmatpush1.msra.mxu0 0.0
    %1300 = vmatprep.subr.mxu0 0.0
    %1301 = vmatpush1.msra.mxu0 0.0
    %1302 = vmatprep.subr.mxu0 0.0
    %1303 = vmatpush1.msra.mxu0 0.0
    %1304 = vmatprep.subr.mxu0 0.0
    %1305 = vmatpush1.msra.mxu0 0.0
    %1306 = vmatprep.subr.mxu0 0.0
    %1307 = vmatpush1.msra.mxu0 0.0
    %1308 = vmatprep.subr.mxu0 0.0
    %1309 = vmatpush1.msra.mxu0 0.0
    %1310 = vmatprep.subr.mxu0 0.0
    %1311 = vmatpush1.msra.mxu0 0.0
    %1312 = vmatprep.subr.mxu0 0.0
    %1313 = vmatpush1.msra.mxu0 0.0
    %1314 = vmatprep.subr.mxu0 0.0
    %1315 = vmatpush1.msra.mxu0 0.0
    %1316 = vmatprep.subr.mxu0 0.0
    %1317 = vmatpush1.msra.mxu0 0.0
    %1318 = vmatprep.subr.mxu0 0.0
    %1319 = vmatpush1.msra.mxu0 0.0
    %1320 = vmatprep.subr.mxu0 0.0
    %1321 = vmatpush1.msra.mxu0 0.0
    %1322 = vmatprep.subr.mxu0 0.0
    %1323 = vmatpush1.msra.mxu0 0.0
    %1324 = vmatprep.subr.mxu0 0.0
    %1325 = vmatpush1.msra.mxu0 0.0
    %1326 = vmatprep.subr.mxu0 0.0
    %1327 = vmatpush1.msra.mxu0 0.0
    %1328 = vmatprep.mubr.f32.mxu0 0.0
    %1329 = vmatmul.mubr.f32.gmra.mrb[0].mxu0 %v339
    %v1330 = vpop.f32.mrb[0].mxu0
    %v1331 = vadd.f32 %v284, %v1330
    %v1332 = vpop.f32.mrb[0].mxu0
    %v1333 = vadd.f32 %v288, %v1332
    %1334 = vdwg.mxu0
    %1335 = vmatprep.subr.mxu0 %v70
    %1336 = vmatpush1.msra.mxu0 %v69
    %1337 = vmatprep.subr.mxu0 %v102
    %1338 = vmatpush1.msra.mxu0 %v101
    %1339 = vmatprep.subr.mxu0 %v134
    %1340 = vmatpush1.msra.mxu0 %v133
    %1341 = vmatprep.subr.mxu0 %v166
    %1342 = vmatpush1.msra.mxu0 %v165
    %1343 = vmatprep.subr.mxu0 0.0
    %1344 = vmatpush1.msra.mxu0 0.0
    %1345 = vmatprep.subr.mxu0 0.0
    %1346 = vmatpush1.msra.mxu0 0.0
    %1347 = vmatprep.subr.mxu0 0.0
    %1348 = vmatpush1.msra.mxu0 0.0
    %1349 = vmatprep.subr.mxu0 0.0
    %1350 = vmatpush1.msra.mxu0 0.0
    %1351 = vmatprep.subr.mxu0 0.0
    %1352 = vmatpush1.msra.mxu0 0.0
    %1353 = vmatprep.subr.mxu0 0.0
    %1354 = vmatpush1.msra.mxu0 0.0
    %1355 = vmatprep.subr.mxu0 0.0
    %1356 = vmatpush1.msra.mxu0 0.0
    %1357 = vmatprep.subr.mxu0 0.0
    %1358 = vmatpush1.msra.mxu0 0.0
    %1359 = vmatprep.subr.mxu0 0.0
    %1360 = vmatpush1.msra.mxu0 0.0
    %1361 = vmatprep.subr.mxu0 0.0
    %1362 = vmatpush1.msra.mxu0 0.0
    %1363 = vmatprep.subr.mxu0 0.0
    %1364 = vmatpush1.msra.mxu0 0.0
    %1365 = vmatprep.subr.mxu0 0.0
    %1366 = vmatpush1.msra.mxu0 0.0
    %1367 = vmatprep.subr.mxu0 0.0
    %1368 = vmatpush1.msra.mxu0 0.0
    %1369 = vmatprep.subr.mxu0 0.0
    %1370 = vmatpush1.msra.mxu0 0.0
    %1371 = vmatprep.subr.mxu0 0.0
    %1372 = vmatpush1.msra.mxu0 0.0
    %1373 = vmatprep.subr.mxu0 0.0
    %1374 = vmatpush1.msra.mxu0 0.0
    %1375 = vmatprep.subr.mxu0 0.0
    %1376 = vmatpush1.msra.mxu0 0.0
    %1377 = vmatprep.subr.mxu0 0.0
    %1378 = vmatpush1.msra.mxu0 0.0
    %1379 = vmatprep.subr.mxu0 0.0
    %1380 = vmatpush1.msra.mxu0 0.0
    %1381 = vmatprep.subr.mxu0 0.0
    %1382 = vmatpush1.msra.mxu0 0.0
    %1383 = vmatprep.subr.mxu0 0.0
    %1384 = vmatpush1.msra.mxu0 0.0
    %1385 = vmatprep.subr.mxu0 0.0
    %1386 = vmatpush1.msra.mxu0 0.0
    %1387 = vmatprep.subr.mxu0 0.0
    %1388 = vmatpush1.msra.mxu0 0.0
    %1389 = vmatprep.subr.mxu0 0.0
    %1390 = vmatpush1.msra.mxu0 0.0
    %1391 = vmatprep.subr.mxu0 0.0
    %1392 = vmatpush1.msra.mxu0 0.0
    %1393 = vmatprep.subr.mxu0 0.0
    %1394 = vmatpush1.msra.mxu0 0.0
    %1395 = vmatprep.subr.mxu0 0.0
    %1396 = vmatpush1.msra.mxu0 0.0
    %1397 = vmatprep.subr.mxu0 0.0
    %1398 = vmatpush1.msra.mxu0 0.0
    %1399 = vmatprep.mubr.f32.mxu0 0.0
    %1400 = vmatmul.mubr.f32.gmra.mrb[0].mxu0 %v339
    %v1401 = vpop.f32.mrb[0].mxu0
    %v1402 = vadd.f32 %v292, %v1401
    %v1403 = vpop.f32.mrb[0].mxu0
    %v1404 = vadd.f32 %v296, %v1403
    %1405 = vdwg.mxu0
    %1406 = vmatprep.subr.mxu0 %v72
    %1407 = vmatpush1.msra.mxu0 %v71
    %1408 = vmatprep.subr.mxu0 %v104
    %1409 = vmatpush1.msra.mxu0 %v103
    %1410 = vmatprep.subr.mxu0 %v136
    %1411 = vmatpush1.msra.mxu0 %v135
    %1412 = vmatprep.subr.mxu0 %v168
    %1413 = vmatpush1.msra.mxu0 %v167
    %1414 = vmatprep.subr.mxu0 0.0
    %1415 = vmatpush1.msra.mxu0 0.0
    %1416 = vmatprep.subr.mxu0 0.0
    %1417 = vmatpush1.msra.mxu0 0.0
    %1418 = vmatprep.subr.mxu0 0.0
    %1419 = vmatpush1.msra.mxu0 0.0
    %1420 = vmatprep.subr.mxu0 0.0
    %1421 = vmatpush1.msra.mxu0 0.0
    %1422 = vmatprep.subr.mxu0 0.0
    %1423 = vmatpush1.msra.mxu0 0.0
    %1424 = vmatprep.subr.mxu0 0.0
    %1425 = vmatpush1.msra.mxu0 0.0
    %1426 = vmatprep.subr.mxu0 0.0
    %1427 = vmatpush1.msra.mxu0 0.0
    %1428 = vmatprep.subr.mxu0 0.0
    %1429 = vmatpush1.msra.mxu0 0.0
    %1430 = vmatprep.subr.mxu0 0.0
    %1431 = vmatpush1.msra.mxu0 0.0
    %1432 = vmatprep.subr.mxu0 0.0
    %1433 = vmatpush1.msra.mxu0 0.0
    %1434 = vmatprep.subr.mxu0 0.0
    %1435 = vmatpush1.msra.mxu0 0.0
    %1436 = vmatprep.subr.mxu0 0.0
    %1437 = vmatpush1.msra.mxu0 0.0
    %1438 = vmatprep.subr.mxu0 0.0
    %1439 = vmatpush1.msra.mxu0 0.0
    %1440 = vmatprep.subr.mxu0 0.0
    %1441 = vmatpush1.msra.mxu0 0.0
    %1442 = vmatprep.subr.mxu0 0.0
    %1443 = vmatpush1.msra.mxu0 0.0
    %1444 = vmatprep.subr.mxu0 0.0
    %1445 = vmatpush1.msra.mxu0 0.0
    %1446 = vmatprep.subr.mxu0 0.0
    %1447 = vmatpush1.msra.mxu0 0.0
    %1448 = vmatprep.subr.mxu0 0.0
    %1449 = vmatpush1.msra.mxu0 0.0
    %1450 = vmatprep.subr.mxu0 0.0
    %1451 = vmatpush1.msra.mxu0 0.0
    %1452 = vmatprep.subr.mxu0 0.0
    %1453 = vmatpush1.msra.mxu0 0.0
    %1454 = vmatprep.subr.mxu0 0.0
    %1455 = vmatpush1.msra.mxu0 0.0
    %1456 = vmatprep.subr.mxu0 0.0
    %1457 = vmatpush1.msra.mxu0 0.0
    %1458 = vmatprep.subr.mxu0 0.0
    %1459 = vmatpush1.msra.mxu0 0.0
    %1460 = vmatprep.subr.mxu0 0.0
    %1461 = vmatpush1.msra.mxu0 0.0
    %1462 = vmatprep.subr.mxu0 0.0
    %1463 = vmatpush1.msra.mxu0 0.0
    %1464 = vmatprep.subr.mxu0 0.0
    %1465 = vmatpush1.msra.mxu0 0.0
    %1466 = vmatprep.subr.mxu0 0.0
    %1467 = vmatpush1.msra.mxu0 0.0
    %1468 = vmatprep.subr.mxu0 0.0
    %1469 = vmatpush1.msra.mxu0 0.0
    %1470 = vmatprep.mubr.f32.mxu0 0.0
    %1471 = vmatmul.mubr.f32.gmra.mrb[0].mxu0 %v339
    %v1472 = vpop.f32.mrb[0].mxu0
    %v1473 = vadd.f32 %v300, %v1472
    %v1474 = vpop.f32.mrb[0].mxu0
    %v1475 = vadd.f32 %v304, %v1474
    %1476 = vdwg.mxu0
    %v1509 = vcombine.low %v408, %v410
    %v1510 = vcombine.low %v479, %v481
    %v1512 = vunpack.c.l.s4 1983009808
    %v1513 = vunpack.c.0.s8 %v1512
    %v1514 = vlaneseq
    %v1515 = vshrl.u32 %v1514, 7
    %v1516 = vsub.s32 %v1513, %v1515
    %v1517 = vrot.slane %v1509, %v1516
    %v1519 = vunpack.c.l.s4 1983009808
    %v1520 = vunpack.c.0.s8 %v1519
    %v1521 = vlaneseq
    %v1522 = vshrl.u32 %v1521, 7
    %v1523 = vsub.s32 %v1520, %v1522
    %v1524 = vrot.slane %v1510, %v1523
    %v1525 = vcombine.low %v1517, %v1524
    %v1526 = vcombine.low %v550, %v552
    %v1527 = vcombine.low %v621, %v623
    %v1529 = vunpack.c.l.s4 1983009808
    %v1530 = vunpack.c.0.s8 %v1529
    %v1531 = vlaneseq
    %v1532 = vshrl.u32 %v1531, 7
    %v1533 = vsub.s32 %v1530, %v1532
    %v1534 = vrot.slane %v1526, %v1533
    %v1536 = vunpack.c.l.s4 1983009808
    %v1537 = vunpack.c.0.s8 %v1536
    %v1538 = vlaneseq
    %v1539 = vshrl.u32 %v1538, 7
    %v1540 = vsub.s32 %v1537, %v1539
    %v1541 = vrot.slane %v1527, %v1540
    %v1542 = vcombine.low %v1534, %v1541
    %v1543 = vcombine.low %v692, %v694
    %v1544 = vcombine.low %v763, %v765
    %v1546 = vunpack.c.l.s4 1983009808
    %v1547 = vunpack.c.0.s8 %v1546
    %v1548 = vlaneseq
    %v1549 = vshrl.u32 %v1548, 7
    %v1550 = vsub.s32 %v1547, %v1549
    %v1551 = vrot.slane %v1543, %v1550
    %v1553 = vunpack.c.l.s4 1983009808
    %v1554 = vunpack.c.0.s8 %v1553
    %v1555 = vlaneseq
    %v1556 = vshrl.u32 %v1555, 7
    %v1557 = vsub.s32 %v1554, %v1556
    %v1558 = vrot.slane %v1544, %v1557
    %v1559 = vcombine.low %v1551, %v1558
    %v1560 = vcombine.low %v834, %v836
    %v1561 = vcombine.low %v905, %v907
    %v1563 = vunpack.c.l.s4 1983009808
    %v1564 = vunpack.c.0.s8 %v1563
    %v1565 = vlaneseq
    %v1566 = vshrl.u32 %v1565, 7
    %v1567 = vsub.s32 %v1564, %v1566
    %v1568 = vrot.slane %v1560, %v1567
    %v1570 = vunpack.c.l.s4 1983009808
    %v1571 = vunpack.c.0.s8 %v1570
    %v1572 = vlaneseq
    %v1573 = vshrl.u32 %v1572, 7
    %v1574 = vsub.s32 %v1571, %v1573
    %v1575 = vrot.slane %v1561, %v1574
    %v1576 = vcombine.low %v1568, %v1575
    %v1577 = vcombine.low %v976, %v978
    %v1578 = vcombine.low %v1047, %v1049
    %v1580 = vunpack.c.l.s4 1983009808
    %v1581 = vunpack.c.0.s8 %v1580
    %v1582 = vlaneseq
    %v1583 = vshrl.u32 %v1582, 7
    %v1584 = vsub.s32 %v1581, %v1583
    %v1585 = vrot.slane %v1577, %v1584
    %v1587 = vunpack.c.l.s4 1983009808
    %v1588 = vunpack.c.0.s8 %v1587
    %v1589 = vlaneseq
    %v1590 = vshrl.u32 %v1589, 7
    %v1591 = vsub.s32 %v1588, %v1590
    %v1592 = vrot.slane %v1578, %v1591
    %v1593 = vcombine.low %v1585, %v1592
    %v1594 = vcombine.low %v1118, %v1120
    %v1595 = vcombine.low %v1189, %v1191
    %v1597 = vunpack.c.l.s4 1983009808
    %v1598 = vunpack.c.0.s8 %v1597
    %v1599 = vlaneseq
    %v1600 = vshrl.u32 %v1599, 7
    %v1601 = vsub.s32 %v1598, %v1600
    %v1602 = vrot.slane %v1594, %v1601
    %v1604 = vunpack.c.l.s4 1983009808
    %v1605 = vunpack.c.0.s8 %v1604
    %v1606 = vlaneseq
    %v1607 = vshrl.u32 %v1606, 7
    %v1608 = vsub.s32 %v1605, %v1607
    %v1609 = vrot.slane %v1595, %v1608
    %v1610 = vcombine.low %v1602, %v1609
    %v1611 = vcombine.low %v1260, %v1262
    %v1612 = vcombine.low %v1331, %v1333
    %v1614 = vunpack.c.l.s4 1983009808
    %v1615 = vunpack.c.0.s8 %v1614
    %v1616 = vlaneseq
    %v1617 = vshrl.u32 %v1616, 7
    %v1618 = vsub.s32 %v1615, %v1617
    %v1619 = vrot.slane %v1611, %v1618
    %v1621 = vunpack.c.l.s4 1983009808
    %v1622 = vunpack.c.0.s8 %v1621
    %v1623 = vlaneseq
    %v1624 = vshrl.u32 %v1623, 7
    %v1625 = vsub.s32 %v1622, %v1624
    %v1626 = vrot.slane %v1612, %v1625
    %v1627 = vcombine.low %v1619, %v1626
    %v1628 = vcombine.low %v1402, %v1404
    %v1629 = vcombine.low %v1473, %v1475
    %v1631 = vunpack.c.l.s4 1983009808
    %v1632 = vunpack.c.0.s8 %v1631
    %v1633 = vlaneseq
    %v1634 = vshrl.u32 %v1633, 7
    %v1635 = vsub.s32 %v1632, %v1634
    %v1636 = vrot.slane %v1628, %v1635
    %v1638 = vunpack.c.l.s4 1983009808
    %v1639 = vunpack.c.0.s8 %v1638
    %v1640 = vlaneseq
    %v1641 = vshrl.u32 %v1640, 7
    %v1642 = vsub.s32 %v1639, %v1641
    %v1643 = vrot.slane %v1629, %v1642
    %v1644 = vcombine.low %v1636, %v1643
    %1653 = vst [vmem:[%s3] sm:$0xff] %v1525
    %1654 = vst [vmem:[%s3 + $0x8] sm:$0xff] %v1542
    %1655 = vst [vmem:[%s3 + $0x10] sm:$0xff] %v1559
    %1656 = vst [vmem:[%s3 + $0x18] sm:$0xff] %v1576
    %1657 = vst [vmem:[%s3 + $0x20] sm:$0xff] %v1593
    %1658 = vst [vmem:[%s3 + $0x28] sm:$0xff] %v1610
    %1659 = vst [vmem:[%s3 + $0x30] sm:$0xff] %v1627
    %1660 = vst [vmem:[%s3 + $0x38] sm:$0xff] %v1644
    // Predicated region
    $region22: #{_lambda_.2} parent=1 // pred_check
      _
    $region23: #{_lambda_.2} parent=1 // pred_check_branch
      %1662 = sbr.rel (0) target = $region25
    $region24: #{_lambda_.2} parent=1 // pred_region
      _
    $region25: #{_lambda_.2} parent=1 // pred_fallthru
      _
    // Predicated region
    $region26: #{_lambda_.2} parent=1 // pred_check
      _
    $region27: #{_lambda_.2} parent=1 // pred_check_branch
      %1664 = sbr.rel (0) target = $region29
    $region28: #{_lambda_.2} parent=1 // pred_region
      _
    $region29: #{_lambda_.2} parent=1 // pred_fallthru
      _
    %1665 = vsyncpa [#allocation3], 1
    %1666 = vsyncpa [#allocation5], 1

// kernel: _lambda_.3
$region0: #{_lambda_.3}
  #allocation0 [shape = 'u32[]', space=smem, size = 0x4, offset = 0x4, fixed_abs, tag = 'smem constant byte address 0x4 - core index']
  #allocation1 [shape = 'u32[144,128]{1,0:T(1,128)}', space=vmem, size = 0x12000, scoped, tag = 'internal scratch']
  %s0 = inlined_call_operand.vmem [shape: f32[2,16,256], index: 0, kind: input, shape index: {}]
  %s1 = inlined_call_operand.hbm [shape: f32[256,512], index: 1, kind: input, shape index: {}]
  %s2 = inlined_call_operand.hbm [shape: f32[256,512], index: 2, kind: input, shape index: {}]
  %s3 = inlined_call_operand.vmem [shape: f32[1,256], index: 3, kind: input, shape index: {}]
  %s4 = inlined_call_operand.hbm [shape: f32[256,512], index: 4, kind: input, shape index: {}]
  %s5 = inlined_call_operand.vmem [shape: f32[256,512], index: 5, kind: input, shape index: {}]
  %s6 = inlined_call_operand.vmem [shape: f32[1,256], index: 6, kind: input, shape index: {}]
  %s7 = inlined_call_operand.hbm [shape: f32[256,256], index: 7, kind: input, shape index: {}]
  %s8 = inlined_call_operand.hbm [shape: f32[256,256], index: 8, kind: input, shape index: {}]
  %s9 = inlined_call_operand.vmem [shape: f32[1,128], index: 9, kind: input, shape index: {}]
  %s10 = inlined_call_operand.hbm [shape: f32[2,128,128], index: 10, kind: output, shape index: {}]
  %s11 = sld [smem:[#allocation0]]
  $region93: #{_lambda_.3} parent=0
    _
  %s13 = ssub.s32 1, %s11
  %s14 = scalar_select 0, %s13, %s11
  $region1: #{_lambda_.3} parent=0
    #allocation2 [shape = 'u8[524288]{0}', space=vmem, size = 0x80000, scoped, tag = 'input window, operand 1, single buffered']
    #allocation3 [shape = 's32[2]{0}', space=sflag, size = 0x8, scoped, tag = 'scoped memory for _lambda_.3']
    #allocation4 [shape = 's32[2]{0}', space=sflag, size = 0x8, scoped, tag = 'scoped memory for _lambda_.3']
    #allocation5 [shape = 'u8[524288]{0}', space=vmem, size = 0x80000, scoped, tag = 'input window, operand 2, single buffered']
    #allocation6 [shape = 's32[1]{0}', space=sflag, size = 0x4, scoped, tag = 'scoped memory for _lambda_.3']
    #allocation7 [shape = 'u8[524288]{0}', space=vmem, size = 0x80000, scoped, tag = 'input window, operand 4, single buffered']
    #allocation8 [shape = 'u8[262144]{0}', space=vmem, size = 0x40000, scoped, tag = 'input window, operand 7, single buffered']
    #allocation9 [shape = 's32[1]{0}', space=sflag, size = 0x4, scoped, tag = 'scoped memory for _lambda_.3']
    #allocation10 [shape = 'u8[262144]{0}', space=vmem, size = 0x40000, scoped, tag = 'input window, operand 8, single buffered']
    #allocation11 [shape = 'u8[131072]{0}', space=vmem, size = 0x20000, scoped, tag = 'output window, operand 0']
    %15 = vsyncpa [#allocation3], 0
    %16 = vsyncpa [#allocation6], 0
    %17 = vsyncpa [#allocation9], 0
    %18 = vsyncpa [#allocation4], 0
    %s19 = scalar_lea.sflag [#allocation4], 1
    %20 = vsyncpa %s19, 0
    loop: start=0, step=1, limit=4
    $region2: #{_lambda_.3} parent=1 // loop_pre_header
      _
    $region3: #{_lambda_.3} parent=1 // loop_header
      %s22 = sphi 0, %s26
      %p23 = scmp.ge.s32.totalorder %s22, 4
      %s32 = sphi 0, %s34
      %s35 = sphi 0, %s32
      %s36 = sphi 0, %s35
      %s52 = sphi 0, %s36
      %s56 = sphi 0, %s56
      %s58 = sphi 0, %s56
      %s59 = sphi 0, %s58
      %s73 = sphi 0, %s59
      %s77 = sphi 0, %s77
      %s79 = sphi 0, %s77
      %s80 = sphi 0, %s79
      %s94 = sphi 0, %s80
      %s98 = sphi 0, %s98
      %s100 = sphi 0, %s98
      %s101 = sphi 0, %s100
      %s115 = sphi 0, %s101
      %s119 = sphi 0, %s119
      %s121 = sphi 0, %s119
      %s122 = sphi 0, %s121
      %s136 = sphi 0, %s122
      %s140 = sphi 0, %s140
      %s142 = sphi 0, %s140
      %s143 = sphi 0, %s142
      %s157 = sphi 0, %s143
      %s161 = sphi 0, %s161
      %s163 = sphi 0, %s161
      %s164 = sphi 0, %s163
      %s178 = sphi 0, %s164
      %s182 = sphi 0, %s182
      %s184 = sphi 0, %s182
      %s185 = sphi 0, %s184
      %s199 = sphi 0, %s185
      %s203 = sphi 0, %s203
      %s205 = sphi 0, %s203
      %s206 = sphi 0, %s205
      %s220 = sphi 0, %s206
      %s224 = sphi 0, %s224
      %s226 = sphi 0, %s224
      %s227 = sphi 0, %s226
      %s241 = sphi 0, %s227
      %s247 = sphi 0, %s249
      %s250 = sphi 0, %s247
      %s251 = sphi 0, %s250
      %s267 = sphi 0, %s251
    $region4: #{_lambda_.3} parent=1 // loop_header_branch
      %25 = sbr.rel (%p23) target = $region8
    $region5: #{_lambda_.3} parent=1 // loop_body
      %s27 = ssub.s32 %s22, 1
      %s28 = ssub.s32 %s22, 2
      %s29 = sadd.s32 %s22, 1
      %s30 = ssub.s32 %s22, %s29
      %p31 = scmp.eq.s32.totalorder %s30, 0
      %s33 = sadd.s32 %s32, 1
      %s34 = scalar_select %p31, %s32, %s33
      %p37 = pneg %p31
      %p38 = scmp.eq.s32.totalorder %s22, 1
      %p39 = por %p37, %p38
      %p40 = scmp.ne.s32.totalorder %s32, %s35
      %p41 = scmp.eq.s32.totalorder %s22, 0
      %p42 = por %p40, %p41
      %p43 = scmp.ne.s32.totalorder %s32, %s35
      %p44 = scmp.eq.s32.totalorder %s27, 1
      %p45 = por %p43, %p44
      %p46 = scmp.ne.s32.totalorder %s35, %s36
      %p47 = scmp.eq.s32.totalorder %s27, 0
      %p48 = por %p46, %p47
      %p49 = scmp.ne.s32.totalorder %s35, %s36
      %p50 = scmp.eq.s32.totalorder %s28, 1
      %p51 = por %p49, %p50
      %p53 = scmp.ne.s32.totalorder %s36, %s52
      %p54 = scmp.eq.s32.totalorder %s28, 0
      %p55 = por %p53, %p54
      %s57 = sadd.s32 %s56, 1
      %p60 = scmp.eq.s32.totalorder %s22, 1
      %p61 = scmp.ne.s32.totalorder %s56, %s58
      %p62 = scmp.eq.s32.totalorder %s22, 0
      %p63 = por %p61, %p62
      %p64 = scmp.ne.s32.totalorder %s56, %s58
      %p65 = scmp.eq.s32.totalorder %s27, 1
      %p66 = por %p64, %p65
      %p67 = scmp.ne.s32.totalorder %s58, %s59
      %p68 = scmp.eq.s32.totalorder %s27, 0
      %p69 = por %p67, %p68
      %p70 = scmp.ne.s32.totalorder %s58, %s59
      %p71 = scmp.eq.s32.totalorder %s28, 1
      %p72 = por %p70, %p71
      %p74 = scmp.ne.s32.totalorder %s59, %s73
      %p75 = scmp.eq.s32.totalorder %s28, 0
      %p76 = por %p74, %p75
      %s78 = sadd.s32 %s77, 1
      %p81 = scmp.eq.s32.totalorder %s22, 1
      %p82 = scmp.ne.s32.totalorder %s77, %s79
      %p83 = scmp.eq.s32.totalorder %s22, 0
      %p84 = por %p82, %p83
      %p85 = scmp.ne.s32.totalorder %s77, %s79
      %p86 = scmp.eq.s32.totalorder %s27, 1
      %p87 = por %p85, %p86
      %p88 = scmp.ne.s32.totalorder %s79, %s80
      %p89 = scmp.eq.s32.totalorder %s27, 0
      %p90 = por %p88, %p89
      %p91 = scmp.ne.s32.totalorder %s79, %s80
      %p92 = scmp.eq.s32.totalorder %s28, 1
      %p93 = por %p91, %p92
      %p95 = scmp.ne.s32.totalorder %s80, %s94
      %p96 = scmp.eq.s32.totalorder %s28, 0
      %p97 = por %p95, %p96
      %s99 = sadd.s32 %s98, 1
      %p102 = scmp.eq.s32.totalorder %s22, 1
      %p103 = scmp.ne.s32.totalorder %s98, %s100
      %p104 = scmp.eq.s32.totalorder %s22, 0
      %p105 = por %p103, %p104
      %p106 = scmp.ne.s32.totalorder %s98, %s100
      %p107 = scmp.eq.s32.totalorder %s27, 1
      %p108 = por %p106, %p107
      %p109 = scmp.ne.s32.totalorder %s100, %s101
      %p110 = scmp.eq.s32.totalorder %s27, 0
      %p111 = por %p109, %p110
      %p112 = scmp.ne.s32.totalorder %s100, %s101
      %p113 = scmp.eq.s32.totalorder %s28, 1
      %p114 = por %p112, %p113
      %p116 = scmp.ne.s32.totalorder %s101, %s115
      %p117 = scmp.eq.s32.totalorder %s28, 0
      %p118 = por %p116, %p117
      %s120 = sadd.s32 %s119, 1
      %p123 = scmp.eq.s32.totalorder %s22, 1
      %p124 = scmp.ne.s32.totalorder %s119, %s121
      %p125 = scmp.eq.s32.totalorder %s22, 0
      %p126 = por %p124, %p125
      %p127 = scmp.ne.s32.totalorder %s119, %s121
      %p128 = scmp.eq.s32.totalorder %s27, 1
      %p129 = por %p127, %p128
      %p130 = scmp.ne.s32.totalorder %s121, %s122
      %p131 = scmp.eq.s32.totalorder %s27, 0
      %p132 = por %p130, %p131
      %p133 = scmp.ne.s32.totalorder %s121, %s122
      %p134 = scmp.eq.s32.totalorder %s28, 1
      %p135 = por %p133, %p134
      %p137 = scmp.ne.s32.totalorder %s122, %s136
      %p138 = scmp.eq.s32.totalorder %s28, 0
      %p139 = por %p137, %p138
      %s141 = sadd.s32 %s140, 1
      %p144 = scmp.eq.s32.totalorder %s22, 1
      %p145 = scmp.ne.s32.totalorder %s140, %s142
      %p146 = scmp.eq.s32.totalorder %s22, 0
      %p147 = por %p145, %p146
      %p148 = scmp.ne.s32.totalorder %s140, %s142
      %p149 = scmp.eq.s32.totalorder %s27, 1
      %p150 = por %p148, %p149
      %p151 = scmp.ne.s32.totalorder %s142, %s143
      %p152 = scmp.eq.s32.totalorder %s27, 0
      %p153 = por %p151, %p152
      %p154 = scmp.ne.s32.totalorder %s142, %s143
      %p155 = scmp.eq.s32.totalorder %s28, 1
      %p156 = por %p154, %p155
      %p158 = scmp.ne.s32.totalorder %s143, %s157
      %p159 = scmp.eq.s32.totalorder %s28, 0
      %p160 = por %p158, %p159
      %s162 = sadd.s32 %s161, 1
      %p165 = scmp.eq.s32.totalorder %s22, 1
      %p166 = scmp.ne.s32.totalorder %s161, %s163
      %p167 = scmp.eq.s32.totalorder %s22, 0
      %p168 = por %p166, %p167
      %p169 = scmp.ne.s32.totalorder %s161, %s163
      %p170 = scmp.eq.s32.totalorder %s27, 1
      %p171 = por %p169, %p170
      %p172 = scmp.ne.s32.totalorder %s163, %s164
      %p173 = scmp.eq.s32.totalorder %s27, 0
      %p174 = por %p172, %p173
      %p175 = scmp.ne.s32.totalorder %s163, %s164
      %p176 = scmp.eq.s32.totalorder %s28, 1
      %p177 = por %p175, %p176
      %p179 = scmp.ne.s32.totalorder %s164, %s178
      %p180 = scmp.eq.s32.totalorder %s28, 0
      %p181 = por %p179, %p180
      %s183 = sadd.s32 %s182, 1
      %p186 = scmp.eq.s32.totalorder %s22, 1
      %p187 = scmp.ne.s32.totalorder %s182, %s184
      %p188 = scmp.eq.s32.totalorder %s22, 0
      %p189 = por %p187, %p188
      %p190 = scmp.ne.s32.totalorder %s182, %s184
      %p191 = scmp.eq.s32.totalorder %s27, 1
      %p192 = por %p190, %p191
      %p193 = scmp.ne.s32.totalorder %s184, %s185
      %p194 = scmp.eq.s32.totalorder %s27, 0
      %p195 = por %p193, %p194
      %p196 = scmp.ne.s32.totalorder %s184, %s185
      %p197 = scmp.eq.s32.totalorder %s28, 1
      %p198 = por %p196, %p197
      %p200 = scmp.ne.s32.totalorder %s185, %s199
      %p201 = scmp.eq.s32.totalorder %s28, 0
      %p202 = por %p200, %p201
      %s204 = sadd.s32 %s203, 1
      %p207 = scmp.eq.s32.totalorder %s22, 1
      %p208 = scmp.ne.s32.totalorder %s203, %s205
      %p209 = scmp.eq.s32.totalorder %s22, 0
      %p210 = por %p208, %p209
      %p211 = scmp.ne.s32.totalorder %s203, %s205
      %p212 = scmp.eq.s32.totalorder %s27, 1
      %p213 = por %p211, %p212
      %p214 = scmp.ne.s32.totalorder %s205, %s206
      %p215 = scmp.eq.s32.totalorder %s27, 0
      %p216 = por %p214, %p215
      %p217 = scmp.ne.s32.totalorder %s205, %s206
      %p218 = scmp.eq.s32.totalorder %s28, 1
      %p219 = por %p217, %p218
      %p221 = scmp.ne.s32.totalorder %s206, %s220
      %p222 = scmp.eq.s32.totalorder %s28, 0
      %p223 = por %p221, %p222
      %s225 = sadd.s32 %s224, 1
      %p228 = scmp.eq.s32.totalorder %s22, 1
      %p229 = scmp.ne.s32.totalorder %s224, %s226
      %p230 = scmp.eq.s32.totalorder %s22, 0
      %p231 = por %p229, %p230
      %p232 = scmp.ne.s32.totalorder %s224, %s226
      %p233 = scmp.eq.s32.totalorder %s27, 1
      %p234 = por %p232, %p233
      %p235 = scmp.ne.s32.totalorder %s226, %s227
      %p236 = scmp.eq.s32.totalorder %s27, 0
      %p237 = por %p235, %p236
      %p238 = scmp.ne.s32.totalorder %s226, %s227
      %p239 = scmp.eq.s32.totalorder %s28, 1
      %p240 = por %p238, %p239
      %p242 = scmp.ne.s32.totalorder %s227, %s241
      %p243 = scmp.eq.s32.totalorder %s28, 0
      %p244 = por %p242, %p243
      %s245 = ssub.s32 %s22, %s29
      %p246 = scmp.eq.s32.totalorder %s245, 0
      %s248 = sadd.s32 %s247, 1
      %s249 = scalar_select %p246, %s247, %s248
      %p252 = pneg %p246
      %p253 = scmp.eq.s32.totalorder %s22, 1
      %p254 = por %p252, %p253
      %p255 = scmp.ne.s32.totalorder %s247, %s250
      %p256 = scmp.eq.s32.totalorder %s22, 0
      %p257 = por %p255, %p256
      %p258 = scmp.ne.s32.totalorder %s247, %s250
      %p259 = scmp.eq.s32.totalorder %s27, 1
      %p260 = por %p258, %p259
      %p261 = scmp.ne.s32.totalorder %s250, %s251
      %p262 = scmp.eq.s32.totalorder %s27, 0
      %p263 = por %p261, %p262
      %p264 = scmp.ne.s32.totalorder %s250, %s251
      %p265 = scmp.eq.s32.totalorder %s28, 1
      %p266 = por %p264, %p265
      %p268 = scmp.ne.s32.totalorder %s251, %s267
      %p269 = scmp.eq.s32.totalorder %s28, 0
      %p270 = por %p268, %p269
      %p271 = scmp.le.s32.totalorder 1, %s22
      %p272 = scmp.lt.s32.totalorder %s22, 3
      %p273 = pnand %p271, %p272
      %p274 = pneg %p273
      // Predicated region
      $region9: #{_lambda_.3} parent=5 // pred_check
        _
      $region10: #{_lambda_.3} parent=5 // pred_check_branch
        %276 = sbr.rel (%p273) target = $region12
      $region11: #{_lambda_.3} parent=5 // pred_region
        %s277 = ssub.s32 %s22, 1
        // Predicated region
        $region13: #{_lambda_.3} parent=11 // pred_check
          %p278 = pneg %p69
        $region14: #{_lambda_.3} parent=11 // pred_check_branch
          %280 = sbr.rel (%p278) target = $region16
        $region15: #{_lambda_.3} parent=11 // pred_region
          %s282 = ssub.s32 16384, 16384
          %283 = vsyncadd [#allocation3], %s282
          %s284 = sshll.u32 [#allocation2], 4
          %s285 = int_to_ptr.vmem [resolvable:$true] %s284
          %290 = dma.hbm_to_vmem [thread:$0]  %s1, 16384, %s285, [#allocation3], 512, 512, 32
        $region16: #{_lambda_.3} parent=11 // pred_fallthru
          _
        // Predicated region
        $region17: #{_lambda_.3} parent=11 // pred_check
          %p291 = pneg %p90
        $region18: #{_lambda_.3} parent=11 // pred_check_branch
          %293 = sbr.rel (%p291) target = $region20
        $region19: #{_lambda_.3} parent=11 // pred_region
          %s295 = ssub.s32 16384, 16384
          %296 = vsyncadd [#allocation6], %s295
          %s297 = sshll.u32 [#allocation5], 4
          %s298 = int_to_ptr.vmem [resolvable:$true] %s297
          %303 = dma.hbm_to_vmem [thread:$0]  %s2, 16384, %s298, [#allocation6], 512, 512, 32
        $region20: #{_lambda_.3} parent=11 // pred_fallthru
          _
        // Predicated region
        $region21: #{_lambda_.3} parent=11 // pred_check
          %p304 = pneg %p111
        $region22: #{_lambda_.3} parent=11 // pred_check_branch
          %306 = sbr.rel (%p304) target = $region24
        $region23: #{_lambda_.3} parent=11 // pred_region
          _
        $region24: #{_lambda_.3} parent=11 // pred_fallthru
          _
        // Predicated region
        $region25: #{_lambda_.3} parent=11 // pred_check
          %p307 = pneg %p132
        $region26: #{_lambda_.3} parent=11 // pred_check_branch
          %309 = sbr.rel (%p307) target = $region28
        $region27: #{_lambda_.3} parent=11 // pred_region
          %s311 = ssub.s32 16384, 16384
          %312 = vsyncadd [#allocation6], %s311
          %s313 = sshll.u32 [#allocation7], 4
          %s314 = int_to_ptr.vmem [resolvable:$true] %s313
          %319 = dma.hbm_to_vmem [thread:$0]  %s4, 16384, %s314, [#allocation6], 512, 512, 32
        $region28: #{_lambda_.3} parent=11 // pred_fallthru
          _
        // Predicated region
        $region29: #{_lambda_.3} parent=11 // pred_check
          %p320 = pneg %p153
        $region30: #{_lambda_.3} parent=11 // pred_check_branch
          %322 = sbr.rel (%p320) target = $region32
        $region31: #{_lambda_.3} parent=11 // pred_region
          _
        $region32: #{_lambda_.3} parent=11 // pred_fallthru
          _
        // Predicated region
        $region33: #{_lambda_.3} parent=11 // pred_check
          %p323 = pneg %p174
        $region34: #{_lambda_.3} parent=11 // pred_check_branch
          %325 = sbr.rel (%p323) target = $region36
        $region35: #{_lambda_.3} parent=11 // pred_region
          _
        $region36: #{_lambda_.3} parent=11 // pred_fallthru
          _
        // Predicated region
        $region37: #{_lambda_.3} parent=11 // pred_check
          %p326 = pneg %p195
        $region38: #{_lambda_.3} parent=11 // pred_check_branch
          %328 = sbr.rel (%p326) target = $region40
        $region39: #{_lambda_.3} parent=11 // pred_region
          %s330 = ssub.s32 8192, 8192
          %331 = vsyncadd [#allocation9], %s330
          %s332 = sshll.u32 [#allocation8], 4
          %s333 = int_to_ptr.vmem [resolvable:$true] %s332
          %338 = dma.hbm_to_vmem [thread:$0]  %s7, 8192, %s333, [#allocation9], 256, 256, 16
        $region40: #{_lambda_.3} parent=11 // pred_fallthru
          _
        // Predicated region
        $region41: #{_lambda_.3} parent=11 // pred_check
          %p339 = pneg %p216
        $region42: #{_lambda_.3} parent=11 // pred_check_branch
          %341 = sbr.rel (%p339) target = $region44
        $region43: #{_lambda_.3} parent=11 // pred_region
          %s343 = ssub.s32 8192, 8192
          %344 = vsyncadd [#allocation9], %s343
          %s345 = sshll.u32 [#allocation10], 4
          %s346 = int_to_ptr.vmem [resolvable:$true] %s345
          %351 = dma.hbm_to_vmem [thread:$0]  %s8, 8192, %s346, [#allocation9], 256, 256, 16
        $region44: #{_lambda_.3} parent=11 // pred_fallthru
          _
        // Predicated region
        $region45: #{_lambda_.3} parent=11 // pred_check
          %p352 = pneg %p237
        $region46: #{_lambda_.3} parent=11 // pred_check_branch
          %354 = sbr.rel (%p352) target = $region48
        $region47: #{_lambda_.3} parent=11 // pred_region
          _
        $region48: #{_lambda_.3} parent=11 // pred_fallthru
          _
      $region12: #{_lambda_.3} parent=5 // pred_fallthru
        _
      %p355 = scmp.lt.s32.totalorder %s22, 2
      // Predicated region
      $region49: #{_lambda_.3} parent=5 // pred_check
        %p356 = pneg %p355
      $region50: #{_lambda_.3} parent=5 // pred_check_branch
        %358 = sbr.rel (%p356) target = $region52
      $region51: #{_lambda_.3} parent=5 // pred_region
        // Predicated region
        $region53: #{_lambda_.3} parent=51 // pred_check
          %p359 = pneg %p42
        $region54: #{_lambda_.3} parent=51 // pred_check_branch
          %361 = sbr.rel (%p359) target = $region56
        $region55: #{_lambda_.3} parent=51 // pred_region
          %p362 = scmp.lt.s32.totalorder %s22, 1
          %s363 = scalar_select %p362, %s22, 1
          %s364 = smul.addr %s363, 4
          %s365 = smul.addr %s364, 8
          %s366 = scalar_lea.vmem %s0, %s365
        $region56: #{_lambda_.3} parent=51 // pred_fallthru
          _
      $region52: #{_lambda_.3} parent=5 // pred_fallthru
        _
      %p367 = scmp.le.s32.totalorder 1, %s22
      %p368 = scmp.lt.s32.totalorder %s22, 3
      %p369 = pnand %p367, %p368
      %p370 = pneg %p369
      // Predicated region
      $region57: #{_lambda_.3} parent=5 // pred_check
        _
      $region58: #{_lambda_.3} parent=5 // pred_check_branch
        %372 = sbr.rel (%p369) target = $region60
      $region59: #{_lambda_.3} parent=5 // pred_region
        %s373 = ssub.s32 %s22, 1
        // Predicated region
        $region61: #{_lambda_.3} parent=59 // pred_check
          %p374 = pneg %p69
        $region62: #{_lambda_.3} parent=59 // pred_check_branch
          %376 = sbr.rel (%p374) target = $region64
        $region63: #{_lambda_.3} parent=59 // pred_region
          %377 = dma.done [#allocation3], 16384
        $region64: #{_lambda_.3} parent=59 // pred_fallthru
          _
        // Predicated region
        $region65: #{_lambda_.3} parent=59 // pred_check
          %p378 = pneg %p90
        $region66: #{_lambda_.3} parent=59 // pred_check_branch
          %380 = sbr.rel (%p378) target = $region68
        $region67: #{_lambda_.3} parent=59 // pred_region
          %381 = dma.done [#allocation6], 16384
        $region68: #{_lambda_.3} parent=59 // pred_fallthru
          _
        // Predicated region
        $region69: #{_lambda_.3} parent=59 // pred_check
          %p382 = pneg %p132
        $region70: #{_lambda_.3} parent=59 // pred_check_branch
          %384 = sbr.rel (%p382) target = $region72
        $region71: #{_lambda_.3} parent=59 // pred_region
          %385 = dma.done [#allocation6], 16384
        $region72: #{_lambda_.3} parent=59 // pred_fallthru
          _
        // Predicated region
        $region73: #{_lambda_.3} parent=59 // pred_check
          %p386 = pneg %p195
        $region74: #{_lambda_.3} parent=59 // pred_check_branch
          %388 = sbr.rel (%p386) target = $region76
        $region75: #{_lambda_.3} parent=59 // pred_region
          %389 = dma.done [#allocation9], 8192
        $region76: #{_lambda_.3} parent=59 // pred_fallthru
          _
        // Predicated region
        $region77: #{_lambda_.3} parent=59 // pred_check
          %p390 = pneg %p216
        $region78: #{_lambda_.3} parent=59 // pred_check_branch
          %392 = sbr.rel (%p390) target = $region80
        $region79: #{_lambda_.3} parent=59 // pred_region
          %393 = dma.done [#allocation9], 8192
        $region80: #{_lambda_.3} parent=59 // pred_fallthru
          _
        %p394 = scmp.lt.s32.totalorder %s27, 1
        %s395 = scalar_select %p394, %s27, 1
        %s396 = smul.addr %s395, 4
        %s397 = smul.addr %s396, 8
        %s398 = scalar_lea.vmem %s0, %s397
        %p399 = pneg %p48
        %p400 = pneg %p45
        %p401 = pneg %p69
        %p402 = pneg %p66
        %p403 = pneg %p90
        %p404 = pneg %p87
        %p405 = pneg %p111
        %p406 = pneg %p108
        %p407 = pneg %p132
        %p408 = pneg %p129
        %p409 = pneg %p153
        %p410 = pneg %p150
        %p411 = pneg %p174
        %p412 = pneg %p171
        %p413 = pneg %p195
        %p414 = pneg %p192
        %p415 = pneg %p216
        %p416 = pneg %p213
        %p417 = pneg %p237
        %p418 = pneg %p234
        %p419 = pneg %p263
        %p420 = pneg %p260
        %s421 = sand.u32 %s250, 1
        %s422 = scalar_lea.sflag [#allocation4], %s421
        %s423 = sand.u32 %s250, 1
        %s424 = smul.addr %s423, 128
        %s425 = scalar_lea.vmem [#allocation11], %s424
        %p426 = scmp.lt.s32.totalorder %s27, 1
        %s427 = scalar_select %p426, %s27, 1
        %s428 = smul.addr %s427, 4
        %s429 = smul.addr %s428, 8
        %s430 = scalar_lea.vmem %s0, %s429
        %v431 = vld [vmem:[%s430] sm:$0xff]
        %v432 = vld [vmem:[%s430 + $0x8] sm:$0xff]
        %v433 = vld [vmem:[%s430 + $0x10] sm:$0xff]
        %v434 = vld [vmem:[%s430 + $0x18] sm:$0xff]
        %v435 = vld [vmem:[#allocation2] sm:$0xff]
        %v436 = vld [vmem:[#allocation2 + $0x8] sm:$0xff]
        %v437 = vld [vmem:[#allocation2 + $0x10] sm:$0xff]
        %v438 = vld [vmem:[#allocation2 + $0x18] sm:$0xff]
        %v439 = vld [vmem:[#allocation2 + $0x20] sm:$0xff]
        %v440 = vld [vmem:[#allocation2 + $0x28] sm:$0xff]
        %v441 = vld [vmem:[#allocation2 + $0x30] sm:$0xff]
        %v442 = vld [vmem:[#allocation2 + $0x38] sm:$0xff]
        %v443 = vld [vmem:[#allocation2 + $0x40] sm:$0xff]
        %v444 = vld [vmem:[#allocation2 + $0x48] sm:$0xff]
        %v445 = vld [vmem:[#allocation2 + $0x50] sm:$0xff]
        %v446 = vld [vmem:[#allocation2 + $0x58] sm:$0xff]
        %v447 = vld [vmem:[#allocation2 + $0x60] sm:$0xff]
        %v448 = vld [vmem:[#allocation2 + $0x68] sm:$0xff]
        %v449 = vld [vmem:[#allocation2 + $0x70] sm:$0xff]
        %v450 = vld [vmem:[#allocation2 + $0x78] sm:$0xff]
        %v451 = vld [vmem:[#allocation2 + $0x80] sm:$0xff]
        %v452 = vld [vmem:[#allocation2 + $0x88] sm:$0xff]
        %v453 = vld [vmem:[#allocation2 + $0x90] sm:$0xff]
        %v454 = vld [vmem:[#allocation2 + $0x98] sm:$0xff]
        %v455 = vld [vmem:[#allocation2 + $0xa0] sm:$0xff]
        %v456 = vld [vmem:[#allocation2 + $0xa8] sm:$0xff]
        %v457 = vld [vmem:[#allocation2 + $0xb0] sm:$0xff]
        %v458 = vld [vmem:[#allocation2 + $0xb8] sm:$0xff]
        %v459 = vld [vmem:[#allocation2 + $0xc0] sm:$0xff]
        %v460 = vld [vmem:[#allocation2 + $0xc8] sm:$0xff]
        %v461 = vld [vmem:[#allocation2 + $0xd0] sm:$0xff]
        %v462 = vld [vmem:[#allocation2 + $0xd8] sm:$0xff]
        %v463 = vld [vmem:[#allocation2 + $0xe0] sm:$0xff]
        %v464 = vld [vmem:[#allocation2 + $0xe8] sm:$0xff]
        %v465 = vld [vmem:[#allocation2 + $0xf0] sm:$0xff]
        %v466 = vld [vmem:[#allocation2 + $0xf8] sm:$0xff]
        %v467 = vld [vmem:[#allocation2 + $0x100] sm:$0xff]
        %v468 = vld [vmem:[#allocation2 + $0x108] sm:$0xff]
        %v469 = vld [vmem:[#allocation2 + $0x110] sm:$0xff]
        %v470 = vld [vmem:[#allocation2 + $0x118] sm:$0xff]
        %v471 = vld [vmem:[#allocation2 + $0x120] sm:$0xff]
        %v472 = vld [vmem:[#allocation2 + $0x128] sm:$0xff]
        %v473 = vld [vmem:[#allocation2 + $0x130] sm:$0xff]
        %v474 = vld [vmem:[#allocation2 + $0x138] sm:$0xff]
        %v475 = vld [vmem:[#allocation2 + $0x140] sm:$0xff]
        %v476 = vld [vmem:[#allocation2 + $0x148] sm:$0xff]
        %v477 = vld [vmem:[#allocation2 + $0x150] sm:$0xff]
        %v478 = vld [vmem:[#allocation2 + $0x158] sm:$0xff]
        %v479 = vld [vmem:[#allocation2 + $0x160] sm:$0xff]
        %v480 = vld [vmem:[#allocation2 + $0x168] sm:$0xff]
        %v481 = vld [vmem:[#allocation2 + $0x170] sm:$0xff]
        %v482 = vld [vmem:[#allocation2 + $0x178] sm:$0xff]
        %v483 = vld [vmem:[#allocation2 + $0x180] sm:$0xff]
        %v484 = vld [vmem:[#allocation2 + $0x188] sm:$0xff]
        %v485 = vld [vmem:[#allocation2 + $0x190] sm:$0xff]
        %v486 = vld [vmem:[#allocation2 + $0x198] sm:$0xff]
        %v487 = vld [vmem:[#allocation2 + $0x1a0] sm:$0xff]
        %v488 = vld [vmem:[#allocation2 + $0x1a8] sm:$0xff]
        %v489 = vld [vmem:[#allocation2 + $0x1b0] sm:$0xff]
        %v490 = vld [vmem:[#allocation2 + $0x1b8] sm:$0xff]
        %v491 = vld [vmem:[#allocation2 + $0x1c0] sm:$0xff]
        %v492 = vld [vmem:[#allocation2 + $0x1c8] sm:$0xff]
        %v493 = vld [vmem:[#allocation2 + $0x1d0] sm:$0xff]
        %v494 = vld [vmem:[#allocation2 + $0x1d8] sm:$0xff]
        %v495 = vld [vmem:[#allocation2 + $0x1e0] sm:$0xff]
        %v496 = vld [vmem:[#allocation2 + $0x1e8] sm:$0xff]
        %v497 = vld [vmem:[#allocation2 + $0x1f0] sm:$0xff]
        %v498 = vld [vmem:[#allocation2 + $0x1f8] sm:$0xff]
        %v499 = vld [vmem:[#allocation2 + $0x200] sm:$0xff]
        %v500 = vld [vmem:[#allocation2 + $0x208] sm:$0xff]
        %v501 = vld [vmem:[#allocation2 + $0x210] sm:$0xff]
        %v502 = vld [vmem:[#allocation2 + $0x218] sm:$0xff]
        %v503 = vld [vmem:[#allocation2 + $0x220] sm:$0xff]
        %v504 = vld [vmem:[#allocation2 + $0x228] sm:$0xff]
        %v505 = vld [vmem:[#allocation2 + $0x230] sm:$0xff]
        %v506 = vld [vmem:[#allocation2 + $0x238] sm:$0xff]
        %v507 = vld [vmem:[#allocation2 + $0x240] sm:$0xff]
        %v508 = vld [vmem:[#allocation2 + $0x248] sm:$0xff]
        %v509 = vld [vmem:[#allocation2 + $0x250] sm:$0xff]
        %v510 = vld [vmem:[#allocation2 + $0x258] sm:$0xff]
        %v511 = vld [vmem:[#allocation2 + $0x260] sm:$0xff]
        %v512 = vld [vmem:[#allocation2 + $0x268] sm:$0xff]
        %v513 = vld [vmem:[#allocation2 + $0x270] sm:$0xff]
        %v514 = vld [vmem:[#allocation2 + $0x278] sm:$0xff]
        %v515 = vld [vmem:[#allocation2 + $0x280] sm:$0xff]
        %v516 = vld [vmem:[#allocation2 + $0x288] sm:$0xff]
        %v517 = vld [vmem:[#allocation2 + $0x290] sm:$0xff]
        %v518 = vld [vmem:[#allocation2 + $0x298] sm:$0xff]
        %v519 = vld [vmem:[#allocation2 + $0x2a0] sm:$0xff]
        %v520 = vld [vmem:[#allocation2 + $0x2a8] sm:$0xff]
        %v521 = vld [vmem:[#allocation2 + $0x2b0] sm:$0xff]
        %v522 = vld [vmem:[#allocation2 + $0x2b8] sm:$0xff]
        %v523 = vld [vmem:[#allocation2 + $0x2c0] sm:$0xff]
        %v524 = vld [vmem:[#allocation2 + $0x2c8] sm:$0xff]
        %v525 = vld [vmem:[#allocation2 + $0x2d0] sm:$0xff]
        %v526 = vld [vmem:[#allocation2 + $0x2d8] sm:$0xff]
        %v527 = vld [vmem:[#allocation2 + $0x2e0] sm:$0xff]
        %v528 = vld [vmem:[#allocation2 + $0x2e8] sm:$0xff]
        %v529 = vld [vmem:[#allocation2 + $0x2f0] sm:$0xff]
        %v530 = vld [vmem:[#allocation2 + $0x2f8] sm:$0xff]
        %v531 = vld [vmem:[#allocation2 + $0x300] sm:$0xff]
        %v532 = vld [vmem:[#allocation2 + $0x308] sm:$0xff]
        %v533 = vld [vmem:[#allocation2 + $0x310] sm:$0xff]
        %v534 = vld [vmem:[#allocation2 + $0x318] sm:$0xff]
        %v535 = vld [vmem:[#allocation2 + $0x320] sm:$0xff]
        %v536 = vld [vmem:[#allocation2 + $0x328] sm:$0xff]
        %v537 = vld [vmem:[#allocation2 + $0x330] sm:$0xff]
        %v538 = vld [vmem:[#allocation2 + $0x338] sm:$0xff]
        %v539 = vld [vmem:[#allocation2 + $0x340] sm:$0xff]
        %v540 = vld [vmem:[#allocation2 + $0x348] sm:$0xff]
        %v541 = vld [vmem:[#allocation2 + $0x350] sm:$0xff]
        %v542 = vld [vmem:[#allocation2 + $0x358] sm:$0xff]
        %v543 = vld [vmem:[#allocation2 + $0x360] sm:$0xff]
        %v544 = vld [vmem:[#allocation2 + $0x368] sm:$0xff]
        %v545 = vld [vmem:[#allocation2 + $0x370] sm:$0xff]
        %v546 = vld [vmem:[#allocation2 + $0x378] sm:$0xff]
        %v547 = vld [vmem:[#allocation2 + $0x380] sm:$0xff]
        %v548 = vld [vmem:[#allocation2 + $0x388] sm:$0xff]
        %v549 = vld [vmem:[#allocation2 + $0x390] sm:$0xff]
        %v550 = vld [vmem:[#allocation2 + $0x398] sm:$0xff]
        %v551 = vld [vmem:[#allocation2 + $0x3a0] sm:$0xff]
        %v552 = vld [vmem:[#allocation2 + $0x3a8] sm:$0xff]
        %v553 = vld [vmem:[#allocation2 + $0x3b0] sm:$0xff]
        %v554 = vld [vmem:[#allocation2 + $0x3b8] sm:$0xff]
        %v555 = vld [vmem:[#allocation2 + $0x3c0] sm:$0xff]
        %v556 = vld [vmem:[#allocation2 + $0x3c8] sm:$0xff]
        %v557 = vld [vmem:[#allocation2 + $0x3d0] sm:$0xff]
        %v558 = vld [vmem:[#allocation2 + $0x3d8] sm:$0xff]
        %v559 = vld [vmem:[#allocation2 + $0x3e0] sm:$0xff]
        %v560 = vld [vmem:[#allocation2 + $0x3e8] sm:$0xff]
        %v561 = vld [vmem:[#allocation2 + $0x3f0] sm:$0xff]
        %v562 = vld [vmem:[#allocation2 + $0x3f8] sm:$0xff]
        %v563 = vld [vmem:[#allocation5] sm:$0xff]
        %v564 = vld [vmem:[#allocation5 + $0x8] sm:$0xff]
        %v565 = vld [vmem:[#allocation5 + $0x10] sm:$0xff]
        %v566 = vld [vmem:[#allocation5 + $0x18] sm:$0xff]
        %v567 = vld [vmem:[#allocation5 + $0x20] sm:$0xff]
        %v568 = vld [vmem:[#allocation5 + $0x28] sm:$0xff]
        %v569 = vld [vmem:[#allocation5 + $0x30] sm:$0xff]
        %v570 = vld [vmem:[#allocation5 + $0x38] sm:$0xff]
        %v571 = vld [vmem:[#allocation5 + $0x40] sm:$0xff]
        %v572 = vld [vmem:[#allocation5 + $0x48] sm:$0xff]
        %v573 = vld [vmem:[#allocation5 + $0x50] sm:$0xff]
        %v574 = vld [vmem:[#allocation5 + $0x58] sm:$0xff]
        %v575 = vld [vmem:[#allocation5 + $0x60] sm:$0xff]
        %v576 = vld [vmem:[#allocation5 + $0x68] sm:$0xff]
        %v577 = vld [vmem:[#allocation5 + $0x70] sm:$0xff]
        %v578 = vld [vmem:[#allocation5 + $0x78] sm:$0xff]
        %v579 = vld [vmem:[#allocation5 + $0x80] sm:$0xff]
        %v580 = vld [vmem:[#allocation5 + $0x88] sm:$0xff]
        %v581 = vld [vmem:[#allocation5 + $0x90] sm:$0xff]
        %v582 = vld [vmem:[#allocation5 + $0x98] sm:$0xff]
        %v583 = vld [vmem:[#allocation5 + $0xa0] sm:$0xff]
        %v584 = vld [vmem:[#allocation5 + $0xa8] sm:$0xff]
        %v585 = vld [vmem:[#allocation5 + $0xb0] sm:$0xff]
        %v586 = vld [vmem:[#allocation5 + $0xb8] sm:$0xff]
        %v587 = vld [vmem:[#allocation5 + $0xc0] sm:$0xff]
        %v588 = vld [vmem:[#allocation5 + $0xc8] sm:$0xff]
        %v589 = vld [vmem:[#allocation5 + $0xd0] sm:$0xff]
        %v590 = vld [vmem:[#allocation5 + $0xd8] sm:$0xff]
        %v591 = vld [vmem:[#allocation5 + $0xe0] sm:$0xff]
        %v592 = vld [vmem:[#allocation5 + $0xe8] sm:$0xff]
        %v593 = vld [vmem:[#allocation5 + $0xf0] sm:$0xff]
        %v594 = vld [vmem:[#allocation5 + $0xf8] sm:$0xff]
        %v595 = vld [vmem:[#allocation5 + $0x100] sm:$0xff]
        %v596 = vld [vmem:[#allocation5 + $0x108] sm:$0xff]
        %v597 = vld [vmem:[#allocation5 + $0x110] sm:$0xff]
        %v598 = vld [vmem:[#allocation5 + $0x118] sm:$0xff]
        %v599 = vld [vmem:[#allocation5 + $0x120] sm:$0xff]
        %v600 = vld [vmem:[#allocation5 + $0x128] sm:$0xff]
        %v601 = vld [vmem:[#allocation5 + $0x130] sm:$0xff]
        %v602 = vld [vmem:[#allocation5 + $0x138] sm:$0xff]
        %v603 = vld [vmem:[#allocation5 + $0x140] sm:$0xff]
        %v604 = vld [vmem:[#allocation5 + $0x148] sm:$0xff]
        %v605 = vld [vmem:[#allocation5 + $0x150] sm:$0xff]
        %v606 = vld [vmem:[#allocation5 + $0x158] sm:$0xff]
        %v607 = vld [vmem:[#allocation5 + $0x160] sm:$0xff]
        %v608 = vld [vmem:[#allocation5 + $0x168] sm:$0xff]
        %v609 = vld [vmem:[#allocation5 + $0x170] sm:$0xff]
        %v610 = vld [vmem:[#allocation5 + $0x178] sm:$0xff]
        %v611 = vld [vmem:[#allocation5 + $0x180] sm:$0xff]
        %v612 = vld [vmem:[#allocation5 + $0x188] sm:$0xff]
        %v613 = vld [vmem:[#allocation5 + $0x190] sm:$0xff]
        %v614 = vld [vmem:[#allocation5 + $0x198] sm:$0xff]
        %v615 = vld [vmem:[#allocation5 + $0x1a0] sm:$0xff]
        %v616 = vld [vmem:[#allocation5 + $0x1a8] sm:$0xff]
        %v617 = vld [vmem:[#allocation5 + $0x1b0] sm:$0xff]
        %v618 = vld [vmem:[#allocation5 + $0x1b8] sm:$0xff]
        %v619 = vld [vmem:[#allocation5 + $0x1c0] sm:$0xff]
        %v620 = vld [vmem:[#allocation5 + $0x1c8] sm:$0xff]
        %v621 = vld [vmem:[#allocation5 + $0x1d0] sm:$0xff]
        %v622 = vld [vmem:[#allocation5 + $0x1d8] sm:$0xff]
        %v623 = vld [vmem:[#allocation5 + $0x1e0] sm:$0xff]
        %v624 = vld [vmem:[#allocation5 + $0x1e8] sm:$0xff]
        %v625 = vld [vmem:[#allocation5 + $0x1f0] sm:$0xff]
        %v626 = vld [vmem:[#allocation5 + $0x1f8] sm:$0xff]
        %v627 = vld [vmem:[#allocation5 + $0x200] sm:$0xff]
        %v628 = vld [vmem:[#allocation5 + $0x208] sm:$0xff]
        %v629 = vld [vmem:[#allocation5 + $0x210] sm:$0xff]
        %v630 = vld [vmem:[#allocation5 + $0x218] sm:$0xff]
        %v631 = vld [vmem:[#allocation5 + $0x220] sm:$0xff]
        %v632 = vld [vmem:[#allocation5 + $0x228] sm:$0xff]
        %v633 = vld [vmem:[#allocation5 + $0x230] sm:$0xff]
        %v634 = vld [vmem:[#allocation5 + $0x238] sm:$0xff]
        %v635 = vld [vmem:[#allocation5 + $0x240] sm:$0xff]
        %v636 = vld [vmem:[#allocation5 + $0x248] sm:$0xff]
        %v637 = vld [vmem:[#allocation5 + $0x250] sm:$0xff]
        %v638 = vld [vmem:[#allocation5 + $0x258] sm:$0xff]
        %v639 = vld [vmem:[#allocation5 + $0x260] sm:$0xff]
        %v640 = vld [vmem:[#allocation5 + $0x268] sm:$0xff]
        %v641 = vld [vmem:[#allocation5 + $0x270] sm:$0xff]
        %v642 = vld [vmem:[#allocation5 + $0x278] sm:$0xff]
        %v643 = vld [vmem:[#allocation5 + $0x280] sm:$0xff]
        %v644 = vld [vmem:[#allocation5 + $0x288] sm:$0xff]
        %v645 = vld [vmem:[#allocation5 + $0x290] sm:$0xff]
        %v646 = vld [vmem:[#allocation5 + $0x298] sm:$0xff]
        %v647 = vld [vmem:[#allocation5 + $0x2a0] sm:$0xff]
        %v648 = vld [vmem:[#allocation5 + $0x2a8] sm:$0xff]
        %v649 = vld [vmem:[#allocation5 + $0x2b0] sm:$0xff]
        %v650 = vld [vmem:[#allocation5 + $0x2b8] sm:$0xff]
        %v651 = vld [vmem:[#allocation5 + $0x2c0] sm:$0xff]
        %v652 = vld [vmem:[#allocation5 + $0x2c8] sm:$0xff]
        %v653 = vld [vmem:[#allocation5 + $0x2d0] sm:$0xff]
        %v654 = vld [vmem:[#allocation5 + $0x2d8] sm:$0xff]
        %v655 = vld [vmem:[#allocation5 + $0x2e0] sm:$0xff]
        %v656 = vld [vmem:[#allocation5 + $0x2e8] sm:$0xff]
        %v657 = vld [vmem:[#allocation5 + $0x2f0] sm:$0xff]
        %v658 = vld [vmem:[#allocation5 + $0x2f8] sm:$0xff]
        %v659 = vld [vmem:[#allocation5 + $0x300] sm:$0xff]
        %v660 = vld [vmem:[#allocation5 + $0x308] sm:$0xff]
        %v661 = vld [vmem:[#allocation5 + $0x310] sm:$0xff]
        %v662 = vld [vmem:[#allocation5 + $0x318] sm:$0xff]
        %v663 = vld [vmem:[#allocation5 + $0x320] sm:$0xff]
        %v664 = vld [vmem:[#allocation5 + $0x328] sm:$0xff]
        %v665 = vld [vmem:[#allocation5 + $0x330] sm:$0xff]
        %v666 = vld [vmem:[#allocation5 + $0x338] sm:$0xff]
        %v667 = vld [vmem:[#allocation5 + $0x340] sm:$0xff]
        %v668 = vld [vmem:[#allocation5 + $0x348] sm:$0xff]
        %v669 = vld [vmem:[#allocation5 + $0x350] sm:$0xff]
        %v670 = vld [vmem:[#allocation5 + $0x358] sm:$0xff]
        %v671 = vld [vmem:[#allocation5 + $0x360] sm:$0xff]
        %v672 = vld [vmem:[#allocation5 + $0x368] sm:$0xff]
        %v673 = vld [vmem:[#allocation5 + $0x370] sm:$0xff]
        %v674 = vld [vmem:[#allocation5 + $0x378] sm:$0xff]
        %v675 = vld [vmem:[#allocation5 + $0x380] sm:$0xff]
        %v676 = vld [vmem:[#allocation5 + $0x388] sm:$0xff]
        %v677 = vld [vmem:[#allocation5 + $0x390] sm:$0xff]
        %v678 = vld [vmem:[#allocation5 + $0x398] sm:$0xff]
        %v679 = vld [vmem:[#allocation5 + $0x3a0] sm:$0xff]
        %v680 = vld [vmem:[#allocation5 + $0x3a8] sm:$0xff]
        %v681 = vld [vmem:[#allocation5 + $0x3b0] sm:$0xff]
        %v682 = vld [vmem:[#allocation5 + $0x3b8] sm:$0xff]
        %v683 = vld [vmem:[#allocation5 + $0x3c0] sm:$0xff]
        %v684 = vld [vmem:[#allocation5 + $0x3c8] sm:$0xff]
        %v685 = vld [vmem:[#allocation5 + $0x3d0] sm:$0xff]
        %v686 = vld [vmem:[#allocation5 + $0x3d8] sm:$0xff]
        %v687 = vld [vmem:[#allocation5 + $0x3e0] sm:$0xff]
        %v688 = vld [vmem:[#allocation5 + $0x3e8] sm:$0xff]
        %v689 = vld [vmem:[#allocation5 + $0x3f0] sm:$0xff]
        %v690 = vld [vmem:[#allocation5 + $0x3f8] sm:$0xff]
        %v691 = vld [vmem:[%s3] sm:$0x3]
        %692 = vmatprep.subr.mxu0 %v436
        %693 = vmatpush1.msra.mxu0 %v435
        %694 = vmatprep.subr.mxu0 %v440
        %695 = vmatpush1.msra.mxu0 %v439
        %696 = vmatprep.subr.mxu0 %v444
        %697 = vmatpush1.msra.mxu0 %v443
        %698 = vmatprep.subr.mxu0 %v448
        %699 = vmatpush1.msra.mxu0 %v447
        %700 = vmatprep.subr.mxu0 %v452
        %701 = vmatpush1.msra.mxu0 %v451
        %702 = vmatprep.subr.mxu0 %v456
        %703 = vmatpush1.msra.mxu0 %v455
        %704 = vmatprep.subr.mxu0 %v460
        %705 = vmatpush1.msra.mxu0 %v459
        %706 = vmatprep.subr.mxu0 %v464
        %707 = vmatpush1.msra.mxu0 %v463
        %708 = vmatprep.subr.mxu0 %v468
        %709 = vmatpush1.msra.mxu0 %v467
        %710 = vmatprep.subr.mxu0 %v472
        %711 = vmatpush1.msra.mxu0 %v471
        %712 = vmatprep.subr.mxu0 %v476
        %713 = vmatpush1.msra.mxu0 %v475
        %714 = vmatprep.subr.mxu0 %v480
        %715 = vmatpush1.msra.mxu0 %v479
        %716 = vmatprep.subr.mxu0 %v484
        %717 = vmatpush1.msra.mxu0 %v483
        %718 = vmatprep.subr.mxu0 %v488
        %719 = vmatpush1.msra.mxu0 %v487
        %720 = vmatprep.subr.mxu0 %v492
        %721 = vmatpush1.msra.mxu0 %v491
        %722 = vmatprep.subr.mxu0 %v496
        %723 = vmatpush1.msra.mxu0 %v495
        %724 = vmatprep.subr.mxu0 %v500
        %725 = vmatpush1.msra.mxu0 %v499
        %726 = vmatprep.subr.mxu0 %v504
        %727 = vmatpush1.msra.mxu0 %v503
        %728 = vmatprep.subr.mxu0 %v508
        %729 = vmatpush1.msra.mxu0 %v507
        %730 = vmatprep.subr.mxu0 %v512
        %731 = vmatpush1.msra.mxu0 %v511
        %732 = vmatprep.subr.mxu0 %v516
        %733 = vmatpush1.msra.mxu0 %v515
        %734 = vmatprep.subr.mxu0 %v520
        %735 = vmatpush1.msra.mxu0 %v519
        %736 = vmatprep.subr.mxu0 %v524
        %737 = vmatpush1.msra.mxu0 %v523
        %738 = vmatprep.subr.mxu0 %v528
        %739 = vmatpush1.msra.mxu0 %v527
        %740 = vmatprep.subr.mxu0 %v532
        %741 = vmatpush1.msra.mxu0 %v531
        %742 = vmatprep.subr.mxu0 %v536
        %743 = vmatpush1.msra.mxu0 %v535
        %744 = vmatprep.subr.mxu0 %v540
        %745 = vmatpush1.msra.mxu0 %v539
        %746 = vmatprep.subr.mxu0 %v544
        %747 = vmatpush1.msra.mxu0 %v543
        %748 = vmatprep.subr.mxu0 %v548
        %749 = vmatpush1.msra.mxu0 %v547
        %750 = vmatprep.subr.mxu0 %v552
        %751 = vmatpush1.msra.mxu0 %v551
        %752 = vmatprep.subr.mxu0 %v556
        %753 = vmatpush1.msra.mxu0 %v555
        %754 = vmatprep.subr.mxu0 %v560
        %755 = vmatpush1.msra.mxu0 %v559
        %756 = vmatprep.mubr.f32.mxu0 %v432
        %757 = vmatmul.mubr.f32.gmra.mrb[0].mxu0 %v431
        %v758 = vpop.f32.mrb[0].mxu0
        %v759 = vadd.f32 0.0, %v758
        %v760 = vpop.f32.mrb[0].mxu0
        %v761 = vadd.f32 0.0, %v760
        %762 = vmatprep.mubr.f32.mxu0 %v434
        %763 = vmatmul.mubr.f32.gmra.mrb[0].mxu0 %v433
        %v764 = vpop.f32.mrb[0].mxu0
        %v765 = vadd.f32 0.0, %v764
        %v766 = vpop.f32.mrb[0].mxu0
        %v767 = vadd.f32 0.0, %v766
        %768 = vdwg.mxu0
        %769 = vmatprep.subr.mxu0 %v438
        %770 = vmatpush1.msra.mxu0 %v437
        %771 = vmatprep.subr.mxu0 %v442
        %772 = vmatpush1.msra.mxu0 %v441
        %773 = vmatprep.subr.mxu0 %v446
        %774 = vmatpush1.msra.mxu0 %v445
        %775 = vmatprep.subr.mxu0 %v450
        %776 = vmatpush1.msra.mxu0 %v449
        %777 = vmatprep.subr.mxu0 %v454
        %778 = vmatpush1.msra.mxu0 %v453
        %779 = vmatprep.subr.mxu0 %v458
        %780 = vmatpush1.msra.mxu0 %v457
        %781 = vmatprep.subr.mxu0 %v462
        %782 = vmatpush1.msra.mxu0 %v461
        %783 = vmatprep.subr.mxu0 %v466
        %784 = vmatpush1.msra.mxu0 %v465
        %785 = vmatprep.subr.mxu0 %v470
        %786 = vmatpush1.msra.mxu0 %v469
        %787 = vmatprep.subr.mxu0 %v474
        %788 = vmatpush1.msra.mxu0 %v473
        %789 = vmatprep.subr.mxu0 %v478
        %790 = vmatpush1.msra.mxu0 %v477
        %791 = vmatprep.subr.mxu0 %v482
        %792 = vmatpush1.msra.mxu0 %v481
        %793 = vmatprep.subr.mxu0 %v486
        %794 = vmatpush1.msra.mxu0 %v485
        %795 = vmatprep.subr.mxu0 %v490
        %796 = vmatpush1.msra.mxu0 %v489
        %797 = vmatprep.subr.mxu0 %v494
        %798 = vmatpush1.msra.mxu0 %v493
        %799 = vmatprep.subr.mxu0 %v498
        %800 = vmatpush1.msra.mxu0 %v497
        %801 = vmatprep.subr.mxu0 %v502
        %802 = vmatpush1.msra.mxu0 %v501
        %803 = vmatprep.subr.mxu0 %v506
        %804 = vmatpush1.msra.mxu0 %v505
        %805 = vmatprep.subr.mxu0 %v510
        %806 = vmatpush1.msra.mxu0 %v509
        %807 = vmatprep.subr.mxu0 %v514
        %808 = vmatpush1.msra.mxu0 %v513
        %809 = vmatprep.subr.mxu0 %v518
        %810 = vmatpush1.msra.mxu0 %v517
        %811 = vmatprep.subr.mxu0 %v522
        %812 = vmatpush1.msra.mxu0 %v521
        %813 = vmatprep.subr.mxu0 %v526
        %814 = vmatpush1.msra.mxu0 %v525
        %815 = vmatprep.subr.mxu0 %v530
        %816 = vmatpush1.msra.mxu0 %v529
        %817 = vmatprep.subr.mxu0 %v534
        %818 = vmatpush1.msra.mxu0 %v533
        %819 = vmatprep.subr.mxu0 %v538
        %820 = vmatpush1.msra.mxu0 %v537
        %821 = vmatprep.subr.mxu0 %v542
        %822 = vmatpush1.msra.mxu0 %v541
        %823 = vmatprep.subr.mxu0 %v546
        %824 = vmatpush1.msra.mxu0 %v545
        %825 = vmatprep.subr.mxu0 %v550
        %826 = vmatpush1.msra.mxu0 %v549
        %827 = vmatprep.subr.mxu0 %v554
        %828 = vmatpush1.msra.mxu0 %v553
        %829 = vmatprep.subr.mxu0 %v558
        %830 = vmatpush1.msra.mxu0 %v557
        %831 = vmatprep.subr.mxu0 %v562
        %832 = vmatpush1.msra.mxu0 %v561
        %833 = vmatprep.mubr.f32.mxu0 %v432
        %834 = vmatmul.mubr.f32.gmra.mrb[0].mxu0 %v431
        %v835 = vpop.f32.mrb[0].mxu0
        %v836 = vadd.f32 0.0, %v835
        %v837 = vpop.f32.mrb[0].mxu0
        %v838 = vadd.f32 0.0, %v837
        %839 = vmatprep.mubr.f32.mxu0 %v434
        %840 = vmatmul.mubr.f32.gmra.mrb[0].mxu0 %v433
        %v841 = vpop.f32.mrb[0].mxu0
        %v842 = vadd.f32 0.0, %v841
        %v843 = vpop.f32.mrb[0].mxu0
        %v844 = vadd.f32 0.0, %v843
        %845 = vdwg.mxu0
        %846 = vmatprep.subr.mxu0 %v564
        %847 = vmatpush1.msra.mxu0 %v563
        %848 = vmatprep.subr.mxu0 %v568
        %849 = vmatpush1.msra.mxu0 %v567
        %850 = vmatprep.subr.mxu0 %v572
        %851 = vmatpush1.msra.mxu0 %v571
        %852 = vmatprep.subr.mxu0 %v576
        %853 = vmatpush1.msra.mxu0 %v575
        %854 = vmatprep.subr.mxu0 %v580
        %855 = vmatpush1.msra.mxu0 %v579
        %856 = vmatprep.subr.mxu0 %v584
        %857 = vmatpush1.msra.mxu0 %v583
        %858 = vmatprep.subr.mxu0 %v588
        %859 = vmatpush1.msra.mxu0 %v587
        %860 = vmatprep.subr.mxu0 %v592
        %861 = vmatpush1.msra.mxu0 %v591
        %862 = vmatprep.subr.mxu0 %v596
        %863 = vmatpush1.msra.mxu0 %v595
        %864 = vmatprep.subr.mxu0 %v600
        %865 = vmatpush1.msra.mxu0 %v599
        %866 = vmatprep.subr.mxu0 %v604
        %867 = vmatpush1.msra.mxu0 %v603
        %868 = vmatprep.subr.mxu0 %v608
        %869 = vmatpush1.msra.mxu0 %v607
        %870 = vmatprep.subr.mxu0 %v612
        %871 = vmatpush1.msra.mxu0 %v611
        %872 = vmatprep.subr.mxu0 %v616
        %873 = vmatpush1.msra.mxu0 %v615
        %874 = vmatprep.subr.mxu0 %v620
        %875 = vmatpush1.msra.mxu0 %v619
        %876 = vmatprep.subr.mxu0 %v624
        %877 = vmatpush1.msra.mxu0 %v623
        %878 = vmatprep.subr.mxu0 %v628
        %879 = vmatpush1.msra.mxu0 %v627
        %880 = vmatprep.subr.mxu0 %v632
        %881 = vmatpush1.msra.mxu0 %v631
        %882 = vmatprep.subr.mxu0 %v636
        %883 = vmatpush1.msra.mxu0 %v635
        %884 = vmatprep.subr.mxu0 %v640
        %885 = vmatpush1.msra.mxu0 %v639
        %886 = vmatprep.subr.mxu0 %v644
        %887 = vmatpush1.msra.mxu0 %v643
        %888 = vmatprep.subr.mxu0 %v648
        %889 = vmatpush1.msra.mxu0 %v647
        %890 = vmatprep.subr.mxu0 %v652
        %891 = vmatpush1.msra.mxu0 %v651
        %892 = vmatprep.subr.mxu0 %v656
        %893 = vmatpush1.msra.mxu0 %v655
        %894 = vmatprep.subr.mxu0 %v660
        %895 = vmatpush1.msra.mxu0 %v659
        %896 = vmatprep.subr.mxu0 %v664
        %897 = vmatpush1.msra.mxu0 %v663
        %898 = vmatprep.subr.mxu0 %v668
        %899 = vmatpush1.msra.mxu0 %v667
        %900 = vmatprep.subr.mxu0 %v672
        %901 = vmatpush1.msra.mxu0 %v671
        %902 = vmatprep.subr.mxu0 %v676
        %903 = vmatpush1.msra.mxu0 %v675
        %904 = vmatprep.subr.mxu0 %v680
        %905 = vmatpush1.msra.mxu0 %v679
        %906 = vmatprep.subr.mxu0 %v684
        %907 = vmatpush1.msra.mxu0 %v683
        %908 = vmatprep.subr.mxu0 %v688
        %909 = vmatpush1.msra.mxu0 %v687
        %910 = vmatprep.mubr.f32.mxu0 %v432
        %911 = vmatmul.mubr.f32.gmra.mrb[0].mxu0 %v431
        %v912 = vpop.f32.mrb[0].mxu0
        %v913 = vadd.f32 0.0, %v912
        %v914 = vpop.f32.mrb[0].mxu0
        %v915 = vadd.f32 0.0, %v914
        %916 = vmatprep.mubr.f32.mxu0 %v434
        %917 = vmatmul.mubr.f32.gmra.mrb[0].mxu0 %v433
        %v918 = vpop.f32.mrb[0].mxu0
        %v919 = vadd.f32 0.0, %v918
        %v920 = vpop.f32.mrb[0].mxu0
        %v921 = vadd.f32 0.0, %v920
        %922 = vdwg.mxu0
        %923 = vmatprep.subr.mxu0 %v566
        %924 = vmatpush1.msra.mxu0 %v565
        %925 = vmatprep.subr.mxu0 %v570
        %926 = vmatpush1.msra.mxu0 %v569
        %927 = vmatprep.subr.mxu0 %v574
        %928 = vmatpush1.msra.mxu0 %v573
        %929 = vmatprep.subr.mxu0 %v578
        %930 = vmatpush1.msra.mxu0 %v577
        %931 = vmatprep.subr.mxu0 %v582
        %932 = vmatpush1.msra.mxu0 %v581
        %933 = vmatprep.subr.mxu0 %v586
        %934 = vmatpush1.msra.mxu0 %v585
        %935 = vmatprep.subr.mxu0 %v590
        %936 = vmatpush1.msra.mxu0 %v589
        %937 = vmatprep.subr.mxu0 %v594
        %938 = vmatpush1.msra.mxu0 %v593
        %939 = vmatprep.subr.mxu0 %v598
        %940 = vmatpush1.msra.mxu0 %v597
        %941 = vmatprep.subr.mxu0 %v602
        %942 = vmatpush1.msra.mxu0 %v601
        %943 = vmatprep.subr.mxu0 %v606
        %944 = vmatpush1.msra.mxu0 %v605
        %945 = vmatprep.subr.mxu0 %v610
        %946 = vmatpush1.msra.mxu0 %v609
        %947 = vmatprep.subr.mxu0 %v614
        %948 = vmatpush1.msra.mxu0 %v613
        %949 = vmatprep.subr.mxu0 %v618
        %950 = vmatpush1.msra.mxu0 %v617
        %951 = vmatprep.subr.mxu0 %v622
        %952 = vmatpush1.msra.mxu0 %v621
        %953 = vmatprep.subr.mxu0 %v626
        %954 = vmatpush1.msra.mxu0 %v625
        %955 = vmatprep.subr.mxu0 %v630
        %956 = vmatpush1.msra.mxu0 %v629
        %957 = vmatprep.subr.mxu0 %v634
        %958 = vmatpush1.msra.mxu0 %v633
        %959 = vmatprep.subr.mxu0 %v638
        %960 = vmatpush1.msra.mxu0 %v637
        %961 = vmatprep.subr.mxu0 %v642
        %962 = vmatpush1.msra.mxu0 %v641
        %963 = vmatprep.subr.mxu0 %v646
        %964 = vmatpush1.msra.mxu0 %v645
        %965 = vmatprep.subr.mxu0 %v650
        %966 = vmatpush1.msra.mxu0 %v649
        %967 = vmatprep.subr.mxu0 %v654
        %968 = vmatpush1.msra.mxu0 %v653
        %969 = vmatprep.subr.mxu0 %v658
        %970 = vmatpush1.msra.mxu0 %v657
        %971 = vmatprep.subr.mxu0 %v662
        %972 = vmatpush1.msra.mxu0 %v661
        %973 = vmatprep.subr.mxu0 %v666
        %974 = vmatpush1.msra.mxu0 %v665
        %975 = vmatprep.subr.mxu0 %v670
        %976 = vmatpush1.msra.mxu0 %v669
        %977 = vmatprep.subr.mxu0 %v674
        %978 = vmatpush1.msra.mxu0 %v673
        %979 = vmatprep.subr.mxu0 %v678
        %980 = vmatpush1.msra.mxu0 %v677
        %981 = vmatprep.subr.mxu0 %v682
        %982 = vmatpush1.msra.mxu0 %v681
        %983 = vmatprep.subr.mxu0 %v686
        %984 = vmatpush1.msra.mxu0 %v685
        %985 = vmatprep.subr.mxu0 %v690
        %986 = vmatpush1.msra.mxu0 %v689
        %987 = vmatprep.mubr.f32.mxu0 %v432
        %988 = vmatmul.mubr.f32.gmra.mrb[0].mxu0 %v431
        %v989 = vpop.f32.mrb[0].mxu0
        %v990 = vadd.f32 0.0, %v989
        %v991 = vpop.f32.mrb[0].mxu0
        %v992 = vadd.f32 0.0, %v991
        %993 = vmatprep.mubr.f32.mxu0 %v434
        %994 = vmatmul.mubr.f32.gmra.mrb[0].mxu0 %v433
        %v995 = vpop.f32.mrb[0].mxu0
        %v996 = vadd.f32 0.0, %v995
        %v997 = vpop.f32.mrb[0].mxu0
        %v998 = vadd.f32 0.0, %v997
        %999 = vdwg.mxu0
        %v1000 = vlaneseq
        %v1001 = vshrl.u32 %v1000, 7
        %v1002 = vadd.s32 %v1001, 8
        %v1003 = vadd.s32 %v1001, 16
        %v1004 = vadd.s32 %v1001, 24
        %v1005 = vlaneseq
        %v1006 = vand.u32 %v1005, 127
        %v1007 = vmul.u32 %v1006, 2
        %vm1008 = vcmp.eq.s32.totalorder %v1001, %v1007
        %vm1009 = vcmp.eq.s32.totalorder %v1002, %v1007
        %vm1010 = vcmp.eq.s32.totalorder %v1003, %v1007
        %vm1011 = vcmp.eq.s32.totalorder %v1004, %v1007
        %v1012 = vsel %vm1008, 1.0, 0.0
        %v1013 = vsel %vm1009, 1.0, 0.0
        %v1014 = vsel %vm1010, 1.0, 0.0
        %v1015 = vsel %vm1011, 1.0, 0.0
        %v1016 = vadd.s32 %v1007, 1
        %vm1017 = vcmp.eq.s32.totalorder %v1001, %v1016
        %vm1018 = vcmp.eq.s32.totalorder %v1002, %v1016
        %vm1019 = vcmp.eq.s32.totalorder %v1003, %v1016
        %vm1020 = vcmp.eq.s32.totalorder %v1004, %v1016
        %v1021 = vsel %vm1017, 1.0, 0.0
        %v1022 = vsel %vm1018, 1.0, 0.0
        %v1023 = vsel %vm1019, 1.0, 0.0
        %v1024 = vsel %vm1020, 1.0, 0.0
        %v1025 = vadd.s32 %v1007, 2
        %vm1026 = vcmp.eq.s32.totalorder %v1001, %v1025
        %vm1027 = vcmp.eq.s32.totalorder %v1002, %v1025
        %vm1028 = vcmp.eq.s32.totalorder %v1003, %v1025
        %vm1029 = vcmp.eq.s32.totalorder %v1004, %v1025
        %v1030 = vsel %vm1026, 1.0, 0.0
        %v1031 = vsel %vm1027, 1.0, 0.0
        %v1032 = vsel %vm1028, 1.0, 0.0
        %v1033 = vsel %vm1029, 1.0, 0.0
        %v1034 = vsub.s32 %v1007, 1
        %vm1035 = vcmp.eq.s32.totalorder %v1001, %v1034
        %vm1036 = vcmp.eq.s32.totalorder %v1002, %v1034
        %vm1037 = vcmp.eq.s32.totalorder %v1003, %v1034
        %vm1038 = vcmp.eq.s32.totalorder %v1004, %v1034
        %v1039 = vsel %vm1035, 1.0, 0.0
        %v1040 = vsel %vm1036, 1.0, 0.0
        %v1041 = vsel %vm1037, 1.0, 0.0
        %v1042 = vsel %vm1038, 1.0, 0.0
        %vm1043 = vcmask 130048
        %v1045 = vsel %vm1043, %v1021, 0
        %v1048 = vsel %vm1043, %v1022, 0
        %v1051 = vsel %vm1043, %v1023, 0
        %v1054 = vsel %vm1043, %v1024, 0
        %1056 = vmatprep.subr.mxu0 %v838
        %1057 = vmatpush1.msra.mxu0 %v836
        %1058 = vmatprep.subr.mxu0 %v844
        %1059 = vmatpush1.msra.mxu0 %v842
        %1060 = vmatprep.subr.mxu0 0.0
        %1061 = vmatpush1.msra.mxu0 0.0
        %1062 = vmatprep.subr.mxu0 0.0
        %1063 = vmatpush1.msra.mxu0 0.0
        %1064 = vmatprep.subr.mxu0 0.0
        %1065 = vmatpush1.msra.mxu0 0.0
        %1066 = vmatprep.subr.mxu0 0.0
        %1067 = vmatpush1.msra.mxu0 0.0
        %1068 = vmatprep.subr.mxu0 0.0
        %1069 = vmatpush1.msra.mxu0 0.0
        %1070 = vmatprep.subr.mxu0 0.0
        %1071 = vmatpush1.msra.mxu0 0.0
        %1072 = vmatprep.subr.mxu0 0.0
        %1073 = vmatpush1.msra.mxu0 0.0
        %1074 = vmatprep.subr.mxu0 0.0
        %1075 = vmatpush1.msra.mxu0 0.0
        %1076 = vmatprep.subr.mxu0 0.0
        %1077 = vmatpush1.msra.mxu0 0.0
        %1078 = vmatprep.subr.mxu0 0.0
        %1079 = vmatpush1.msra.mxu0 0.0
        %1080 = vmatprep.subr.mxu0 0.0
        %1081 = vmatpush1.msra.mxu0 0.0
        %1082 = vmatprep.subr.mxu0 0.0
        %1083 = vmatpush1.msra.mxu0 0.0
        %1084 = vmatprep.subr.mxu0 0.0
        %1085 = vmatpush1.msra.mxu0 0.0
        %1086 = vmatprep.subr.mxu0 0.0
        %1087 = vmatpush1.msra.mxu0 0.0
        %1088 = vmatprep.subr.mxu0 0.0
        %1089 = vmatpush1.msra.mxu0 0.0
        %1090 = vmatprep.subr.mxu0 0.0
        %1091 = vmatpush1.msra.mxu0 0.0
        %1092 = vmatprep.subr.mxu0 0.0
        %1093 = vmatpush1.msra.mxu0 0.0
        %1094 = vmatprep.subr.mxu0 0.0
        %1095 = vmatpush1.msra.mxu0 0.0
        %1096 = vmatprep.subr.mxu0 0.0
        %1097 = vmatpush1.msra.mxu0 0.0
        %1098 = vmatprep.subr.mxu0 0.0
        %1099 = vmatpush1.msra.mxu0 0.0
        %1100 = vmatprep.subr.mxu0 0.0
        %1101 = vmatpush1.msra.mxu0 0.0
        %1102 = vmatprep.subr.mxu0 0.0
        %1103 = vmatpush1.msra.mxu0 0.0
        %1104 = vmatprep.subr.mxu0 0.0
        %1105 = vmatpush1.msra.mxu0 0.0
        %1106 = vmatprep.subr.mxu0 0.0
        %1107 = vmatpush1.msra.mxu0 0.0
        %1108 = vmatprep.subr.mxu0 0.0
        %1109 = vmatpush1.msra.mxu0 0.0
        %1110 = vmatprep.subr.mxu0 0.0
        %1111 = vmatpush1.msra.mxu0 0.0
        %1112 = vmatprep.subr.mxu0 0.0
        %1113 = vmatpush1.msra.mxu0 0.0
        %1114 = vmatprep.subr.mxu0 0.0
        %1115 = vmatpush1.msra.mxu0 0.0
        %1116 = vmatprep.subr.mxu0 0.0
        %1117 = vmatpush1.msra.mxu0 0.0
        %1118 = vmatprep.subr.mxu0 0.0
        %1119 = vmatpush1.msra.mxu0 0.0
        %1120 = vmatprep.mubr.f32.mxu0 0.0
        %1121 = vmatmul.mubr.f32.gmra.mrb[0].mxu0 %v1045
        %v1122 = vpop.f32.mrb[0].mxu0
        %v1123 = vadd.f32 0.0, %v1122
        %v1124 = vpop.f32.mrb[0].mxu0
        %v1125 = vadd.f32 0.0, %v1124
        %1126 = vmatprep.mubr.f32.mxu0 0.0
        %1127 = vmatmul.mubr.f32.gmra.mrb[0].mxu0 %v1048
        %v1128 = vpop.f32.mrb[0].mxu0
        %v1129 = vadd.f32 0.0, %v1128
        %v1130 = vpop.f32.mrb[0].mxu0
        %v1131 = vadd.f32 0.0, %v1130
        %1132 = vmatprep.mubr.f32.mxu0 0.0
        %1133 = vmatmul.mubr.f32.gmra.mrb[0].mxu0 %v1051
        %v1134 = vpop.f32.mrb[0].mxu0
        %v1135 = vadd.f32 0.0, %v1134
        %v1136 = vpop.f32.mrb[0].mxu0
        %v1137 = vadd.f32 0.0, %v1136
        %1138 = vmatprep.mubr.f32.mxu0 0.0
        %1139 = vmatmul.mubr.f32.gmra.mrb[0].mxu0 %v1054
        %v1140 = vpop.f32.mrb[0].mxu0
        %v1141 = vadd.f32 0.0, %v1140
        %v1142 = vpop.f32.mrb[0].mxu0
        %v1143 = vadd.f32 0.0, %v1142
        %1144 = vdwg.mxu0
        %v1146 = vsel %vm1043, %v1012, 0
        %v1149 = vsel %vm1043, %v1013, 0
        %v1152 = vsel %vm1043, %v1014, 0
        %v1155 = vsel %vm1043, %v1015, 0
        %1157 = vmatprep.subr.mxu0 %v761
        %1158 = vmatpush1.msra.mxu0 %v759
        %1159 = vmatprep.subr.mxu0 %v767
        %1160 = vmatpush1.msra.mxu0 %v765
        %1161 = vmatprep.subr.mxu0 0.0
        %1162 = vmatpush1.msra.mxu0 0.0
        %1163 = vmatprep.subr.mxu0 0.0
        %1164 = vmatpush1.msra.mxu0 0.0
        %1165 = vmatprep.subr.mxu0 0.0
        %1166 = vmatpush1.msra.mxu0 0.0
        %1167 = vmatprep.subr.mxu0 0.0
        %1168 = vmatpush1.msra.mxu0 0.0
        %1169 = vmatprep.subr.mxu0 0.0
        %1170 = vmatpush1.msra.mxu0 0.0
        %1171 = vmatprep.subr.mxu0 0.0
        %1172 = vmatpush1.msra.mxu0 0.0
        %1173 = vmatprep.subr.mxu0 0.0
        %1174 = vmatpush1.msra.mxu0 0.0
        %1175 = vmatprep.subr.mxu0 0.0
        %1176 = vmatpush1.msra.mxu0 0.0
        %1177 = vmatprep.subr.mxu0 0.0
        %1178 = vmatpush1.msra.mxu0 0.0
        %1179 = vmatprep.subr.mxu0 0.0
        %1180 = vmatpush1.msra.mxu0 0.0
        %1181 = vmatprep.subr.mxu0 0.0
        %1182 = vmatpush1.msra.mxu0 0.0
        %1183 = vmatprep.subr.mxu0 0.0
        %1184 = vmatpush1.msra.mxu0 0.0
        %1185 = vmatprep.subr.mxu0 0.0
        %1186 = vmatpush1.msra.mxu0 0.0
        %1187 = vmatprep.subr.mxu0 0.0
        %1188 = vmatpush1.msra.mxu0 0.0
        %1189 = vmatprep.subr.mxu0 0.0
        %1190 = vmatpush1.msra.mxu0 0.0
        %1191 = vmatprep.subr.mxu0 0.0
        %1192 = vmatpush1.msra.mxu0 0.0
        %1193 = vmatprep.subr.mxu0 0.0
        %1194 = vmatpush1.msra.mxu0 0.0
        %1195 = vmatprep.subr.mxu0 0.0
        %1196 = vmatpush1.msra.mxu0 0.0
        %1197 = vmatprep.subr.mxu0 0.0
        %1198 = vmatpush1.msra.mxu0 0.0
        %1199 = vmatprep.subr.mxu0 0.0
        %1200 = vmatpush1.msra.mxu0 0.0
        %1201 = vmatprep.subr.mxu0 0.0
        %1202 = vmatpush1.msra.mxu0 0.0
        %1203 = vmatprep.subr.mxu0 0.0
        %1204 = vmatpush1.msra.mxu0 0.0
        %1205 = vmatprep.subr.mxu0 0.0
        %1206 = vmatpush1.msra.mxu0 0.0
        %1207 = vmatprep.subr.mxu0 0.0
        %1208 = vmatpush1.msra.mxu0 0.0
        %1209 = vmatprep.subr.mxu0 0.0
        %1210 = vmatpush1.msra.mxu0 0.0
        %1211 = vmatprep.subr.mxu0 0.0
        %1212 = vmatpush1.msra.mxu0 0.0
        %1213 = vmatprep.subr.mxu0 0.0
        %1214 = vmatpush1.msra.mxu0 0.0
        %1215 = vmatprep.subr.mxu0 0.0
        %1216 = vmatpush1.msra.mxu0 0.0
        %1217 = vmatprep.subr.mxu0 0.0
        %1218 = vmatpush1.msra.mxu0 0.0
        %1219 = vmatprep.subr.mxu0 0.0
        %1220 = vmatpush1.msra.mxu0 0.0
        %1221 = vmatprep.mubr.f32.mxu0 0.0
        %1222 = vmatmul.mubr.f32.gmra.mrb[0].mxu0 %v1146
        %v1223 = vpop.f32.mrb[0].mxu0
        %v1224 = vadd.f32 %v1123, %v1223
        %v1225 = vpop.f32.mrb[0].mxu0
        %v1226 = vadd.f32 %v1125, %v1225
        %1227 = vmatprep.mubr.f32.mxu0 0.0
        %1228 = vmatmul.mubr.f32.gmra.mrb[0].mxu0 %v1149
        %v1229 = vpop.f32.mrb[0].mxu0
        %v1230 = vadd.f32 %v1129, %v1229
        %v1231 = vpop.f32.mrb[0].mxu0
        %v1232 = vadd.f32 %v1131, %v1231
        %1233 = vmatprep.mubr.f32.mxu0 0.0
        %1234 = vmatmul.mubr.f32.gmra.mrb[0].mxu0 %v1152
        %v1235 = vpop.f32.mrb[0].mxu0
        %v1236 = vadd.f32 %v1135, %v1235
        %v1237 = vpop.f32.mrb[0].mxu0
        %v1238 = vadd.f32 %v1137, %v1237
        %1239 = vmatprep.mubr.f32.mxu0 0.0
        %1240 = vmatmul.mubr.f32.gmra.mrb[0].mxu0 %v1155
        %v1241 = vpop.f32.mrb[0].mxu0
        %v1242 = vadd.f32 %v1141, %v1241
        %v1243 = vpop.f32.mrb[0].mxu0
        %v1244 = vadd.f32 %v1143, %v1243
        %1245 = vdwg.mxu0
        %v1247 = vsel %vm1043, %v1030, 0
        %v1250 = vsel %vm1043, %v1031, 0
        %v1253 = vsel %vm1043, %v1032, 0
        %v1256 = vsel %vm1043, %v1033, 0
        %1258 = vmatprep.subr.mxu0 %v915
        %1259 = vmatpush1.msra.mxu0 %v913
        %1260 = vmatprep.subr.mxu0 %v921
        %1261 = vmatpush1.msra.mxu0 %v919
        %1262 = vmatprep.subr.mxu0 0.0
        %1263 = vmatpush1.msra.mxu0 0.0
        %1264 = vmatprep.subr.mxu0 0.0
        %1265 = vmatpush1.msra.mxu0 0.0
        %1266 = vmatprep.subr.mxu0 0.0
        %1267 = vmatpush1.msra.mxu0 0.0
        %1268 = vmatprep.subr.mxu0 0.0
        %1269 = vmatpush1.msra.mxu0 0.0
        %1270 = vmatprep.subr.mxu0 0.0
        %1271 = vmatpush1.msra.mxu0 0.0
        %1272 = vmatprep.subr.mxu0 0.0
        %1273 = vmatpush1.msra.mxu0 0.0
        %1274 = vmatprep.subr.mxu0 0.0
        %1275 = vmatpush1.msra.mxu0 0.0
        %1276 = vmatprep.subr.mxu0 0.0
        %1277 = vmatpush1.msra.mxu0 0.0
        %1278 = vmatprep.subr.mxu0 0.0
        %1279 = vmatpush1.msra.mxu0 0.0
        %1280 = vmatprep.subr.mxu0 0.0
        %1281 = vmatpush1.msra.mxu0 0.0
        %1282 = vmatprep.subr.mxu0 0.0
        %1283 = vmatpush1.msra.mxu0 0.0
        %1284 = vmatprep.subr.mxu0 0.0
        %1285 = vmatpush1.msra.mxu0 0.0
        %1286 = vmatprep.subr.mxu0 0.0
        %1287 = vmatpush1.msra.mxu0 0.0
        %1288 = vmatprep.subr.mxu0 0.0
        %1289 = vmatpush1.msra.mxu0 0.0
        %1290 = vmatprep.subr.mxu0 0.0
        %1291 = vmatpush1.msra.mxu0 0.0
        %1292 = vmatprep.subr.mxu0 0.0
        %1293 = vmatpush1.msra.mxu0 0.0
        %1294 = vmatprep.subr.mxu0 0.0
        %1295 = vmatpush1.msra.mxu0 0.0
        %1296 = vmatprep.subr.mxu0 0.0
        %1297 = vmatpush1.msra.mxu0 0.0
        %1298 = vmatprep.subr.mxu0 0.0
        %1299 = vmatpush1.msra.mxu0 0.0
        %1300 = vmatprep.subr.mxu0 0.0
        %1301 = vmatpush1.msra.mxu0 0.0
        %1302 = vmatprep.subr.mxu0 0.0
        %1303 = vmatpush1.msra.mxu0 0.0
        %1304 = vmatprep.subr.mxu0 0.0
        %1305 = vmatpush1.msra.mxu0 0.0
        %1306 = vmatprep.subr.mxu0 0.0
        %1307 = vmatpush1.msra.mxu0 0.0
        %1308 = vmatprep.subr.mxu0 0.0
        %1309 = vmatpush1.msra.mxu0 0.0
        %1310 = vmatprep.subr.mxu0 0.0
        %1311 = vmatpush1.msra.mxu0 0.0
        %1312 = vmatprep.subr.mxu0 0.0
        %1313 = vmatpush1.msra.mxu0 0.0
        %1314 = vmatprep.subr.mxu0 0.0
        %1315 = vmatpush1.msra.mxu0 0.0
        %1316 = vmatprep.subr.mxu0 0.0
        %1317 = vmatpush1.msra.mxu0 0.0
        %1318 = vmatprep.subr.mxu0 0.0
        %1319 = vmatpush1.msra.mxu0 0.0
        %1320 = vmatprep.subr.mxu0 0.0
        %1321 = vmatpush1.msra.mxu0 0.0
        %1322 = vmatprep.mubr.f32.mxu0 0.0
        %1323 = vmatmul.mubr.f32.gmra.mrb[0].mxu0 %v1247
        %v1324 = vpop.f32.mrb[0].mxu0
        %v1325 = vadd.f32 0.0, %v1324
        %v1326 = vpop.f32.mrb[0].mxu0
        %v1327 = vadd.f32 0.0, %v1326
        %1328 = vmatprep.mubr.f32.mxu0 0.0
        %1329 = vmatmul.mubr.f32.gmra.mrb[0].mxu0 %v1250
        %v1330 = vpop.f32.mrb[0].mxu0
        %v1331 = vadd.f32 0.0, %v1330
        %v1332 = vpop.f32.mrb[0].mxu0
        %v1333 = vadd.f32 0.0, %v1332
        %1334 = vmatprep.mubr.f32.mxu0 0.0
        %1335 = vmatmul.mubr.f32.gmra.mrb[0].mxu0 %v1253
        %v1336 = vpop.f32.mrb[0].mxu0
        %v1337 = vadd.f32 0.0, %v1336
        %v1338 = vpop.f32.mrb[0].mxu0
        %v1339 = vadd.f32 0.0, %v1338
        %1340 = vmatprep.mubr.f32.mxu0 0.0
        %1341 = vmatmul.mubr.f32.gmra.mrb[0].mxu0 %v1256
        %v1342 = vpop.f32.mrb[0].mxu0
        %v1343 = vadd.f32 0.0, %v1342
        %v1344 = vpop.f32.mrb[0].mxu0
        %v1345 = vadd.f32 0.0, %v1344
        %1346 = vdwg.mxu0
        %v1347 = vadd.f32 %v1224, %v1325
        %v1348 = vadd.f32 %v1226, %v1327
        %v1349 = vadd.f32 %v1230, %v1331
        %v1350 = vadd.f32 %v1232, %v1333
        %v1351 = vadd.f32 %v1236, %v1337
        %v1352 = vadd.f32 %v1238, %v1339
        %v1353 = vadd.f32 %v1242, %v1343
        %v1354 = vadd.f32 %v1244, %v1345
        %v1356 = vsel %vm1043, %v1039, 0
        %v1359 = vsel %vm1043, %v1040, 0
        %v1362 = vsel %vm1043, %v1041, 0
        %v1365 = vsel %vm1043, %v1042, 0
        %1367 = vmatprep.subr.mxu0 %v992
        %1368 = vmatpush1.msra.mxu0 %v990
        %1369 = vmatprep.subr.mxu0 %v998
        %1370 = vmatpush1.msra.mxu0 %v996
        %1371 = vmatprep.subr.mxu0 0.0
        %1372 = vmatpush1.msra.mxu0 0.0
        %1373 = vmatprep.subr.mxu0 0.0
        %1374 = vmatpush1.msra.mxu0 0.0
        %1375 = vmatprep.subr.mxu0 0.0
        %1376 = vmatpush1.msra.mxu0 0.0
        %1377 = vmatprep.subr.mxu0 0.0
        %1378 = vmatpush1.msra.mxu0 0.0
        %1379 = vmatprep.subr.mxu0 0.0
        %1380 = vmatpush1.msra.mxu0 0.0
        %1381 = vmatprep.subr.mxu0 0.0
        %1382 = vmatpush1.msra.mxu0 0.0
        %1383 = vmatprep.subr.mxu0 0.0
        %1384 = vmatpush1.msra.mxu0 0.0
        %1385 = vmatprep.subr.mxu0 0.0
        %1386 = vmatpush1.msra.mxu0 0.0
        %1387 = vmatprep.subr.mxu0 0.0
        %1388 = vmatpush1.msra.mxu0 0.0
        %1389 = vmatprep.subr.mxu0 0.0
        %1390 = vmatpush1.msra.mxu0 0.0
        %1391 = vmatprep.subr.mxu0 0.0
        %1392 = vmatpush1.msra.mxu0 0.0
        %1393 = vmatprep.subr.mxu0 0.0
        %1394 = vmatpush1.msra.mxu0 0.0
        %1395 = vmatprep.subr.mxu0 0.0
        %1396 = vmatpush1.msra.mxu0 0.0
        %1397 = vmatprep.subr.mxu0 0.0
        %1398 = vmatpush1.msra.mxu0 0.0
        %1399 = vmatprep.subr.mxu0 0.0
        %1400 = vmatpush1.msra.mxu0 0.0
        %1401 = vmatprep.subr.mxu0 0.0
        %1402 = vmatpush1.msra.mxu0 0.0
        %1403 = vmatprep.subr.mxu0 0.0
        %1404 = vmatpush1.msra.mxu0 0.0
        %1405 = vmatprep.subr.mxu0 0.0
        %1406 = vmatpush1.msra.mxu0 0.0
        %1407 = vmatprep.subr.mxu0 0.0
        %1408 = vmatpush1.msra.mxu0 0.0
        %1409 = vmatprep.subr.mxu0 0.0
        %1410 = vmatpush1.msra.mxu0 0.0
        %1411 = vmatprep.subr.mxu0 0.0
        %1412 = vmatpush1.msra.mxu0 0.0
        %1413 = vmatprep.subr.mxu0 0.0
        %1414 = vmatpush1.msra.mxu0 0.0
        %1415 = vmatprep.subr.mxu0 0.0
        %1416 = vmatpush1.msra.mxu0 0.0
        %1417 = vmatprep.subr.mxu0 0.0
        %1418 = vmatpush1.msra.mxu0 0.0
        %1419 = vmatprep.subr.mxu0 0.0
        %1420 = vmatpush1.msra.mxu0 0.0
        %1421 = vmatprep.subr.mxu0 0.0
        %1422 = vmatpush1.msra.mxu0 0.0
        %1423 = vmatprep.subr.mxu0 0.0
        %1424 = vmatpush1.msra.mxu0 0.0
        %1425 = vmatprep.subr.mxu0 0.0
        %1426 = vmatpush1.msra.mxu0 0.0
        %1427 = vmatprep.subr.mxu0 0.0
        %1428 = vmatpush1.msra.mxu0 0.0
        %1429 = vmatprep.subr.mxu0 0.0
        %1430 = vmatpush1.msra.mxu0 0.0
        %1431 = vmatprep.mubr.f32.mxu0 0.0
        %1432 = vmatmul.mubr.f32.gmra.mrb[0].mxu0 %v1356
        %v1433 = vpop.f32.mrb[0].mxu0
        %v1434 = vadd.f32 0.0, %v1433
        %v1435 = vpop.f32.mrb[0].mxu0
        %v1436 = vadd.f32 0.0, %v1435
        %1437 = vmatprep.mubr.f32.mxu0 0.0
        %1438 = vmatmul.mubr.f32.gmra.mrb[0].mxu0 %v1359
        %v1439 = vpop.f32.mrb[0].mxu0
        %v1440 = vadd.f32 0.0, %v1439
        %v1441 = vpop.f32.mrb[0].mxu0
        %v1442 = vadd.f32 0.0, %v1441
        %1443 = vmatprep.mubr.f32.mxu0 0.0
        %1444 = vmatmul.mubr.f32.gmra.mrb[0].mxu0 %v1362
        %v1445 = vpop.f32.mrb[0].mxu0
        %v1446 = vadd.f32 0.0, %v1445
        %v1447 = vpop.f32.mrb[0].mxu0
        %v1448 = vadd.f32 0.0, %v1447
        %1449 = vmatprep.mubr.f32.mxu0 0.0
        %1450 = vmatmul.mubr.f32.gmra.mrb[0].mxu0 %v1365
        %v1451 = vpop.f32.mrb[0].mxu0
        %v1452 = vadd.f32 0.0, %v1451
        %v1453 = vpop.f32.mrb[0].mxu0
        %v1454 = vadd.f32 0.0, %v1453
        %1455 = vdwg.mxu0
        %v1456 = vadd.f32 %v1347, %v1434
        %v1457 = vadd.f32 %v1348, %v1436
        %v1458 = vadd.f32 %v1349, %v1440
        %v1459 = vadd.f32 %v1350, %v1442
        %v1460 = vadd.f32 %v1351, %v1446
        %v1461 = vadd.f32 %v1352, %v1448
        %v1462 = vadd.f32 %v1353, %v1452
        %v1463 = vadd.f32 %v1354, %v1454
        %v1465 = vlaneseq
        %v1466 = vshrl.u32 %v1465, 7
        %v1467 = vsub.s32 0, %v1466
        %v1468 = vrot.slane %v691, %v1467
        %v1469 = vlaneseq
        %v1470 = vshrl.u32 %v1469, 7
        %v1471 = vsub.s32 1, %v1470
        %v1472 = vrot.slane %v691, %v1471
        %v1475 = vadd.f32 %v1456, %v1468
        %v1476 = vadd.f32 %v1457, %v1472
        %v1477 = vadd.f32 %v1458, %v1468
        %v1478 = vadd.f32 %v1459, %v1472
        %v1479 = vadd.f32 %v1460, %v1468
        %v1480 = vadd.f32 %v1461, %v1472
        %v1481 = vadd.f32 %v1462, %v1468
        %v1482 = vadd.f32 %v1463, %v1472
        %v1483 = vmax.f32 %v1475, 0.0
        %v1484 = vmax.f32 %v1476, 0.0
        %v1485 = vmax.f32 %v1477, 0.0
        %v1486 = vmax.f32 %v1478, 0.0
        %v1487 = vmax.f32 %v1479, 0.0
        %v1488 = vmax.f32 %v1480, 0.0
        %v1489 = vmax.f32 %v1481, 0.0
        %v1490 = vmax.f32 %v1482, 0.0
        %v1491 = vld [vmem:[#allocation7] sm:$0xff]
        %v1492 = vld [vmem:[#allocation7 + $0x8] sm:$0xff]
        %v1493 = vld [vmem:[#allocation7 + $0x10] sm:$0xff]
        %v1494 = vld [vmem:[#allocation7 + $0x18] sm:$0xff]
        %v1495 = vld [vmem:[#allocation7 + $0x20] sm:$0xff]
        %v1496 = vld [vmem:[#allocation7 + $0x28] sm:$0xff]
        %v1497 = vld [vmem:[#allocation7 + $0x30] sm:$0xff]
        %v1498 = vld [vmem:[#allocation7 + $0x38] sm:$0xff]
        %v1499 = vld [vmem:[#allocation7 + $0x40] sm:$0xff]
        %v1500 = vld [vmem:[#allocation7 + $0x48] sm:$0xff]
        %v1501 = vld [vmem:[#allocation7 + $0x50] sm:$0xff]
        %v1502 = vld [vmem:[#allocation7 + $0x58] sm:$0xff]
        %v1503 = vld [vmem:[#allocation7 + $0x60] sm:$0xff]
        %v1504 = vld [vmem:[#allocation7 + $0x68] sm:$0xff]
        %v1505 = vld [vmem:[#allocation7 + $0x70] sm:$0xff]
        %v1506 = vld [vmem:[#allocation7 + $0x78] sm:$0xff]
        %v1507 = vld [vmem:[#allocation7 + $0x80] sm:$0xff]
        %v1508 = vld [vmem:[#allocation7 + $0x88] sm:$0xff]
        %v1509 = vld [vmem:[#allocation7 + $0x90] sm:$0xff]
        %v1510 = vld [vmem:[#allocation7 + $0x98] sm:$0xff]
        %v1511 = vld [vmem:[#allocation7 + $0xa0] sm:$0xff]
        %v1512 = vld [vmem:[#allocation7 + $0xa8] sm:$0xff]
        %v1513 = vld [vmem:[#allocation7 + $0xb0] sm:$0xff]
        %v1514 = vld [vmem:[#allocation7 + $0xb8] sm:$0xff]
        %v1515 = vld [vmem:[#allocation7 + $0xc0] sm:$0xff]
        %v1516 = vld [vmem:[#allocation7 + $0xc8] sm:$0xff]
        %v1517 = vld [vmem:[#allocation7 + $0xd0] sm:$0xff]
        %v1518 = vld [vmem:[#allocation7 + $0xd8] sm:$0xff]
        %v1519 = vld [vmem:[#allocation7 + $0xe0] sm:$0xff]
        %v1520 = vld [vmem:[#allocation7 + $0xe8] sm:$0xff]
        %v1521 = vld [vmem:[#allocation7 + $0xf0] sm:$0xff]
        %v1522 = vld [vmem:[#allocation7 + $0xf8] sm:$0xff]
        %v1523 = vld [vmem:[#allocation7 + $0x100] sm:$0xff]
        %v1524 = vld [vmem:[#allocation7 + $0x108] sm:$0xff]
        %v1525 = vld [vmem:[#allocation7 + $0x110] sm:$0xff]
        %v1526 = vld [vmem:[#allocation7 + $0x118] sm:$0xff]
        %v1527 = vld [vmem:[#allocation7 + $0x120] sm:$0xff]
        %v1528 = vld [vmem:[#allocation7 + $0x128] sm:$0xff]
        %v1529 = vld [vmem:[#allocation7 + $0x130] sm:$0xff]
        %v1530 = vld [vmem:[#allocation7 + $0x138] sm:$0xff]
        %v1531 = vld [vmem:[#allocation7 + $0x140] sm:$0xff]
        %v1532 = vld [vmem:[#allocation7 + $0x148] sm:$0xff]
        %v1533 = vld [vmem:[#allocation7 + $0x150] sm:$0xff]
        %v1534 = vld [vmem:[#allocation7 + $0x158] sm:$0xff]
        %v1535 = vld [vmem:[#allocation7 + $0x160] sm:$0xff]
        %v1536 = vld [vmem:[#allocation7 + $0x168] sm:$0xff]
        %v1537 = vld [vmem:[#allocation7 + $0x170] sm:$0xff]
        %v1538 = vld [vmem:[#allocation7 + $0x178] sm:$0xff]
        %v1539 = vld [vmem:[#allocation7 + $0x180] sm:$0xff]
        %v1540 = vld [vmem:[#allocation7 + $0x188] sm:$0xff]
        %v1541 = vld [vmem:[#allocation7 + $0x190] sm:$0xff]
        %v1542 = vld [vmem:[#allocation7 + $0x198] sm:$0xff]
        %v1543 = vld [vmem:[#allocation7 + $0x1a0] sm:$0xff]
        %v1544 = vld [vmem:[#allocation7 + $0x1a8] sm:$0xff]
        %v1545 = vld [vmem:[#allocation7 + $0x1b0] sm:$0xff]
        %v1546 = vld [vmem:[#allocation7 + $0x1b8] sm:$0xff]
        %v1547 = vld [vmem:[#allocation7 + $0x1c0] sm:$0xff]
        %v1548 = vld [vmem:[#allocation7 + $0x1c8] sm:$0xff]
        %v1549 = vld [vmem:[#allocation7 + $0x1d0] sm:$0xff]
        %v1550 = vld [vmem:[#allocation7 + $0x1d8] sm:$0xff]
        %v1551 = vld [vmem:[#allocation7 + $0x1e0] sm:$0xff]
        %v1552 = vld [vmem:[#allocation7 + $0x1e8] sm:$0xff]
        %v1553 = vld [vmem:[#allocation7 + $0x1f0] sm:$0xff]
        %v1554 = vld [vmem:[#allocation7 + $0x1f8] sm:$0xff]
        %v1555 = vld [vmem:[#allocation7 + $0x200] sm:$0xff]
        %v1556 = vld [vmem:[#allocation7 + $0x208] sm:$0xff]
        %v1557 = vld [vmem:[#allocation7 + $0x210] sm:$0xff]
        %v1558 = vld [vmem:[#allocation7 + $0x218] sm:$0xff]
        %v1559 = vld [vmem:[#allocation7 + $0x220] sm:$0xff]
        %v1560 = vld [vmem:[#allocation7 + $0x228] sm:$0xff]
        %v1561 = vld [vmem:[#allocation7 + $0x230] sm:$0xff]
        %v1562 = vld [vmem:[#allocation7 + $0x238] sm:$0xff]
        %v1563 = vld [vmem:[#allocation7 + $0x240] sm:$0xff]
        %v1564 = vld [vmem:[#allocation7 + $0x248] sm:$0xff]
        %v1565 = vld [vmem:[#allocation7 + $0x250] sm:$0xff]
        %v1566 = vld [vmem:[#allocation7 + $0x258] sm:$0xff]
        %v1567 = vld [vmem:[#allocation7 + $0x260] sm:$0xff]
        %v1568 = vld [vmem:[#allocation7 + $0x268] sm:$0xff]
        %v1569 = vld [vmem:[#allocation7 + $0x270] sm:$0xff]
        %v1570 = vld [vmem:[#allocation7 + $0x278] sm:$0xff]
        %v1571 = vld [vmem:[#allocation7 + $0x280] sm:$0xff]
        %v1572 = vld [vmem:[#allocation7 + $0x288] sm:$0xff]
        %v1573 = vld [vmem:[#allocation7 + $0x290] sm:$0xff]
        %v1574 = vld [vmem:[#allocation7 + $0x298] sm:$0xff]
        %v1575 = vld [vmem:[#allocation7 + $0x2a0] sm:$0xff]
        %v1576 = vld [vmem:[#allocation7 + $0x2a8] sm:$0xff]
        %v1577 = vld [vmem:[#allocation7 + $0x2b0] sm:$0xff]
        %v1578 = vld [vmem:[#allocation7 + $0x2b8] sm:$0xff]
        %v1579 = vld [vmem:[#allocation7 + $0x2c0] sm:$0xff]
        %v1580 = vld [vmem:[#allocation7 + $0x2c8] sm:$0xff]
        %v1581 = vld [vmem:[#allocation7 + $0x2d0] sm:$0xff]
        %v1582 = vld [vmem:[#allocation7 + $0x2d8] sm:$0xff]
        %v1583 = vld [vmem:[#allocation7 + $0x2e0] sm:$0xff]
        %v1584 = vld [vmem:[#allocation7 + $0x2e8] sm:$0xff]
        %v1585 = vld [vmem:[#allocation7 + $0x2f0] sm:$0xff]
        %v1586 = vld [vmem:[#allocation7 + $0x2f8] sm:$0xff]
        %v1587 = vld [vmem:[#allocation7 + $0x300] sm:$0xff]
        %v1588 = vld [vmem:[#allocation7 + $0x308] sm:$0xff]
        %v1589 = vld [vmem:[#allocation7 + $0x310] sm:$0xff]
        %v1590 = vld [vmem:[#allocation7 + $0x318] sm:$0xff]
        %v1591 = vld [vmem:[#allocation7 + $0x320] sm:$0xff]
        %v1592 = vld [vmem:[#allocation7 + $0x328] sm:$0xff]
        %v1593 = vld [vmem:[#allocation7 + $0x330] sm:$0xff]
        %v1594 = vld [vmem:[#allocation7 + $0x338] sm:$0xff]
        %v1595 = vld [vmem:[#allocation7 + $0x340] sm:$0xff]
        %v1596 = vld [vmem:[#allocation7 + $0x348] sm:$0xff]
        %v1597 = vld [vmem:[#allocation7 + $0x350] sm:$0xff]
        %v1598 = vld [vmem:[#allocation7 + $0x358] sm:$0xff]
        %v1599 = vld [vmem:[#allocation7 + $0x360] sm:$0xff]
        %v1600 = vld [vmem:[#allocation7 + $0x368] sm:$0xff]
        %v1601 = vld [vmem:[#allocation7 + $0x370] sm:$0xff]
        %v1602 = vld [vmem:[#allocation7 + $0x378] sm:$0xff]
        %v1603 = vld [vmem:[#allocation7 + $0x380] sm:$0xff]
        %v1604 = vld [vmem:[#allocation7 + $0x388] sm:$0xff]
        %v1605 = vld [vmem:[#allocation7 + $0x390] sm:$0xff]
        %v1606 = vld [vmem:[#allocation7 + $0x398] sm:$0xff]
        %v1607 = vld [vmem:[#allocation7 + $0x3a0] sm:$0xff]
        %v1608 = vld [vmem:[#allocation7 + $0x3a8] sm:$0xff]
        %v1609 = vld [vmem:[#allocation7 + $0x3b0] sm:$0xff]
        %v1610 = vld [vmem:[#allocation7 + $0x3b8] sm:$0xff]
        %v1611 = vld [vmem:[#allocation7 + $0x3c0] sm:$0xff]
        %v1612 = vld [vmem:[#allocation7 + $0x3c8] sm:$0xff]
        %v1613 = vld [vmem:[#allocation7 + $0x3d0] sm:$0xff]
        %v1614 = vld [vmem:[#allocation7 + $0x3d8] sm:$0xff]
        %v1615 = vld [vmem:[#allocation7 + $0x3e0] sm:$0xff]
        %v1616 = vld [vmem:[#allocation7 + $0x3e8] sm:$0xff]
        %v1617 = vld [vmem:[#allocation7 + $0x3f0] sm:$0xff]
        %v1618 = vld [vmem:[#allocation7 + $0x3f8] sm:$0xff]
        %v1619 = vld [vmem:[%s5] sm:$0xff]
        %v1620 = vld [vmem:[%s5 + $0x8] sm:$0xff]
        %v1621 = vld [vmem:[%s5 + $0x10] sm:$0xff]
        %v1622 = vld [vmem:[%s5 + $0x18] sm:$0xff]
        %v1623 = vld [vmem:[%s5 + $0x20] sm:$0xff]
        %v1624 = vld [vmem:[%s5 + $0x28] sm:$0xff]
        %v1625 = vld [vmem:[%s5 + $0x30] sm:$0xff]
        %v1626 = vld [vmem:[%s5 + $0x38] sm:$0xff]
        %v1627 = vld [vmem:[%s5 + $0x40] sm:$0xff]
        %v1628 = vld [vmem:[%s5 + $0x48] sm:$0xff]
        %v1629 = vld [vmem:[%s5 + $0x50] sm:$0xff]
        %v1630 = vld [vmem:[%s5 + $0x58] sm:$0xff]
        %v1631 = vld [vmem:[%s5 + $0x60] sm:$0xff]
        %v1632 = vld [vmem:[%s5 + $0x68] sm:$0xff]
        %v1633 = vld [vmem:[%s5 + $0x70] sm:$0xff]
        %v1634 = vld [vmem:[%s5 + $0x78] sm:$0xff]
        %v1635 = vld [vmem:[%s5 + $0x80] sm:$0xff]
        %v1636 = vld [vmem:[%s5 + $0x88] sm:$0xff]
        %v1637 = vld [vmem:[%s5 + $0x90] sm:$0xff]
        %v1638 = vld [vmem:[%s5 + $0x98] sm:$0xff]
        %v1639 = vld [vmem:[%s5 + $0xa0] sm:$0xff]
        %v1640 = vld [vmem:[%s5 + $0xa8] sm:$0xff]
        %v1641 = vld [vmem:[%s5 + $0xb0] sm:$0xff]
        %v1642 = vld [vmem:[%s5 + $0xb8] sm:$0xff]
        %v1643 = vld [vmem:[%s5 + $0xc0] sm:$0xff]
        %v1644 = vld [vmem:[%s5 + $0xc8] sm:$0xff]
        %v1645 = vld [vmem:[%s5 + $0xd0] sm:$0xff]
        %v1646 = vld [vmem:[%s5 + $0xd8] sm:$0xff]
        %v1647 = vld [vmem:[%s5 + $0xe0] sm:$0xff]
        %v1648 = vld [vmem:[%s5 + $0xe8] sm:$0xff]
        %v1649 = vld [vmem:[%s5 + $0xf0] sm:$0xff]
        %v1650 = vld [vmem:[%s5 + $0xf8] sm:$0xff]
        %v1651 = vld [vmem:[%s5 + $0x100] sm:$0xff]
        %v1652 = vld [vmem:[%s5 + $0x108] sm:$0xff]
        %v1653 = vld [vmem:[%s5 + $0x110] sm:$0xff]
        %v1654 = vld [vmem:[%s5 + $0x118] sm:$0xff]
        %v1655 = vld [vmem:[%s5 + $0x120] sm:$0xff]
        %v1656 = vld [vmem:[%s5 + $0x128] sm:$0xff]
        %v1657 = vld [vmem:[%s5 + $0x130] sm:$0xff]
        %v1658 = vld [vmem:[%s5 + $0x138] sm:$0xff]
        %v1659 = vld [vmem:[%s5 + $0x140] sm:$0xff]
        %v1660 = vld [vmem:[%s5 + $0x148] sm:$0xff]
        %v1661 = vld [vmem:[%s5 + $0x150] sm:$0xff]
        %v1662 = vld [vmem:[%s5 + $0x158] sm:$0xff]
        %v1663 = vld [vmem:[%s5 + $0x160] sm:$0xff]
        %v1664 = vld [vmem:[%s5 + $0x168] sm:$0xff]
        %v1665 = vld [vmem:[%s5 + $0x170] sm:$0xff]
        %v1666 = vld [vmem:[%s5 + $0x178] sm:$0xff]
        %v1667 = vld [vmem:[%s5 + $0x180] sm:$0xff]
        %v1668 = vld [vmem:[%s5 + $0x188] sm:$0xff]
        %v1669 = vld [vmem:[%s5 + $0x190] sm:$0xff]
        %v1670 = vld [vmem:[%s5 + $0x198] sm:$0xff]
        %v1671 = vld [vmem:[%s5 + $0x1a0] sm:$0xff]
        %v1672 = vld [vmem:[%s5 + $0x1a8] sm:$0xff]
        %v1673 = vld [vmem:[%s5 + $0x1b0] sm:$0xff]
        %v1674 = vld [vmem:[%s5 + $0x1b8] sm:$0xff]
        %v1675 = vld [vmem:[%s5 + $0x1c0] sm:$0xff]
        %v1676 = vld [vmem:[%s5 + $0x1c8] sm:$0xff]
        %v1677 = vld [vmem:[%s5 + $0x1d0] sm:$0xff]
        %v1678 = vld [vmem:[%s5 + $0x1d8] sm:$0xff]
        %v1679 = vld [vmem:[%s5 + $0x1e0] sm:$0xff]
        %v1680 = vld [vmem:[%s5 + $0x1e8] sm:$0xff]
        %v1681 = vld [vmem:[%s5 + $0x1f0] sm:$0xff]
        %v1682 = vld [vmem:[%s5 + $0x1f8] sm:$0xff]
        %v1683 = vld [vmem:[%s5 + $0x200] sm:$0xff]
        %v1684 = vld [vmem:[%s5 + $0x208] sm:$0xff]
        %v1685 = vld [vmem:[%s5 + $0x210] sm:$0xff]
        %v1686 = vld [vmem:[%s5 + $0x218] sm:$0xff]
        %v1687 = vld [vmem:[%s5 + $0x220] sm:$0xff]
        %v1688 = vld [vmem:[%s5 + $0x228] sm:$0xff]
        %v1689 = vld [vmem:[%s5 + $0x230] sm:$0xff]
        %v1690 = vld [vmem:[%s5 + $0x238] sm:$0xff]
        %v1691 = vld [vmem:[%s5 + $0x240] sm:$0xff]
        %v1692 = vld [vmem:[%s5 + $0x248] sm:$0xff]
        %v1693 = vld [vmem:[%s5 + $0x250] sm:$0xff]
        %v1694 = vld [vmem:[%s5 + $0x258] sm:$0xff]
        %v1695 = vld [vmem:[%s5 + $0x260] sm:$0xff]
        %v1696 = vld [vmem:[%s5 + $0x268] sm:$0xff]
        %v1697 = vld [vmem:[%s5 + $0x270] sm:$0xff]
        %v1698 = vld [vmem:[%s5 + $0x278] sm:$0xff]
        %v1699 = vld [vmem:[%s5 + $0x280] sm:$0xff]
        %v1700 = vld [vmem:[%s5 + $0x288] sm:$0xff]
        %v1701 = vld [vmem:[%s5 + $0x290] sm:$0xff]
        %v1702 = vld [vmem:[%s5 + $0x298] sm:$0xff]
        %v1703 = vld [vmem:[%s5 + $0x2a0] sm:$0xff]
        %v1704 = vld [vmem:[%s5 + $0x2a8] sm:$0xff]
        %v1705 = vld [vmem:[%s5 + $0x2b0] sm:$0xff]
        %v1706 = vld [vmem:[%s5 + $0x2b8] sm:$0xff]
        %v1707 = vld [vmem:[%s5 + $0x2c0] sm:$0xff]
        %v1708 = vld [vmem:[%s5 + $0x2c8] sm:$0xff]
        %v1709 = vld [vmem:[%s5 + $0x2d0] sm:$0xff]
        %v1710 = vld [vmem:[%s5 + $0x2d8] sm:$0xff]
        %v1711 = vld [vmem:[%s5 + $0x2e0] sm:$0xff]
        %v1712 = vld [vmem:[%s5 + $0x2e8] sm:$0xff]
        %v1713 = vld [vmem:[%s5 + $0x2f0] sm:$0xff]
        %v1714 = vld [vmem:[%s5 + $0x2f8] sm:$0xff]
        %v1715 = vld [vmem:[%s5 + $0x300] sm:$0xff]
        %v1716 = vld [vmem:[%s5 + $0x308] sm:$0xff]
        %v1717 = vld [vmem:[%s5 + $0x310] sm:$0xff]
        %v1718 = vld [vmem:[%s5 + $0x318] sm:$0xff]
        %v1719 = vld [vmem:[%s5 + $0x320] sm:$0xff]
        %v1720 = vld [vmem:[%s5 + $0x328] sm:$0xff]
        %v1721 = vld [vmem:[%s5 + $0x330] sm:$0xff]
        %v1722 = vld [vmem:[%s5 + $0x338] sm:$0xff]
        %v1723 = vld [vmem:[%s5 + $0x340] sm:$0xff]
        %v1724 = vld [vmem:[%s5 + $0x348] sm:$0xff]
        %v1725 = vld [vmem:[%s5 + $0x350] sm:$0xff]
        %v1726 = vld [vmem:[%s5 + $0x358] sm:$0xff]
        %v1727 = vld [vmem:[%s5 + $0x360] sm:$0xff]
        %v1728 = vld [vmem:[%s5 + $0x368] sm:$0xff]
        %v1729 = vld [vmem:[%s5 + $0x370] sm:$0xff]
        %v1730 = vld [vmem:[%s5 + $0x378] sm:$0xff]
        %v1731 = vld [vmem:[%s5 + $0x380] sm:$0xff]
        %v1732 = vld [vmem:[%s5 + $0x388] sm:$0xff]
        %v1733 = vld [vmem:[%s5 + $0x390] sm:$0xff]
        %v1734 = vld [vmem:[%s5 + $0x398] sm:$0xff]
        %v1735 = vld [vmem:[%s5 + $0x3a0] sm:$0xff]
        %v1736 = vld [vmem:[%s5 + $0x3a8] sm:$0xff]
        %v1737 = vld [vmem:[%s5 + $0x3b0] sm:$0xff]
        %v1738 = vld [vmem:[%s5 + $0x3b8] sm:$0xff]
        %v1739 = vld [vmem:[%s5 + $0x3c0] sm:$0xff]
        %v1740 = vld [vmem:[%s5 + $0x3c8] sm:$0xff]
        %v1741 = vld [vmem:[%s5 + $0x3d0] sm:$0xff]
        %v1742 = vld [vmem:[%s5 + $0x3d8] sm:$0xff]
        %v1743 = vld [vmem:[%s5 + $0x3e0] sm:$0xff]
        %v1744 = vld [vmem:[%s5 + $0x3e8] sm:$0xff]
        %v1745 = vld [vmem:[%s5 + $0x3f0] sm:$0xff]
        %v1746 = vld [vmem:[%s5 + $0x3f8] sm:$0xff]
        %v1747 = vld [vmem:[%s6] sm:$0x3]
        %1748 = vmatprep.subr.mxu0 %v1492
        %1749 = vmatpush1.msra.mxu0 %v1491
        %1750 = vmatprep.subr.mxu0 %v1496
        %1751 = vmatpush1.msra.mxu0 %v1495
        %1752 = vmatprep.subr.mxu0 %v1500
        %1753 = vmatpush1.msra.mxu0 %v1499
        %1754 = vmatprep.subr.mxu0 %v1504
        %1755 = vmatpush1.msra.mxu0 %v1503
        %1756 = vmatprep.subr.mxu0 %v1508
        %1757 = vmatpush1.msra.mxu0 %v1507
        %1758 = vmatprep.subr.mxu0 %v1512
        %1759 = vmatpush1.msra.mxu0 %v1511
        %1760 = vmatprep.subr.mxu0 %v1516
        %1761 = vmatpush1.msra.mxu0 %v1515
        %1762 = vmatprep.subr.mxu0 %v1520
        %1763 = vmatpush1.msra.mxu0 %v1519
        %1764 = vmatprep.subr.mxu0 %v1524
        %1765 = vmatpush1.msra.mxu0 %v1523
        %1766 = vmatprep.subr.mxu0 %v1528
        %1767 = vmatpush1.msra.mxu0 %v1527
        %1768 = vmatprep.subr.mxu0 %v1532
        %1769 = vmatpush1.msra.mxu0 %v1531
        %1770 = vmatprep.subr.mxu0 %v1536
        %1771 = vmatpush1.msra.mxu0 %v1535
        %1772 = vmatprep.subr.mxu0 %v1540
        %1773 = vmatpush1.msra.mxu0 %v1539
        %1774 = vmatprep.subr.mxu0 %v1544
        %1775 = vmatpush1.msra.mxu0 %v1543
        %1776 = vmatprep.subr.mxu0 %v1548
        %1777 = vmatpush1.msra.mxu0 %v1547
        %1778 = vmatprep.subr.mxu0 %v1552
        %1779 = vmatpush1.msra.mxu0 %v1551
        %1780 = vmatprep.subr.mxu0 %v1556
        %1781 = vmatpush1.msra.mxu0 %v1555
        %1782 = vmatprep.subr.mxu0 %v1560
        %1783 = vmatpush1.msra.mxu0 %v1559
        %1784 = vmatprep.subr.mxu0 %v1564
        %1785 = vmatpush1.msra.mxu0 %v1563
        %1786 = vmatprep.subr.mxu0 %v1568
        %1787 = vmatpush1.msra.mxu0 %v1567
        %1788 = vmatprep.subr.mxu0 %v1572
        %1789 = vmatpush1.msra.mxu0 %v1571
        %1790 = vmatprep.subr.mxu0 %v1576
        %1791 = vmatpush1.msra.mxu0 %v1575
        %1792 = vmatprep.subr.mxu0 %v1580
        %1793 = vmatpush1.msra.mxu0 %v1579
        %1794 = vmatprep.subr.mxu0 %v1584
        %1795 = vmatpush1.msra.mxu0 %v1583
        %1796 = vmatprep.subr.mxu0 %v1588
        %1797 = vmatpush1.msra.mxu0 %v1587
        %1798 = vmatprep.subr.mxu0 %v1592
        %1799 = vmatpush1.msra.mxu0 %v1591
        %1800 = vmatprep.subr.mxu0 %v1596
        %1801 = vmatpush1.msra.mxu0 %v1595
        %1802 = vmatprep.subr.mxu0 %v1600
        %1803 = vmatpush1.msra.mxu0 %v1599
        %1804 = vmatprep.subr.mxu0 %v1604
        %1805 = vmatpush1.msra.mxu0 %v1603
        %1806 = vmatprep.subr.mxu0 %v1608
        %1807 = vmatpush1.msra.mxu0 %v1607
        %1808 = vmatprep.subr.mxu0 %v1612
        %1809 = vmatpush1.msra.mxu0 %v1611
        %1810 = vmatprep.subr.mxu0 %v1616
        %1811 = vmatpush1.msra.mxu0 %v1615
        %1812 = vmatprep.mubr.f32.mxu0 %v1484
        %1813 = vmatmul.mubr.f32.gmra.mrb[0].mxu0 %v1483
        %v1814 = vpop.f32.mrb[0].mxu0
        %v1815 = vadd.f32 0.0, %v1814
        %v1816 = vpop.f32.mrb[0].mxu0
        %v1817 = vadd.f32 0.0, %v1816
        %1818 = vmatprep.mubr.f32.mxu0 %v1486
        %1819 = vmatmul.mubr.f32.gmra.mrb[0].mxu0 %v1485
        %v1820 = vpop.f32.mrb[0].mxu0
        %v1821 = vadd.f32 0.0, %v1820
        %v1822 = vpop.f32.mrb[0].mxu0
        %v1823 = vadd.f32 0.0, %v1822
        %1824 = vmatprep.mubr.f32.mxu0 %v1488
        %1825 = vmatmul.mubr.f32.gmra.mrb[0].mxu0 %v1487
        %v1826 = vpop.f32.mrb[0].mxu0
        %v1827 = vadd.f32 0.0, %v1826
        %v1828 = vpop.f32.mrb[0].mxu0
        %v1829 = vadd.f32 0.0, %v1828
        %1830 = vmatprep.mubr.f32.mxu0 %v1490
        %1831 = vmatmul.mubr.f32.gmra.mrb[0].mxu0 %v1489
        %v1832 = vpop.f32.mrb[0].mxu0
        %v1833 = vadd.f32 0.0, %v1832
        %v1834 = vpop.f32.mrb[0].mxu0
        %v1835 = vadd.f32 0.0, %v1834
        %1836 = vdwg.mxu0
        %1837 = vmatprep.subr.mxu0 %v1494
        %1838 = vmatpush1.msra.mxu0 %v1493
        %1839 = vmatprep.subr.mxu0 %v1498
        %1840 = vmatpush1.msra.mxu0 %v1497
        %1841 = vmatprep.subr.mxu0 %v1502
        %1842 = vmatpush1.msra.mxu0 %v1501
        %1843 = vmatprep.subr.mxu0 %v1506
        %1844 = vmatpush1.msra.mxu0 %v1505
        %1845 = vmatprep.subr.mxu0 %v1510
        %1846 = vmatpush1.msra.mxu0 %v1509
        %1847 = vmatprep.subr.mxu0 %v1514
        %1848 = vmatpush1.msra.mxu0 %v1513
        %1849 = vmatprep.subr.mxu0 %v1518
        %1850 = vmatpush1.msra.mxu0 %v1517
        %1851 = vmatprep.subr.mxu0 %v1522
        %1852 = vmatpush1.msra.mxu0 %v1521
        %1853 = vmatprep.subr.mxu0 %v1526
        %1854 = vmatpush1.msra.mxu0 %v1525
        %1855 = vmatprep.subr.mxu0 %v1530
        %1856 = vmatpush1.msra.mxu0 %v1529
        %1857 = vmatprep.subr.mxu0 %v1534
        %1858 = vmatpush1.msra.mxu0 %v1533
        %1859 = vmatprep.subr.mxu0 %v1538
        %1860 = vmatpush1.msra.mxu0 %v1537
        %1861 = vmatprep.subr.mxu0 %v1542
        %1862 = vmatpush1.msra.mxu0 %v1541
        %1863 = vmatprep.subr.mxu0 %v1546
        %1864 = vmatpush1.msra.mxu0 %v1545
        %1865 = vmatprep.subr.mxu0 %v1550
        %1866 = vmatpush1.msra.mxu0 %v1549
        %1867 = vmatprep.subr.mxu0 %v1554
        %1868 = vmatpush1.msra.mxu0 %v1553
        %1869 = vmatprep.subr.mxu0 %v1558
        %1870 = vmatpush1.msra.mxu0 %v1557
        %1871 = vmatprep.subr.mxu0 %v1562
        %1872 = vmatpush1.msra.mxu0 %v1561
        %1873 = vmatprep.subr.mxu0 %v1566
        %1874 = vmatpush1.msra.mxu0 %v1565
        %1875 = vmatprep.subr.mxu0 %v1570
        %1876 = vmatpush1.msra.mxu0 %v1569
        %1877 = vmatprep.subr.mxu0 %v1574
        %1878 = vmatpush1.msra.mxu0 %v1573
        %1879 = vmatprep.subr.mxu0 %v1578
        %1880 = vmatpush1.msra.mxu0 %v1577
        %1881 = vmatprep.subr.mxu0 %v1582
        %1882 = vmatpush1.msra.mxu0 %v1581
        %1883 = vmatprep.subr.mxu0 %v1586
        %1884 = vmatpush1.msra.mxu0 %v1585
        %1885 = vmatprep.subr.mxu0 %v1590
        %1886 = vmatpush1.msra.mxu0 %v1589
        %1887 = vmatprep.subr.mxu0 %v1594
        %1888 = vmatpush1.msra.mxu0 %v1593
        %1889 = vmatprep.subr.mxu0 %v1598
        %1890 = vmatpush1.msra.mxu0 %v1597
        %1891 = vmatprep.subr.mxu0 %v1602
        %1892 = vmatpush1.msra.mxu0 %v1601
        %1893 = vmatprep.subr.mxu0 %v1606
        %1894 = vmatpush1.msra.mxu0 %v1605
        %1895 = vmatprep.subr.mxu0 %v1610
        %1896 = vmatpush1.msra.mxu0 %v1609
        %1897 = vmatprep.subr.mxu0 %v1614
        %1898 = vmatpush1.msra.mxu0 %v1613
        %1899 = vmatprep.subr.mxu0 %v1618
        %1900 = vmatpush1.msra.mxu0 %v1617
        %1901 = vmatprep.mubr.f32.mxu0 %v1484
        %1902 = vmatmul.mubr.f32.gmra.mrb[0].mxu0 %v1483
        %v1903 = vpop.f32.mrb[0].mxu0
        %v1904 = vadd.f32 0.0, %v1903
        %v1905 = vpop.f32.mrb[0].mxu0
        %v1906 = vadd.f32 0.0, %v1905
        %1907 = vmatprep.mubr.f32.mxu0 %v1486
        %1908 = vmatmul.mubr.f32.gmra.mrb[0].mxu0 %v1485
        %v1909 = vpop.f32.mrb[0].mxu0
        %v1910 = vadd.f32 0.0, %v1909
        %v1911 = vpop.f32.mrb[0].mxu0
        %v1912 = vadd.f32 0.0, %v1911
        %1913 = vmatprep.mubr.f32.mxu0 %v1488
        %1914 = vmatmul.mubr.f32.gmra.mrb[0].mxu0 %v1487
        %v1915 = vpop.f32.mrb[0].mxu0
        %v1916 = vadd.f32 0.0, %v1915
        %v1917 = vpop.f32.mrb[0].mxu0
        %v1918 = vadd.f32 0.0, %v1917
        %1919 = vmatprep.mubr.f32.mxu0 %v1490
        %1920 = vmatmul.mubr.f32.gmra.mrb[0].mxu0 %v1489
        %v1921 = vpop.f32.mrb[0].mxu0
        %v1922 = vadd.f32 0.0, %v1921
        %v1923 = vpop.f32.mrb[0].mxu0
        %v1924 = vadd.f32 0.0, %v1923
        %1925 = vdwg.mxu0
        %1926 = vmatprep.subr.mxu0 %v1620
        %1927 = vmatpush1.msra.mxu0 %v1619
        %1928 = vmatprep.subr.mxu0 %v1624
        %1929 = vmatpush1.msra.mxu0 %v1623
        %1930 = vmatprep.subr.mxu0 %v1628
        %1931 = vmatpush1.msra.mxu0 %v1627
        %1932 = vmatprep.subr.mxu0 %v1632
        %1933 = vmatpush1.msra.mxu0 %v1631
        %1934 = vmatprep.subr.mxu0 %v1636
        %1935 = vmatpush1.msra.mxu0 %v1635
        %1936 = vmatprep.subr.mxu0 %v1640
        %1937 = vmatpush1.msra.mxu0 %v1639
        %1938 = vmatprep.subr.mxu0 %v1644
        %1939 = vmatpush1.msra.mxu0 %v1643
        %1940 = vmatprep.subr.mxu0 %v1648
        %1941 = vmatpush1.msra.mxu0 %v1647
        %1942 = vmatprep.subr.mxu0 %v1652
        %1943 = vmatpush1.msra.mxu0 %v1651
        %1944 = vmatprep.subr.mxu0 %v1656
        %1945 = vmatpush1.msra.mxu0 %v1655
        %1946 = vmatprep.subr.mxu0 %v1660
        %1947 = vmatpush1.msra.mxu0 %v1659
        %1948 = vmatprep.subr.mxu0 %v1664
        %1949 = vmatpush1.msra.mxu0 %v1663
        %1950 = vmatprep.subr.mxu0 %v1668
        %1951 = vmatpush1.msra.mxu0 %v1667
        %1952 = vmatprep.subr.mxu0 %v1672
        %1953 = vmatpush1.msra.mxu0 %v1671
        %1954 = vmatprep.subr.mxu0 %v1676
        %1955 = vmatpush1.msra.mxu0 %v1675
        %1956 = vmatprep.subr.mxu0 %v1680
        %1957 = vmatpush1.msra.mxu0 %v1679
        %1958 = vmatprep.subr.mxu0 %v1684
        %1959 = vmatpush1.msra.mxu0 %v1683
        %1960 = vmatprep.subr.mxu0 %v1688
        %1961 = vmatpush1.msra.mxu0 %v1687
        %1962 = vmatprep.subr.mxu0 %v1692
        %1963 = vmatpush1.msra.mxu0 %v1691
        %1964 = vmatprep.subr.mxu0 %v1696
        %1965 = vmatpush1.msra.mxu0 %v1695
        %1966 = vmatprep.subr.mxu0 %v1700
        %1967 = vmatpush1.msra.mxu0 %v1699
        %1968 = vmatprep.subr.mxu0 %v1704
        %1969 = vmatpush1.msra.mxu0 %v1703
        %1970 = vmatprep.subr.mxu0 %v1708
        %1971 = vmatpush1.msra.mxu0 %v1707
        %1972 = vmatprep.subr.mxu0 %v1712
        %1973 = vmatpush1.msra.mxu0 %v1711
        %1974 = vmatprep.subr.mxu0 %v1716
        %1975 = vmatpush1.msra.mxu0 %v1715
        %1976 = vmatprep.subr.mxu0 %v1720
        %1977 = vmatpush1.msra.mxu0 %v1719
        %1978 = vmatprep.subr.mxu0 %v1724
        %1979 = vmatpush1.msra.mxu0 %v1723
        %1980 = vmatprep.subr.mxu0 %v1728
        %1981 = vmatpush1.msra.mxu0 %v1727
        %1982 = vmatprep.subr.mxu0 %v1732
        %1983 = vmatpush1.msra.mxu0 %v1731
        %1984 = vmatprep.subr.mxu0 %v1736
        %1985 = vmatpush1.msra.mxu0 %v1735
        %1986 = vmatprep.subr.mxu0 %v1740
        %1987 = vmatpush1.msra.mxu0 %v1739
        %1988 = vmatprep.subr.mxu0 %v1744
        %1989 = vmatpush1.msra.mxu0 %v1743
        %1990 = vmatprep.mubr.f32.mxu0 %v1484
        %1991 = vmatmul.mubr.f32.gmra.mrb[0].mxu0 %v1483
        %v1992 = vpop.f32.mrb[0].mxu0
        %v1993 = vadd.f32 0.0, %v1992
        %v1994 = vpop.f32.mrb[0].mxu0
        %v1995 = vadd.f32 0.0, %v1994
        %1996 = vmatprep.mubr.f32.mxu0 %v1486
        %1997 = vmatmul.mubr.f32.gmra.mrb[0].mxu0 %v1485
        %v1998 = vpop.f32.mrb[0].mxu0
        %v1999 = vadd.f32 0.0, %v1998
        %v2000 = vpop.f32.mrb[0].mxu0
        %v2001 = vadd.f32 0.0, %v2000
        %2002 = vmatprep.mubr.f32.mxu0 %v1488
        %2003 = vmatmul.mubr.f32.gmra.mrb[0].mxu0 %v1487
        %v2004 = vpop.f32.mrb[0].mxu0
        %v2005 = vadd.f32 0.0, %v2004
        %v2006 = vpop.f32.mrb[0].mxu0
        %v2007 = vadd.f32 0.0, %v2006
        %2008 = vmatprep.mubr.f32.mxu0 %v1490
        %2009 = vmatmul.mubr.f32.gmra.mrb[0].mxu0 %v1489
        %v2010 = vpop.f32.mrb[0].mxu0
        %v2011 = vadd.f32 0.0, %v2010
        %v2012 = vpop.f32.mrb[0].mxu0
        %v2013 = vadd.f32 0.0, %v2012
        %2014 = vdwg.mxu0
        %2015 = vmatprep.subr.mxu0 %v1622
        %2016 = vmatpush1.msra.mxu0 %v1621
        %2017 = vmatprep.subr.mxu0 %v1626
        %2018 = vmatpush1.msra.mxu0 %v1625
        %2019 = vmatprep.subr.mxu0 %v1630
        %2020 = vmatpush1.msra.mxu0 %v1629
        %2021 = vmatprep.subr.mxu0 %v1634
        %2022 = vmatpush1.msra.mxu0 %v1633
        %2023 = vmatprep.subr.mxu0 %v1638
        %2024 = vmatpush1.msra.mxu0 %v1637
        %2025 = vmatprep.subr.mxu0 %v1642
        %2026 = vmatpush1.msra.mxu0 %v1641
        %2027 = vmatprep.subr.mxu0 %v1646
        %2028 = vmatpush1.msra.mxu0 %v1645
        %2029 = vmatprep.subr.mxu0 %v1650
        %2030 = vmatpush1.msra.mxu0 %v1649
        %2031 = vmatprep.subr.mxu0 %v1654
        %2032 = vmatpush1.msra.mxu0 %v1653
        %2033 = vmatprep.subr.mxu0 %v1658
        %2034 = vmatpush1.msra.mxu0 %v1657
        %2035 = vmatprep.subr.mxu0 %v1662
        %2036 = vmatpush1.msra.mxu0 %v1661
        %2037 = vmatprep.subr.mxu0 %v1666
        %2038 = vmatpush1.msra.mxu0 %v1665
        %2039 = vmatprep.subr.mxu0 %v1670
        %2040 = vmatpush1.msra.mxu0 %v1669
        %2041 = vmatprep.subr.mxu0 %v1674
        %2042 = vmatpush1.msra.mxu0 %v1673
        %2043 = vmatprep.subr.mxu0 %v1678
        %2044 = vmatpush1.msra.mxu0 %v1677
        %2045 = vmatprep.subr.mxu0 %v1682
        %2046 = vmatpush1.msra.mxu0 %v1681
        %2047 = vmatprep.subr.mxu0 %v1686
        %2048 = vmatpush1.msra.mxu0 %v1685
        %2049 = vmatprep.subr.mxu0 %v1690
        %2050 = vmatpush1.msra.mxu0 %v1689
        %2051 = vmatprep.subr.mxu0 %v1694
        %2052 = vmatpush1.msra.mxu0 %v1693
        %2053 = vmatprep.subr.mxu0 %v1698
        %2054 = vmatpush1.msra.mxu0 %v1697
        %2055 = vmatprep.subr.mxu0 %v1702
        %2056 = vmatpush1.msra.mxu0 %v1701
        %2057 = vmatprep.subr.mxu0 %v1706
        %2058 = vmatpush1.msra.mxu0 %v1705
        %2059 = vmatprep.subr.mxu0 %v1710
        %2060 = vmatpush1.msra.mxu0 %v1709
        %2061 = vmatprep.subr.mxu0 %v1714
        %2062 = vmatpush1.msra.mxu0 %v1713
        %2063 = vmatprep.subr.mxu0 %v1718
        %2064 = vmatpush1.msra.mxu0 %v1717
        %2065 = vmatprep.subr.mxu0 %v1722
        %2066 = vmatpush1.msra.mxu0 %v1721
        %2067 = vmatprep.subr.mxu0 %v1726
        %2068 = vmatpush1.msra.mxu0 %v1725
        %2069 = vmatprep.subr.mxu0 %v1730
        %2070 = vmatpush1.msra.mxu0 %v1729
        %2071 = vmatprep.subr.mxu0 %v1734
        %2072 = vmatpush1.msra.mxu0 %v1733
        %2073 = vmatprep.subr.mxu0 %v1738
        %2074 = vmatpush1.msra.mxu0 %v1737
        %2075 = vmatprep.subr.mxu0 %v1742
        %2076 = vmatpush1.msra.mxu0 %v1741
        %2077 = vmatprep.subr.mxu0 %v1746
        %2078 = vmatpush1.msra.mxu0 %v1745
        %2079 = vmatprep.mubr.f32.mxu0 %v1484
        %2080 = vmatmul.mubr.f32.gmra.mrb[0].mxu0 %v1483
        %v2081 = vpop.f32.mrb[0].mxu0
        %v2082 = vadd.f32 0.0, %v2081
        %v2083 = vpop.f32.mrb[0].mxu0
        %v2084 = vadd.f32 0.0, %v2083
        %2085 = vmatprep.mubr.f32.mxu0 %v1486
        %2086 = vmatmul.mubr.f32.gmra.mrb[0].mxu0 %v1485
        %v2087 = vpop.f32.mrb[0].mxu0
        %v2088 = vadd.f32 0.0, %v2087
        %v2089 = vpop.f32.mrb[0].mxu0
        %v2090 = vadd.f32 0.0, %v2089
        %2091 = vmatprep.mubr.f32.mxu0 %v1488
        %2092 = vmatmul.mubr.f32.gmra.mrb[0].mxu0 %v1487
        %v2093 = vpop.f32.mrb[0].mxu0
        %v2094 = vadd.f32 0.0, %v2093
        %v2095 = vpop.f32.mrb[0].mxu0
        %v2096 = vadd.f32 0.0, %v2095
        %2097 = vmatprep.mubr.f32.mxu0 %v1490
        %2098 = vmatmul.mubr.f32.gmra.mrb[0].mxu0 %v1489
        %v2099 = vpop.f32.mrb[0].mxu0
        %v2100 = vadd.f32 0.0, %v2099
        %v2101 = vpop.f32.mrb[0].mxu0
        %v2102 = vadd.f32 0.0, %v2101
        %2103 = vdwg.mxu0
        %v2104 = vadd.s32 %v1001, 32
        %v2105 = vadd.s32 %v1001, 40
        %v2106 = vadd.s32 %v1001, 48
        %v2107 = vadd.s32 %v1001, 56
        %vm2108 = vcmp.eq.s32.totalorder %v2104, %v1007
        %vm2109 = vcmp.eq.s32.totalorder %v2105, %v1007
        %vm2110 = vcmp.eq.s32.totalorder %v2106, %v1007
        %vm2111 = vcmp.eq.s32.totalorder %v2107, %v1007
        %v2112 = vsel %vm2108, 1.0, 0.0
        %v2113 = vsel %vm2109, 1.0, 0.0
        %v2114 = vsel %vm2110, 1.0, 0.0
        %v2115 = vsel %vm2111, 1.0, 0.0
        %vm2116 = vcmp.eq.s32.totalorder %v2104, %v1016
        %vm2117 = vcmp.eq.s32.totalorder %v2105, %v1016
        %vm2118 = vcmp.eq.s32.totalorder %v2106, %v1016
        %vm2119 = vcmp.eq.s32.totalorder %v2107, %v1016
        %v2120 = vsel %vm2116, 1.0, 0.0
        %v2121 = vsel %vm2117, 1.0, 0.0
        %v2122 = vsel %vm2118, 1.0, 0.0
        %v2123 = vsel %vm2119, 1.0, 0.0
        %vm2124 = vcmp.eq.s32.totalorder %v2104, %v1025
        %vm2125 = vcmp.eq.s32.totalorder %v2105, %v1025
        %vm2126 = vcmp.eq.s32.totalorder %v2106, %v1025
        %vm2127 = vcmp.eq.s32.totalorder %v2107, %v1025
        %v2128 = vsel %vm2124, 1.0, 0.0
        %v2129 = vsel %vm2125, 1.0, 0.0
        %v2130 = vsel %vm2126, 1.0, 0.0
        %v2131 = vsel %vm2127, 1.0, 0.0
        %vm2132 = vcmp.eq.s32.totalorder %v2104, %v1034
        %vm2133 = vcmp.eq.s32.totalorder %v2105, %v1034
        %vm2134 = vcmp.eq.s32.totalorder %v2106, %v1034
        %vm2135 = vcmp.eq.s32.totalorder %v2107, %v1034
        %v2136 = vsel %vm2132, 1.0, 0.0
        %v2137 = vsel %vm2133, 1.0, 0.0
        %v2138 = vsel %vm2134, 1.0, 0.0
        %v2139 = vsel %vm2135, 1.0, 0.0
        %vm2140 = vcmask 261120
        %v2141 = vsel %vm2140, %v1021, 0
        %v2143 = vsel %vm2140, %v1022, 0
        %v2145 = vsel %vm2140, %v1023, 0
        %v2147 = vsel %vm2140, %v1024, 0
        %v2150 = vsel %vm2140, %v2120, 0
        %v2153 = vsel %vm2140, %v2121, 0
        %v2156 = vsel %vm2140, %v2122, 0
        %v2159 = vsel %vm2140, %v2123, 0
        %2161 = vmatprep.subr.mxu0 %v1906
        %2162 = vmatpush1.msra.mxu0 %v1904
        %2163 = vmatprep.subr.mxu0 %v1912
        %2164 = vmatpush1.msra.mxu0 %v1910
        %2165 = vmatprep.subr.mxu0 %v1918
        %2166 = vmatpush1.msra.mxu0 %v1916
        %2167 = vmatprep.subr.mxu0 %v1924
        %2168 = vmatpush1.msra.mxu0 %v1922
        %2169 = vmatprep.subr.mxu0 0.0
        %2170 = vmatpush1.msra.mxu0 0.0
        %2171 = vmatprep.subr.mxu0 0.0
        %2172 = vmatpush1.msra.mxu0 0.0
        %2173 = vmatprep.subr.mxu0 0.0
        %2174 = vmatpush1.msra.mxu0 0.0
        %2175 = vmatprep.subr.mxu0 0.0
        %2176 = vmatpush1.msra.mxu0 0.0
        %2177 = vmatprep.subr.mxu0 0.0
        %2178 = vmatpush1.msra.mxu0 0.0
        %2179 = vmatprep.subr.mxu0 0.0
        %2180 = vmatpush1.msra.mxu0 0.0
        %2181 = vmatprep.subr.mxu0 0.0
        %2182 = vmatpush1.msra.mxu0 0.0
        %2183 = vmatprep.subr.mxu0 0.0
        %2184 = vmatpush1.msra.mxu0 0.0
        %2185 = vmatprep.subr.mxu0 0.0
        %2186 = vmatpush1.msra.mxu0 0.0
        %2187 = vmatprep.subr.mxu0 0.0
        %2188 = vmatpush1.msra.mxu0 0.0
        %2189 = vmatprep.subr.mxu0 0.0
        %2190 = vmatpush1.msra.mxu0 0.0
        %2191 = vmatprep.subr.mxu0 0.0
        %2192 = vmatpush1.msra.mxu0 0.0
        %2193 = vmatprep.subr.mxu0 0.0
        %2194 = vmatpush1.msra.mxu0 0.0
        %2195 = vmatprep.subr.mxu0 0.0
        %2196 = vmatpush1.msra.mxu0 0.0
        %2197 = vmatprep.subr.mxu0 0.0
        %2198 = vmatpush1.msra.mxu0 0.0
        %2199 = vmatprep.subr.mxu0 0.0
        %2200 = vmatpush1.msra.mxu0 0.0
        %2201 = vmatprep.subr.mxu0 0.0
        %2202 = vmatpush1.msra.mxu0 0.0
        %2203 = vmatprep.subr.mxu0 0.0
        %2204 = vmatpush1.msra.mxu0 0.0
        %2205 = vmatprep.subr.mxu0 0.0
        %2206 = vmatpush1.msra.mxu0 0.0
        %2207 = vmatprep.subr.mxu0 0.0
        %2208 = vmatpush1.msra.mxu0 0.0
        %2209 = vmatprep.subr.mxu0 0.0
        %2210 = vmatpush1.msra.mxu0 0.0
        %2211 = vmatprep.subr.mxu0 0.0
        %2212 = vmatpush1.msra.mxu0 0.0
        %2213 = vmatprep.subr.mxu0 0.0
        %2214 = vmatpush1.msra.mxu0 0.0
        %2215 = vmatprep.subr.mxu0 0.0
        %2216 = vmatpush1.msra.mxu0 0.0
        %2217 = vmatprep.subr.mxu0 0.0
        %2218 = vmatpush1.msra.mxu0 0.0
        %2219 = vmatprep.subr.mxu0 0.0
        %2220 = vmatpush1.msra.mxu0 0.0
        %2221 = vmatprep.subr.mxu0 0.0
        %2222 = vmatpush1.msra.mxu0 0.0
        %2223 = vmatprep.subr.mxu0 0.0
        %2224 = vmatpush1.msra.mxu0 0.0
        %2225 = vmatprep.mubr.f32.mxu0 0.0
        %2226 = vmatmul.mubr.f32.gmra.mrb[0].mxu0 %v2141
        %v2227 = vpop.f32.mrb[0].mxu0
        %v2228 = vadd.f32 0.0, %v2227
        %v2229 = vpop.f32.mrb[0].mxu0
        %v2230 = vadd.f32 0.0, %v2229
        %2231 = vmatprep.mubr.f32.mxu0 0.0
        %2232 = vmatmul.mubr.f32.gmra.mrb[0].mxu0 %v2143
        %v2233 = vpop.f32.mrb[0].mxu0
        %v2234 = vadd.f32 0.0, %v2233
        %v2235 = vpop.f32.mrb[0].mxu0
        %v2236 = vadd.f32 0.0, %v2235
        %2237 = vmatprep.mubr.f32.mxu0 0.0
        %2238 = vmatmul.mubr.f32.gmra.mrb[0].mxu0 %v2145
        %v2239 = vpop.f32.mrb[0].mxu0
        %v2240 = vadd.f32 0.0, %v2239
        %v2241 = vpop.f32.mrb[0].mxu0
        %v2242 = vadd.f32 0.0, %v2241
        %2243 = vmatprep.mubr.f32.mxu0 0.0
        %2244 = vmatmul.mubr.f32.gmra.mrb[0].mxu0 %v2147
        %v2245 = vpop.f32.mrb[0].mxu0
        %v2246 = vadd.f32 0.0, %v2245
        %v2247 = vpop.f32.mrb[0].mxu0
        %v2248 = vadd.f32 0.0, %v2247
        %2249 = vmatprep.mubr.f32.mxu0 0.0
        %2250 = vmatmul.mubr.f32.gmra.mrb[0].mxu0 %v2150
        %v2251 = vpop.f32.mrb[0].mxu0
        %v2252 = vadd.f32 0.0, %v2251
        %v2253 = vpop.f32.mrb[0].mxu0
        %v2254 = vadd.f32 0.0, %v2253
        %2255 = vmatprep.mubr.f32.mxu0 0.0
        %2256 = vmatmul.mubr.f32.gmra.mrb[0].mxu0 %v2153
        %v2257 = vpop.f32.mrb[0].mxu0
        %v2258 = vadd.f32 0.0, %v2257
        %v2259 = vpop.f32.mrb[0].mxu0
        %v2260 = vadd.f32 0.0, %v2259
        %2261 = vmatprep.mubr.f32.mxu0 0.0
        %2262 = vmatmul.mubr.f32.gmra.mrb[0].mxu0 %v2156
        %v2263 = vpop.f32.mrb[0].mxu0
        %v2264 = vadd.f32 0.0, %v2263
        %v2265 = vpop.f32.mrb[0].mxu0
        %v2266 = vadd.f32 0.0, %v2265
        %2267 = vmatprep.mubr.f32.mxu0 0.0
        %2268 = vmatmul.mubr.f32.gmra.mrb[0].mxu0 %v2159
        %v2269 = vpop.f32.mrb[0].mxu0
        %v2270 = vadd.f32 0.0, %v2269
        %v2271 = vpop.f32.mrb[0].mxu0
        %v2272 = vadd.f32 0.0, %v2271
        %2273 = vdwg.mxu0
        %v2274 = vsel %vm2140, %v1012, 0
        %v2276 = vsel %vm2140, %v1013, 0
        %v2278 = vsel %vm2140, %v1014, 0
        %v2280 = vsel %vm2140, %v1015, 0
        %v2283 = vsel %vm2140, %v2112, 0
        %v2286 = vsel %vm2140, %v2113, 0
        %v2289 = vsel %vm2140, %v2114, 0
        %v2292 = vsel %vm2140, %v2115, 0
        %2294 = vmatprep.subr.mxu0 %v1817
        %2295 = vmatpush1.msra.mxu0 %v1815
        %2296 = vmatprep.subr.mxu0 %v1823
        %2297 = vmatpush1.msra.mxu0 %v1821
        %2298 = vmatprep.subr.mxu0 %v1829
        %2299 = vmatpush1.msra.mxu0 %v1827
        %2300 = vmatprep.subr.mxu0 %v1835
        %2301 = vmatpush1.msra.mxu0 %v1833
        %2302 = vmatprep.subr.mxu0 0.0
        %2303 = vmatpush1.msra.mxu0 0.0
        %2304 = vmatprep.subr.mxu0 0.0
        %2305 = vmatpush1.msra.mxu0 0.0
        %2306 = vmatprep.subr.mxu0 0.0
        %2307 = vmatpush1.msra.mxu0 0.0
        %2308 = vmatprep.subr.mxu0 0.0
        %2309 = vmatpush1.msra.mxu0 0.0
        %2310 = vmatprep.subr.mxu0 0.0
        %2311 = vmatpush1.msra.mxu0 0.0
        %2312 = vmatprep.subr.mxu0 0.0
        %2313 = vmatpush1.msra.mxu0 0.0
        %2314 = vmatprep.subr.mxu0 0.0
        %2315 = vmatpush1.msra.mxu0 0.0
        %2316 = vmatprep.subr.mxu0 0.0
        %2317 = vmatpush1.msra.mxu0 0.0
        %2318 = vmatprep.subr.mxu0 0.0
        %2319 = vmatpush1.msra.mxu0 0.0
        %2320 = vmatprep.subr.mxu0 0.0
        %2321 = vmatpush1.msra.mxu0 0.0
        %2322 = vmatprep.subr.mxu0 0.0
        %2323 = vmatpush1.msra.mxu0 0.0
        %2324 = vmatprep.subr.mxu0 0.0
        %2325 = vmatpush1.msra.mxu0 0.0
        %2326 = vmatprep.subr.mxu0 0.0
        %2327 = vmatpush1.msra.mxu0 0.0
        %2328 = vmatprep.subr.mxu0 0.0
        %2329 = vmatpush1.msra.mxu0 0.0
        %2330 = vmatprep.subr.mxu0 0.0
        %2331 = vmatpush1.msra.mxu0 0.0
        %2332 = vmatprep.subr.mxu0 0.0
        %2333 = vmatpush1.msra.mxu0 0.0
        %2334 = vmatprep.subr.mxu0 0.0
        %2335 = vmatpush1.msra.mxu0 0.0
        %2336 = vmatprep.subr.mxu0 0.0
        %2337 = vmatpush1.msra.mxu0 0.0
        %2338 = vmatprep.subr.mxu0 0.0
        %2339 = vmatpush1.msra.mxu0 0.0
        %2340 = vmatprep.subr.mxu0 0.0
        %2341 = vmatpush1.msra.mxu0 0.0
        %2342 = vmatprep.subr.mxu0 0.0
        %2343 = vmatpush1.msra.mxu0 0.0
        %2344 = vmatprep.subr.mxu0 0.0
        %2345 = vmatpush1.msra.mxu0 0.0
        %2346 = vmatprep.subr.mxu0 0.0
        %2347 = vmatpush1.msra.mxu0 0.0
        %2348 = vmatprep.subr.mxu0 0.0
        %2349 = vmatpush1.msra.mxu0 0.0
        %2350 = vmatprep.subr.mxu0 0.0
        %2351 = vmatpush1.msra.mxu0 0.0
        %2352 = vmatprep.subr.mxu0 0.0
        %2353 = vmatpush1.msra.mxu0 0.0
        %2354 = vmatprep.subr.mxu0 0.0
        %2355 = vmatpush1.msra.mxu0 0.0
        %2356 = vmatprep.subr.mxu0 0.0
        %2357 = vmatpush1.msra.mxu0 0.0
        %2358 = vmatprep.mubr.f32.mxu0 0.0
        %2359 = vmatmul.mubr.f32.gmra.mrb[0].mxu0 %v2274
        %v2360 = vpop.f32.mrb[0].mxu0
        %v2361 = vadd.f32 %v2228, %v2360
        %v2362 = vpop.f32.mrb[0].mxu0
        %v2363 = vadd.f32 %v2230, %v2362
        %2364 = vmatprep.mubr.f32.mxu0 0.0
        %2365 = vmatmul.mubr.f32.gmra.mrb[0].mxu0 %v2276
        %v2366 = vpop.f32.mrb[0].mxu0
        %v2367 = vadd.f32 %v2234, %v2366
        %v2368 = vpop.f32.mrb[0].mxu0
        %v2369 = vadd.f32 %v2236, %v2368
        %2370 = vmatprep.mubr.f32.mxu0 0.0
        %2371 = vmatmul.mubr.f32.gmra.mrb[0].mxu0 %v2278
        %v2372 = vpop.f32.mrb[0].mxu0
        %v2373 = vadd.f32 %v2240, %v2372
        %v2374 = vpop.f32.mrb[0].mxu0
        %v2375 = vadd.f32 %v2242, %v2374
        %2376 = vmatprep.mubr.f32.mxu0 0.0
        %2377 = vmatmul.mubr.f32.gmra.mrb[0].mxu0 %v2280
        %v2378 = vpop.f32.mrb[0].mxu0
        %v2379 = vadd.f32 %v2246, %v2378
        %v2380 = vpop.f32.mrb[0].mxu0
        %v2381 = vadd.f32 %v2248, %v2380
        %2382 = vmatprep.mubr.f32.mxu0 0.0
        %2383 = vmatmul.mubr.f32.gmra.mrb[0].mxu0 %v2283
        %v2384 = vpop.f32.mrb[0].mxu0
        %v2385 = vadd.f32 %v2252, %v2384
        %v2386 = vpop.f32.mrb[0].mxu0
        %v2387 = vadd.f32 %v2254, %v2386
        %2388 = vmatprep.mubr.f32.mxu0 0.0
        %2389 = vmatmul.mubr.f32.gmra.mrb[0].mxu0 %v2286
        %v2390 = vpop.f32.mrb[0].mxu0
        %v2391 = vadd.f32 %v2258, %v2390
        %v2392 = vpop.f32.mrb[0].mxu0
        %v2393 = vadd.f32 %v2260, %v2392
        %2394 = vmatprep.mubr.f32.mxu0 0.0
        %2395 = vmatmul.mubr.f32.gmra.mrb[0].mxu0 %v2289
        %v2396 = vpop.f32.mrb[0].mxu0
        %v2397 = vadd.f32 %v2264, %v2396
        %v2398 = vpop.f32.mrb[0].mxu0
        %v2399 = vadd.f32 %v2266, %v2398
        %2400 = vmatprep.mubr.f32.mxu0 0.0
        %2401 = vmatmul.mubr.f32.gmra.mrb[0].mxu0 %v2292
        %v2402 = vpop.f32.mrb[0].mxu0
        %v2403 = vadd.f32 %v2270, %v2402
        %v2404 = vpop.f32.mrb[0].mxu0
        %v2405 = vadd.f32 %v2272, %v2404
        %2406 = vdwg.mxu0
        %v2407 = vsel %vm2140, %v1030, 0
        %v2409 = vsel %vm2140, %v1031, 0
        %v2411 = vsel %vm2140, %v1032, 0
        %v2413 = vsel %vm2140, %v1033, 0
        %v2416 = vsel %vm2140, %v2128, 0
        %v2419 = vsel %vm2140, %v2129, 0
        %v2422 = vsel %vm2140, %v2130, 0
        %v2425 = vsel %vm2140, %v2131, 0
        %2427 = vmatprep.subr.mxu0 %v1995
        %2428 = vmatpush1.msra.mxu0 %v1993
        %2429 = vmatprep.subr.mxu0 %v2001
        %2430 = vmatpush1.msra.mxu0 %v1999
        %2431 = vmatprep.subr.mxu0 %v2007
        %2432 = vmatpush1.msra.mxu0 %v2005
        %2433 = vmatprep.subr.mxu0 %v2013
        %2434 = vmatpush1.msra.mxu0 %v2011
        %2435 = vmatprep.subr.mxu0 0.0
        %2436 = vmatpush1.msra.mxu0 0.0
        %2437 = vmatprep.subr.mxu0 0.0
        %2438 = vmatpush1.msra.mxu0 0.0
        %2439 = vmatprep.subr.mxu0 0.0
        %2440 = vmatpush1.msra.mxu0 0.0
        %2441 = vmatprep.subr.mxu0 0.0
        %2442 = vmatpush1.msra.mxu0 0.0
        %2443 = vmatprep.subr.mxu0 0.0
        %2444 = vmatpush1.msra.mxu0 0.0
        %2445 = vmatprep.subr.mxu0 0.0
        %2446 = vmatpush1.msra.mxu0 0.0
        %2447 = vmatprep.subr.mxu0 0.0
        %2448 = vmatpush1.msra.mxu0 0.0
        %2449 = vmatprep.subr.mxu0 0.0
        %2450 = vmatpush1.msra.mxu0 0.0
        %2451 = vmatprep.subr.mxu0 0.0
        %2452 = vmatpush1.msra.mxu0 0.0
        %2453 = vmatprep.subr.mxu0 0.0
        %2454 = vmatpush1.msra.mxu0 0.0
        %2455 = vmatprep.subr.mxu0 0.0
        %2456 = vmatpush1.msra.mxu0 0.0
        %2457 = vmatprep.subr.mxu0 0.0
        %2458 = vmatpush1.msra.mxu0 0.0
        %2459 = vmatprep.subr.mxu0 0.0
        %2460 = vmatpush1.msra.mxu0 0.0
        %2461 = vmatprep.subr.mxu0 0.0
        %2462 = vmatpush1.msra.mxu0 0.0
        %2463 = vmatprep.subr.mxu0 0.0
        %2464 = vmatpush1.msra.mxu0 0.0
        %2465 = vmatprep.subr.mxu0 0.0
        %2466 = vmatpush1.msra.mxu0 0.0
        %2467 = vmatprep.subr.mxu0 0.0
        %2468 = vmatpush1.msra.mxu0 0.0
        %2469 = vmatprep.subr.mxu0 0.0
        %2470 = vmatpush1.msra.mxu0 0.0
        %2471 = vmatprep.subr.mxu0 0.0
        %2472 = vmatpush1.msra.mxu0 0.0
        %2473 = vmatprep.subr.mxu0 0.0
        %2474 = vmatpush1.msra.mxu0 0.0
        %2475 = vmatprep.subr.mxu0 0.0
        %2476 = vmatpush1.msra.mxu0 0.0
        %2477 = vmatprep.subr.mxu0 0.0
        %2478 = vmatpush1.msra.mxu0 0.0
        %2479 = vmatprep.subr.mxu0 0.0
        %2480 = vmatpush1.msra.mxu0 0.0
        %2481 = vmatprep.subr.mxu0 0.0
        %2482 = vmatpush1.msra.mxu0 0.0
        %2483 = vmatprep.subr.mxu0 0.0
        %2484 = vmatpush1.msra.mxu0 0.0
        %2485 = vmatprep.subr.mxu0 0.0
        %2486 = vmatpush1.msra.mxu0 0.0
        %2487 = vmatprep.subr.mxu0 0.0
        %2488 = vmatpush1.msra.mxu0 0.0
        %2489 = vmatprep.subr.mxu0 0.0
        %2490 = vmatpush1.msra.mxu0 0.0
        %2491 = vmatprep.mubr.f32.mxu0 0.0
        %2492 = vmatmul.mubr.f32.gmra.mrb[0].mxu0 %v2407
        %v2493 = vpop.f32.mrb[0].mxu0
        %v2494 = vadd.f32 0.0, %v2493
        %v2495 = vpop.f32.mrb[0].mxu0
        %v2496 = vadd.f32 0.0, %v2495
        %2497 = vmatprep.mubr.f32.mxu0 0.0
        %2498 = vmatmul.mubr.f32.gmra.mrb[0].mxu0 %v2409
        %v2499 = vpop.f32.mrb[0].mxu0
        %v2500 = vadd.f32 0.0, %v2499
        %v2501 = vpop.f32.mrb[0].mxu0
        %v2502 = vadd.f32 0.0, %v2501
        %2503 = vmatprep.mubr.f32.mxu0 0.0
        %2504 = vmatmul.mubr.f32.gmra.mrb[0].mxu0 %v2411
        %v2505 = vpop.f32.mrb[0].mxu0
        %v2506 = vadd.f32 0.0, %v2505
        %v2507 = vpop.f32.mrb[0].mxu0
        %v2508 = vadd.f32 0.0, %v2507
        %2509 = vmatprep.mubr.f32.mxu0 0.0
        %2510 = vmatmul.mubr.f32.gmra.mrb[0].mxu0 %v2413
        %v2511 = vpop.f32.mrb[0].mxu0
        %v2512 = vadd.f32 0.0, %v2511
        %v2513 = vpop.f32.mrb[0].mxu0
        %v2514 = vadd.f32 0.0, %v2513
        %2515 = vmatprep.mubr.f32.mxu0 0.0
        %2516 = vmatmul.mubr.f32.gmra.mrb[0].mxu0 %v2416
        %v2517 = vpop.f32.mrb[0].mxu0
        %v2518 = vadd.f32 0.0, %v2517
        %v2519 = vpop.f32.mrb[0].mxu0
        %v2520 = vadd.f32 0.0, %v2519
        %2521 = vmatprep.mubr.f32.mxu0 0.0
        %2522 = vmatmul.mubr.f32.gmra.mrb[0].mxu0 %v2419
        %v2523 = vpop.f32.mrb[0].mxu0
        %v2524 = vadd.f32 0.0, %v2523
        %v2525 = vpop.f32.mrb[0].mxu0
        %v2526 = vadd.f32 0.0, %v2525
        %2527 = vmatprep.mubr.f32.mxu0 0.0
        %2528 = vmatmul.mubr.f32.gmra.mrb[0].mxu0 %v2422
        %v2529 = vpop.f32.mrb[0].mxu0
        %v2530 = vadd.f32 0.0, %v2529
        %v2531 = vpop.f32.mrb[0].mxu0
        %v2532 = vadd.f32 0.0, %v2531
        %2533 = vmatprep.mubr.f32.mxu0 0.0
        %2534 = vmatmul.mubr.f32.gmra.mrb[0].mxu0 %v2425
        %v2535 = vpop.f32.mrb[0].mxu0
        %v2536 = vadd.f32 0.0, %v2535
        %v2537 = vpop.f32.mrb[0].mxu0
        %v2538 = vadd.f32 0.0, %v2537
        %2539 = vdwg.mxu0
        %v2540 = vadd.f32 %v2361, %v2494
        %v2541 = vadd.f32 %v2363, %v2496
        %v2542 = vadd.f32 %v2367, %v2500
        %v2543 = vadd.f32 %v2369, %v2502
        %v2544 = vadd.f32 %v2373, %v2506
        %v2545 = vadd.f32 %v2375, %v2508
        %v2546 = vadd.f32 %v2379, %v2512
        %v2547 = vadd.f32 %v2381, %v2514
        %v2548 = vadd.f32 %v2385, %v2518
        %v2549 = vadd.f32 %v2387, %v2520
        %v2550 = vadd.f32 %v2391, %v2524
        %v2551 = vadd.f32 %v2393, %v2526
        %v2552 = vadd.f32 %v2397, %v2530
        %v2553 = vadd.f32 %v2399, %v2532
        %v2554 = vadd.f32 %v2403, %v2536
        %v2555 = vadd.f32 %v2405, %v2538
        %v2556 = vsel %vm2140, %v1039, 0
        %v2558 = vsel %vm2140, %v1040, 0
        %v2560 = vsel %vm2140, %v1041, 0
        %v2562 = vsel %vm2140, %v1042, 0
        %v2565 = vsel %vm2140, %v2136, 0
        %v2568 = vsel %vm2140, %v2137, 0
        %v2571 = vsel %vm2140, %v2138, 0
        %v2574 = vsel %vm2140, %v2139, 0
        %2576 = vmatprep.subr.mxu0 %v2084
        %2577 = vmatpush1.msra.mxu0 %v2082
        %2578 = vmatprep.subr.mxu0 %v2090
        %2579 = vmatpush1.msra.mxu0 %v2088
        %2580 = vmatprep.subr.mxu0 %v2096
        %2581 = vmatpush1.msra.mxu0 %v2094
        %2582 = vmatprep.subr.mxu0 %v2102
        %2583 = vmatpush1.msra.mxu0 %v2100
        %2584 = vmatprep.subr.mxu0 0.0
        %2585 = vmatpush1.msra.mxu0 0.0
        %2586 = vmatprep.subr.mxu0 0.0
        %2587 = vmatpush1.msra.mxu0 0.0
        %2588 = vmatprep.subr.mxu0 0.0
        %2589 = vmatpush1.msra.mxu0 0.0
        %2590 = vmatprep.subr.mxu0 0.0
        %2591 = vmatpush1.msra.mxu0 0.0
        %2592 = vmatprep.subr.mxu0 0.0
        %2593 = vmatpush1.msra.mxu0 0.0
        %2594 = vmatprep.subr.mxu0 0.0
        %2595 = vmatpush1.msra.mxu0 0.0
        %2596 = vmatprep.subr.mxu0 0.0
        %2597 = vmatpush1.msra.mxu0 0.0
        %2598 = vmatprep.subr.mxu0 0.0
        %2599 = vmatpush1.msra.mxu0 0.0
        %2600 = vmatprep.subr.mxu0 0.0
        %2601 = vmatpush1.msra.mxu0 0.0
        %2602 = vmatprep.subr.mxu0 0.0
        %2603 = vmatpush1.msra.mxu0 0.0
        %2604 = vmatprep.subr.mxu0 0.0
        %2605 = vmatpush1.msra.mxu0 0.0
        %2606 = vmatprep.subr.mxu0 0.0
        %2607 = vmatpush1.msra.mxu0 0.0
        %2608 = vmatprep.subr.mxu0 0.0
        %2609 = vmatpush1.msra.mxu0 0.0
        %2610 = vmatprep.subr.mxu0 0.0
        %2611 = vmatpush1.msra.mxu0 0.0
        %2612 = vmatprep.subr.mxu0 0.0
        %2613 = vmatpush1.msra.mxu0 0.0
        %2614 = vmatprep.subr.mxu0 0.0
        %2615 = vmatpush1.msra.mxu0 0.0
        %2616 = vmatprep.subr.mxu0 0.0
        %2617 = vmatpush1.msra.mxu0 0.0
        %2618 = vmatprep.subr.mxu0 0.0
        %2619 = vmatpush1.msra.mxu0 0.0
        %2620 = vmatprep.subr.mxu0 0.0
        %2621 = vmatpush1.msra.mxu0 0.0
        %2622 = vmatprep.subr.mxu0 0.0
        %2623 = vmatpush1.msra.mxu0 0.0
        %2624 = vmatprep.subr.mxu0 0.0
        %2625 = vmatpush1.msra.mxu0 0.0
        %2626 = vmatprep.subr.mxu0 0.0
        %2627 = vmatpush1.msra.mxu0 0.0
        %2628 = vmatprep.subr.mxu0 0.0
        %2629 = vmatpush1.msra.mxu0 0.0
        %2630 = vmatprep.subr.mxu0 0.0
        %2631 = vmatpush1.msra.mxu0 0.0
        %2632 = vmatprep.subr.mxu0 0.0
        %2633 = vmatpush1.msra.mxu0 0.0
        %2634 = vmatprep.subr.mxu0 0.0
        %2635 = vmatpush1.msra.mxu0 0.0
        %2636 = vmatprep.subr.mxu0 0.0
        %2637 = vmatpush1.msra.mxu0 0.0
        %2638 = vmatprep.subr.mxu0 0.0
        %2639 = vmatpush1.msra.mxu0 0.0
        %2640 = vmatprep.mubr.f32.mxu0 0.0
        %2641 = vmatmul.mubr.f32.gmra.mrb[0].mxu0 %v2556
        %v2642 = vpop.f32.mrb[0].mxu0
        %v2643 = vadd.f32 0.0, %v2642
        %v2644 = vpop.f32.mrb[0].mxu0
        %v2645 = vadd.f32 0.0, %v2644
        %2646 = vmatprep.mubr.f32.mxu0 0.0
        %2647 = vmatmul.mubr.f32.gmra.mrb[0].mxu0 %v2558
        %v2648 = vpop.f32.mrb[0].mxu0
        %v2649 = vadd.f32 0.0, %v2648
        %v2650 = vpop.f32.mrb[0].mxu0
        %v2651 = vadd.f32 0.0, %v2650
        %2652 = vmatprep.mubr.f32.mxu0 0.0
        %2653 = vmatmul.mubr.f32.gmra.mrb[0].mxu0 %v2560
        %v2654 = vpop.f32.mrb[0].mxu0
        %v2655 = vadd.f32 0.0, %v2654
        %v2656 = vpop.f32.mrb[0].mxu0
        %v2657 = vadd.f32 0.0, %v2656
        %2658 = vmatprep.mubr.f32.mxu0 0.0
        %2659 = vmatmul.mubr.f32.gmra.mrb[0].mxu0 %v2562
        %v2660 = vpop.f32.mrb[0].mxu0
        %v2661 = vadd.f32 0.0, %v2660
        %v2662 = vpop.f32.mrb[0].mxu0
        %v2663 = vadd.f32 0.0, %v2662
        %2664 = vmatprep.mubr.f32.mxu0 0.0
        %2665 = vmatmul.mubr.f32.gmra.mrb[0].mxu0 %v2565
        %v2666 = vpop.f32.mrb[0].mxu0
        %v2667 = vadd.f32 0.0, %v2666
        %v2668 = vpop.f32.mrb[0].mxu0
        %v2669 = vadd.f32 0.0, %v2668
        %2670 = vmatprep.mubr.f32.mxu0 0.0
        %2671 = vmatmul.mubr.f32.gmra.mrb[0].mxu0 %v2568
        %v2672 = vpop.f32.mrb[0].mxu0
        %v2673 = vadd.f32 0.0, %v2672
        %v2674 = vpop.f32.mrb[0].mxu0
        %v2675 = vadd.f32 0.0, %v2674
        %2676 = vmatprep.mubr.f32.mxu0 0.0
        %2677 = vmatmul.mubr.f32.gmra.mrb[0].mxu0 %v2571
        %v2678 = vpop.f32.mrb[0].mxu0
        %v2679 = vadd.f32 0.0, %v2678
        %v2680 = vpop.f32.mrb[0].mxu0
        %v2681 = vadd.f32 0.0, %v2680
        %2682 = vmatprep.mubr.f32.mxu0 0.0
        %2683 = vmatmul.mubr.f32.gmra.mrb[0].mxu0 %v2574
        %v2684 = vpop.f32.mrb[0].mxu0
        %v2685 = vadd.f32 0.0, %v2684
        %v2686 = vpop.f32.mrb[0].mxu0
        %v2687 = vadd.f32 0.0, %v2686
        %2688 = vdwg.mxu0
        %v2689 = vadd.f32 %v2540, %v2643
        %v2690 = vadd.f32 %v2541, %v2645
        %v2691 = vadd.f32 %v2542, %v2649
        %v2692 = vadd.f32 %v2543, %v2651
        %v2693 = vadd.f32 %v2544, %v2655
        %v2694 = vadd.f32 %v2545, %v2657
        %v2695 = vadd.f32 %v2546, %v2661
        %v2696 = vadd.f32 %v2547, %v2663
        %v2697 = vadd.f32 %v2548, %v2667
        %v2698 = vadd.f32 %v2549, %v2669
        %v2699 = vadd.f32 %v2550, %v2673
        %v2700 = vadd.f32 %v2551, %v2675
        %v2701 = vadd.f32 %v2552, %v2679
        %v2702 = vadd.f32 %v2553, %v2681
        %v2703 = vadd.f32 %v2554, %v2685
        %v2704 = vadd.f32 %v2555, %v2687
        %v2706 = vlaneseq
        %v2707 = vshrl.u32 %v2706, 7
        %v2708 = vsub.s32 0, %v2707
        %v2709 = vrot.slane %v1747, %v2708
        %v2710 = vlaneseq
        %v2711 = vshrl.u32 %v2710, 7
        %v2712 = vsub.s32 1, %v2711
        %v2713 = vrot.slane %v1747, %v2712
        %v2716 = vadd.f32 %v2689, %v2709
        %v2717 = vadd.f32 %v2690, %v2713
        %v2718 = vadd.f32 %v2691, %v2709
        %v2719 = vadd.f32 %v2692, %v2713
        %v2720 = vadd.f32 %v2693, %v2709
        %v2721 = vadd.f32 %v2694, %v2713
        %v2722 = vadd.f32 %v2695, %v2709
        %v2723 = vadd.f32 %v2696, %v2713
        %v2724 = vadd.f32 %v2697, %v2709
        %v2725 = vadd.f32 %v2698, %v2713
        %v2726 = vadd.f32 %v2699, %v2709
        %v2727 = vadd.f32 %v2700, %v2713
        %v2728 = vadd.f32 %v2701, %v2709
        %v2729 = vadd.f32 %v2702, %v2713
        %v2730 = vadd.f32 %v2703, %v2709
        %v2731 = vadd.f32 %v2704, %v2713
        %v2732 = vmax.f32 %v2716, 0.0
        %v2733 = vmax.f32 %v2717, 0.0
        %v2734 = vmax.f32 %v2718, 0.0
        %v2735 = vmax.f32 %v2719, 0.0
        %v2736 = vmax.f32 %v2720, 0.0
        %v2737 = vmax.f32 %v2721, 0.0
        %v2738 = vmax.f32 %v2722, 0.0
        %v2739 = vmax.f32 %v2723, 0.0
        %v2740 = vmax.f32 %v2724, 0.0
        %v2741 = vmax.f32 %v2725, 0.0
        %v2742 = vmax.f32 %v2726, 0.0
        %v2743 = vmax.f32 %v2727, 0.0
        %v2744 = vmax.f32 %v2728, 0.0
        %v2745 = vmax.f32 %v2729, 0.0
        %v2746 = vmax.f32 %v2730, 0.0
        %v2747 = vmax.f32 %v2731, 0.0
        %v2748 = vld [vmem:[#allocation8] sm:$0xff]
        %v2749 = vld [vmem:[#allocation8 + $0x8] sm:$0xff]
        %v2750 = vld [vmem:[#allocation8 + $0x10] sm:$0xff]
        %v2751 = vld [vmem:[#allocation8 + $0x18] sm:$0xff]
        %v2752 = vld [vmem:[#allocation8 + $0x20] sm:$0xff]
        %v2753 = vld [vmem:[#allocation8 + $0x28] sm:$0xff]
        %v2754 = vld [vmem:[#allocation8 + $0x30] sm:$0xff]
        %v2755 = vld [vmem:[#allocation8 + $0x38] sm:$0xff]
        %v2756 = vld [vmem:[#allocation8 + $0x40] sm:$0xff]
        %v2757 = vld [vmem:[#allocation8 + $0x48] sm:$0xff]
        %v2758 = vld [vmem:[#allocation8 + $0x50] sm:$0xff]
        %v2759 = vld [vmem:[#allocation8 + $0x58] sm:$0xff]
        %v2760 = vld [vmem:[#allocation8 + $0x60] sm:$0xff]
        %v2761 = vld [vmem:[#allocation8 + $0x68] sm:$0xff]
        %v2762 = vld [vmem:[#allocation8 + $0x70] sm:$0xff]
        %v2763 = vld [vmem:[#allocation8 + $0x78] sm:$0xff]
        %v2764 = vld [vmem:[#allocation8 + $0x80] sm:$0xff]
        %v2765 = vld [vmem:[#allocation8 + $0x88] sm:$0xff]
        %v2766 = vld [vmem:[#allocation8 + $0x90] sm:$0xff]
        %v2767 = vld [vmem:[#allocation8 + $0x98] sm:$0xff]
        %v2768 = vld [vmem:[#allocation8 + $0xa0] sm:$0xff]
        %v2769 = vld [vmem:[#allocation8 + $0xa8] sm:$0xff]
        %v2770 = vld [vmem:[#allocation8 + $0xb0] sm:$0xff]
        %v2771 = vld [vmem:[#allocation8 + $0xb8] sm:$0xff]
        %v2772 = vld [vmem:[#allocation8 + $0xc0] sm:$0xff]
        %v2773 = vld [vmem:[#allocation8 + $0xc8] sm:$0xff]
        %v2774 = vld [vmem:[#allocation8 + $0xd0] sm:$0xff]
        %v2775 = vld [vmem:[#allocation8 + $0xd8] sm:$0xff]
        %v2776 = vld [vmem:[#allocation8 + $0xe0] sm:$0xff]
        %v2777 = vld [vmem:[#allocation8 + $0xe8] sm:$0xff]
        %v2778 = vld [vmem:[#allocation8 + $0xf0] sm:$0xff]
        %v2779 = vld [vmem:[#allocation8 + $0xf8] sm:$0xff]
        %v2780 = vld [vmem:[#allocation8 + $0x100] sm:$0xff]
        %v2781 = vld [vmem:[#allocation8 + $0x108] sm:$0xff]
        %v2782 = vld [vmem:[#allocation8 + $0x110] sm:$0xff]
        %v2783 = vld [vmem:[#allocation8 + $0x118] sm:$0xff]
        %v2784 = vld [vmem:[#allocation8 + $0x120] sm:$0xff]
        %v2785 = vld [vmem:[#allocation8 + $0x128] sm:$0xff]
        %v2786 = vld [vmem:[#allocation8 + $0x130] sm:$0xff]
        %v2787 = vld [vmem:[#allocation8 + $0x138] sm:$0xff]
        %v2788 = vld [vmem:[#allocation8 + $0x140] sm:$0xff]
        %v2789 = vld [vmem:[#allocation8 + $0x148] sm:$0xff]
        %v2790 = vld [vmem:[#allocation8 + $0x150] sm:$0xff]
        %v2791 = vld [vmem:[#allocation8 + $0x158] sm:$0xff]
        %v2792 = vld [vmem:[#allocation8 + $0x160] sm:$0xff]
        %v2793 = vld [vmem:[#allocation8 + $0x168] sm:$0xff]
        %v2794 = vld [vmem:[#allocation8 + $0x170] sm:$0xff]
        %v2795 = vld [vmem:[#allocation8 + $0x178] sm:$0xff]
        %v2796 = vld [vmem:[#allocation8 + $0x180] sm:$0xff]
        %v2797 = vld [vmem:[#allocation8 + $0x188] sm:$0xff]
        %v2798 = vld [vmem:[#allocation8 + $0x190] sm:$0xff]
        %v2799 = vld [vmem:[#allocation8 + $0x198] sm:$0xff]
        %v2800 = vld [vmem:[#allocation8 + $0x1a0] sm:$0xff]
        %v2801 = vld [vmem:[#allocation8 + $0x1a8] sm:$0xff]
        %v2802 = vld [vmem:[#allocation8 + $0x1b0] sm:$0xff]
        %v2803 = vld [vmem:[#allocation8 + $0x1b8] sm:$0xff]
        %v2804 = vld [vmem:[#allocation8 + $0x1c0] sm:$0xff]
        %v2805 = vld [vmem:[#allocation8 + $0x1c8] sm:$0xff]
        %v2806 = vld [vmem:[#allocation8 + $0x1d0] sm:$0xff]
        %v2807 = vld [vmem:[#allocation8 + $0x1d8] sm:$0xff]
        %v2808 = vld [vmem:[#allocation8 + $0x1e0] sm:$0xff]
        %v2809 = vld [vmem:[#allocation8 + $0x1e8] sm:$0xff]
        %v2810 = vld [vmem:[#allocation8 + $0x1f0] sm:$0xff]
        %v2811 = vld [vmem:[#allocation8 + $0x1f8] sm:$0xff]
        %v2812 = vld [vmem:[#allocation10] sm:$0xff]
        %v2813 = vld [vmem:[#allocation10 + $0x8] sm:$0xff]
        %v2814 = vld [vmem:[#allocation10 + $0x10] sm:$0xff]
        %v2815 = vld [vmem:[#allocation10 + $0x18] sm:$0xff]
        %v2816 = vld [vmem:[#allocation10 + $0x20] sm:$0xff]
        %v2817 = vld [vmem:[#allocation10 + $0x28] sm:$0xff]
        %v2818 = vld [vmem:[#allocation10 + $0x30] sm:$0xff]
        %v2819 = vld [vmem:[#allocation10 + $0x38] sm:$0xff]
        %v2820 = vld [vmem:[#allocation10 + $0x40] sm:$0xff]
        %v2821 = vld [vmem:[#allocation10 + $0x48] sm:$0xff]
        %v2822 = vld [vmem:[#allocation10 + $0x50] sm:$0xff]
        %v2823 = vld [vmem:[#allocation10 + $0x58] sm:$0xff]
        %v2824 = vld [vmem:[#allocation10 + $0x60] sm:$0xff]
        %v2825 = vld [vmem:[#allocation10 + $0x68] sm:$0xff]
        %v2826 = vld [vmem:[#allocation10 + $0x70] sm:$0xff]
        %v2827 = vld [vmem:[#allocation10 + $0x78] sm:$0xff]
        %v2828 = vld [vmem:[#allocation10 + $0x80] sm:$0xff]
        %v2829 = vld [vmem:[#allocation10 + $0x88] sm:$0xff]
        %v2830 = vld [vmem:[#allocation10 + $0x90] sm:$0xff]
        %v2831 = vld [vmem:[#allocation10 + $0x98] sm:$0xff]
        %v2832 = vld [vmem:[#allocation10 + $0xa0] sm:$0xff]
        %v2833 = vld [vmem:[#allocation10 + $0xa8] sm:$0xff]
        %v2834 = vld [vmem:[#allocation10 + $0xb0] sm:$0xff]
        %v2835 = vld [vmem:[#allocation10 + $0xb8] sm:$0xff]
        %v2836 = vld [vmem:[#allocation10 + $0xc0] sm:$0xff]
        %v2837 = vld [vmem:[#allocation10 + $0xc8] sm:$0xff]
        %v2838 = vld [vmem:[#allocation10 + $0xd0] sm:$0xff]
        %v2839 = vld [vmem:[#allocation10 + $0xd8] sm:$0xff]
        %v2840 = vld [vmem:[#allocation10 + $0xe0] sm:$0xff]
        %v2841 = vld [vmem:[#allocation10 + $0xe8] sm:$0xff]
        %v2842 = vld [vmem:[#allocation10 + $0xf0] sm:$0xff]
        %v2843 = vld [vmem:[#allocation10 + $0xf8] sm:$0xff]
        %v2844 = vld [vmem:[#allocation10 + $0x100] sm:$0xff]
        %v2845 = vld [vmem:[#allocation10 + $0x108] sm:$0xff]
        %v2846 = vld [vmem:[#allocation10 + $0x110] sm:$0xff]
        %v2847 = vld [vmem:[#allocation10 + $0x118] sm:$0xff]
        %v2848 = vld [vmem:[#allocation10 + $0x120] sm:$0xff]
        %v2849 = vld [vmem:[#allocation10 + $0x128] sm:$0xff]
        %v2850 = vld [vmem:[#allocation10 + $0x130] sm:$0xff]
        %v2851 = vld [vmem:[#allocation10 + $0x138] sm:$0xff]
        %v2852 = vld [vmem:[#allocation10 + $0x140] sm:$0xff]
        %v2853 = vld [vmem:[#allocation10 + $0x148] sm:$0xff]
        %v2854 = vld [vmem:[#allocation10 + $0x150] sm:$0xff]
        %v2855 = vld [vmem:[#allocation10 + $0x158] sm:$0xff]
        %v2856 = vld [vmem:[#allocation10 + $0x160] sm:$0xff]
        %v2857 = vld [vmem:[#allocation10 + $0x168] sm:$0xff]
        %v2858 = vld [vmem:[#allocation10 + $0x170] sm:$0xff]
        %v2859 = vld [vmem:[#allocation10 + $0x178] sm:$0xff]
        %v2860 = vld [vmem:[#allocation10 + $0x180] sm:$0xff]
        %v2861 = vld [vmem:[#allocation10 + $0x188] sm:$0xff]
        %v2862 = vld [vmem:[#allocation10 + $0x190] sm:$0xff]
        %v2863 = vld [vmem:[#allocation10 + $0x198] sm:$0xff]
        %v2864 = vld [vmem:[#allocation10 + $0x1a0] sm:$0xff]
        %v2865 = vld [vmem:[#allocation10 + $0x1a8] sm:$0xff]
        %v2866 = vld [vmem:[#allocation10 + $0x1b0] sm:$0xff]
        %v2867 = vld [vmem:[#allocation10 + $0x1b8] sm:$0xff]
        %v2868 = vld [vmem:[#allocation10 + $0x1c0] sm:$0xff]
        %v2869 = vld [vmem:[#allocation10 + $0x1c8] sm:$0xff]
        %v2870 = vld [vmem:[#allocation10 + $0x1d0] sm:$0xff]
        %v2871 = vld [vmem:[#allocation10 + $0x1d8] sm:$0xff]
        %v2872 = vld [vmem:[#allocation10 + $0x1e0] sm:$0xff]
        %v2873 = vld [vmem:[#allocation10 + $0x1e8] sm:$0xff]
        %v2874 = vld [vmem:[#allocation10 + $0x1f0] sm:$0xff]
        %v2875 = vld [vmem:[#allocation10 + $0x1f8] sm:$0xff]
        %v2876 = vld [vmem:[%s9] sm:$0x1]
        %2877 = vmatprep.subr.mxu0 %v2749
        %2878 = vmatpush1.msra.mxu0 %v2748
        %2879 = vmatprep.subr.mxu0 %v2751
        %2880 = vmatpush1.msra.mxu0 %v2750
        %2881 = vmatprep.subr.mxu0 %v2753
        %2882 = vmatpush1.msra.mxu0 %v2752
        %2883 = vmatprep.subr.mxu0 %v2755
        %2884 = vmatpush1.msra.mxu0 %v2754
        %2885 = vmatprep.subr.mxu0 %v2757
        %2886 = vmatpush1.msra.mxu0 %v2756
        %2887 = vmatprep.subr.mxu0 %v2759
        %2888 = vmatpush1.msra.mxu0 %v2758
        %2889 = vmatprep.subr.mxu0 %v2761
        %2890 = vmatpush1.msra.mxu0 %v2760
        %2891 = vmatprep.subr.mxu0 %v2763
        %2892 = vmatpush1.msra.mxu0 %v2762
        %2893 = vmatprep.subr.mxu0 %v2765
        %2894 = vmatpush1.msra.mxu0 %v2764
        %2895 = vmatprep.subr.mxu0 %v2767
        %2896 = vmatpush1.msra.mxu0 %v2766
        %2897 = vmatprep.subr.mxu0 %v2769
        %2898 = vmatpush1.msra.mxu0 %v2768
        %2899 = vmatprep.subr.mxu0 %v2771
        %2900 = vmatpush1.msra.mxu0 %v2770
        %2901 = vmatprep.subr.mxu0 %v2773
        %2902 = vmatpush1.msra.mxu0 %v2772
        %2903 = vmatprep.subr.mxu0 %v2775
        %2904 = vmatpush1.msra.mxu0 %v2774
        %2905 = vmatprep.subr.mxu0 %v2777
        %2906 = vmatpush1.msra.mxu0 %v2776
        %2907 = vmatprep.subr.mxu0 %v2779
        %2908 = vmatpush1.msra.mxu0 %v2778
        %2909 = vmatprep.subr.mxu0 %v2781
        %2910 = vmatpush1.msra.mxu0 %v2780
        %2911 = vmatprep.subr.mxu0 %v2783
        %2912 = vmatpush1.msra.mxu0 %v2782
        %2913 = vmatprep.subr.mxu0 %v2785
        %2914 = vmatpush1.msra.mxu0 %v2784
        %2915 = vmatprep.subr.mxu0 %v2787
        %2916 = vmatpush1.msra.mxu0 %v2786
        %2917 = vmatprep.subr.mxu0 %v2789
        %2918 = vmatpush1.msra.mxu0 %v2788
        %2919 = vmatprep.subr.mxu0 %v2791
        %2920 = vmatpush1.msra.mxu0 %v2790
        %2921 = vmatprep.subr.mxu0 %v2793
        %2922 = vmatpush1.msra.mxu0 %v2792
        %2923 = vmatprep.subr.mxu0 %v2795
        %2924 = vmatpush1.msra.mxu0 %v2794
        %2925 = vmatprep.subr.mxu0 %v2797
        %2926 = vmatpush1.msra.mxu0 %v2796
        %2927 = vmatprep.subr.mxu0 %v2799
        %2928 = vmatpush1.msra.mxu0 %v2798
        %2929 = vmatprep.subr.mxu0 %v2801
        %2930 = vmatpush1.msra.mxu0 %v2800
        %2931 = vmatprep.subr.mxu0 %v2803
        %2932 = vmatpush1.msra.mxu0 %v2802
        %2933 = vmatprep.subr.mxu0 %v2805
        %2934 = vmatpush1.msra.mxu0 %v2804
        %2935 = vmatprep.subr.mxu0 %v2807
        %2936 = vmatpush1.msra.mxu0 %v2806
        %2937 = vmatprep.subr.mxu0 %v2809
        %2938 = vmatpush1.msra.mxu0 %v2808
        %2939 = vmatprep.subr.mxu0 %v2811
        %2940 = vmatpush1.msra.mxu0 %v2810
        %2941 = vmatprep.mubr.f32.mxu0 %v2733
        %2942 = vmatmul.mubr.f32.gmra.mrb[0].mxu0 %v2732
        %v2943 = vpop.f32.mrb[0].mxu0
        %v2944 = vadd.f32 0.0, %v2943
        %v2945 = vpop.f32.mrb[0].mxu0
        %v2946 = vadd.f32 0.0, %v2945
        %2947 = vmatprep.mubr.f32.mxu0 %v2735
        %2948 = vmatmul.mubr.f32.gmra.mrb[0].mxu0 %v2734
        %v2949 = vpop.f32.mrb[0].mxu0
        %v2950 = vadd.f32 0.0, %v2949
        %v2951 = vpop.f32.mrb[0].mxu0
        %v2952 = vadd.f32 0.0, %v2951
        %2953 = vmatprep.mubr.f32.mxu0 %v2737
        %2954 = vmatmul.mubr.f32.gmra.mrb[0].mxu0 %v2736
        %v2955 = vpop.f32.mrb[0].mxu0
        %v2956 = vadd.f32 0.0, %v2955
        %v2957 = vpop.f32.mrb[0].mxu0
        %v2958 = vadd.f32 0.0, %v2957
        %2959 = vmatprep.mubr.f32.mxu0 %v2739
        %2960 = vmatmul.mubr.f32.gmra.mrb[0].mxu0 %v2738
        %v2961 = vpop.f32.mrb[0].mxu0
        %v2962 = vadd.f32 0.0, %v2961
        %v2963 = vpop.f32.mrb[0].mxu0
        %v2964 = vadd.f32 0.0, %v2963
        %2965 = vmatprep.mubr.f32.mxu0 %v2741
        %2966 = vmatmul.mubr.f32.gmra.mrb[0].mxu0 %v2740
        %v2967 = vpop.f32.mrb[0].mxu0
        %v2968 = vadd.f32 0.0, %v2967
        %v2969 = vpop.f32.mrb[0].mxu0
        %v2970 = vadd.f32 0.0, %v2969
        %2971 = vmatprep.mubr.f32.mxu0 %v2743
        %2972 = vmatmul.mubr.f32.gmra.mrb[0].mxu0 %v2742
        %v2973 = vpop.f32.mrb[0].mxu0
        %v2974 = vadd.f32 0.0, %v2973
        %v2975 = vpop.f32.mrb[0].mxu0
        %v2976 = vadd.f32 0.0, %v2975
        %2977 = vmatprep.mubr.f32.mxu0 %v2745
        %2978 = vmatmul.mubr.f32.gmra.mrb[0].mxu0 %v2744
        %v2979 = vpop.f32.mrb[0].mxu0
        %v2980 = vadd.f32 0.0, %v2979
        %v2981 = vpop.f32.mrb[0].mxu0
        %v2982 = vadd.f32 0.0, %v2981
        %2983 = vmatprep.mubr.f32.mxu0 %v2747
        %2984 = vmatmul.mubr.f32.gmra.mrb[0].mxu0 %v2746
        %v2985 = vpop.f32.mrb[0].mxu0
        %v2986 = vadd.f32 0.0, %v2985
        %v2987 = vpop.f32.mrb[0].mxu0
        %v2988 = vadd.f32 0.0, %v2987
        %2989 = vdwg.mxu0
        %2990 = vmatprep.subr.mxu0 %v2813
        %2991 = vmatpush1.msra.mxu0 %v2812
        %2992 = vmatprep.subr.mxu0 %v2815
        %2993 = vmatpush1.msra.mxu0 %v2814
        %2994 = vmatprep.subr.mxu0 %v2817
        %2995 = vmatpush1.msra.mxu0 %v2816
        %2996 = vmatprep.subr.mxu0 %v2819
        %2997 = vmatpush1.msra.mxu0 %v2818
        %2998 = vmatprep.subr.mxu0 %v2821
        %2999 = vmatpush1.msra.mxu0 %v2820
        %3000 = vmatprep.subr.mxu0 %v2823
        %3001 = vmatpush1.msra.mxu0 %v2822
        %3002 = vmatprep.subr.mxu0 %v2825
        %3003 = vmatpush1.msra.mxu0 %v2824
        %3004 = vmatprep.subr.mxu0 %v2827
        %3005 = vmatpush1.msra.mxu0 %v2826
        %3006 = vmatprep.subr.mxu0 %v2829
        %3007 = vmatpush1.msra.mxu0 %v2828
        %3008 = vmatprep.subr.mxu0 %v2831
        %3009 = vmatpush1.msra.mxu0 %v2830
        %3010 = vmatprep.subr.mxu0 %v2833
        %3011 = vmatpush1.msra.mxu0 %v2832
        %3012 = vmatprep.subr.mxu0 %v2835
        %3013 = vmatpush1.msra.mxu0 %v2834
        %3014 = vmatprep.subr.mxu0 %v2837
        %3015 = vmatpush1.msra.mxu0 %v2836
        %3016 = vmatprep.subr.mxu0 %v2839
        %3017 = vmatpush1.msra.mxu0 %v2838
        %3018 = vmatprep.subr.mxu0 %v2841
        %3019 = vmatpush1.msra.mxu0 %v2840
        %3020 = vmatprep.subr.mxu0 %v2843
        %3021 = vmatpush1.msra.mxu0 %v2842
        %3022 = vmatprep.subr.mxu0 %v2845
        %3023 = vmatpush1.msra.mxu0 %v2844
        %3024 = vmatprep.subr.mxu0 %v2847
        %3025 = vmatpush1.msra.mxu0 %v2846
        %3026 = vmatprep.subr.mxu0 %v2849
        %3027 = vmatpush1.msra.mxu0 %v2848
        %3028 = vmatprep.subr.mxu0 %v2851
        %3029 = vmatpush1.msra.mxu0 %v2850
        %3030 = vmatprep.subr.mxu0 %v2853
        %3031 = vmatpush1.msra.mxu0 %v2852
        %3032 = vmatprep.subr.mxu0 %v2855
        %3033 = vmatpush1.msra.mxu0 %v2854
        %3034 = vmatprep.subr.mxu0 %v2857
        %3035 = vmatpush1.msra.mxu0 %v2856
        %3036 = vmatprep.subr.mxu0 %v2859
        %3037 = vmatpush1.msra.mxu0 %v2858
        %3038 = vmatprep.subr.mxu0 %v2861
        %3039 = vmatpush1.msra.mxu0 %v2860
        %3040 = vmatprep.subr.mxu0 %v2863
        %3041 = vmatpush1.msra.mxu0 %v2862
        %3042 = vmatprep.subr.mxu0 %v2865
        %3043 = vmatpush1.msra.mxu0 %v2864
        %3044 = vmatprep.subr.mxu0 %v2867
        %3045 = vmatpush1.msra.mxu0 %v2866
        %3046 = vmatprep.subr.mxu0 %v2869
        %3047 = vmatpush1.msra.mxu0 %v2868
        %3048 = vmatprep.subr.mxu0 %v2871
        %3049 = vmatpush1.msra.mxu0 %v2870
        %3050 = vmatprep.subr.mxu0 %v2873
        %3051 = vmatpush1.msra.mxu0 %v2872
        %3052 = vmatprep.subr.mxu0 %v2875
        %3053 = vmatpush1.msra.mxu0 %v2874
        %3054 = vmatprep.mubr.f32.mxu0 %v2733
        %3055 = vmatmul.mubr.f32.gmra.mrb[0].mxu0 %v2732
        %v3056 = vpop.f32.mrb[0].mxu0
        %v3057 = vadd.f32 0.0, %v3056
        %v3058 = vpop.f32.mrb[0].mxu0
        %v3059 = vadd.f32 0.0, %v3058
        %3060 = vmatprep.mubr.f32.mxu0 %v2735
        %3061 = vmatmul.mubr.f32.gmra.mrb[0].mxu0 %v2734
        %v3062 = vpop.f32.mrb[0].mxu0
        %v3063 = vadd.f32 0.0, %v3062
        %v3064 = vpop.f32.mrb[0].mxu0
        %v3065 = vadd.f32 0.0, %v3064
        %3066 = vmatprep.mubr.f32.mxu0 %v2737
        %3067 = vmatmul.mubr.f32.gmra.mrb[0].mxu0 %v2736
        %v3068 = vpop.f32.mrb[0].mxu0
        %v3069 = vadd.f32 0.0, %v3068
        %v3070 = vpop.f32.mrb[0].mxu0
        %v3071 = vadd.f32 0.0, %v3070
        %3072 = vmatprep.mubr.f32.mxu0 %v2739
        %3073 = vmatmul.mubr.f32.gmra.mrb[0].mxu0 %v2738
        %v3074 = vpop.f32.mrb[0].mxu0
        %v3075 = vadd.f32 0.0, %v3074
        %v3076 = vpop.f32.mrb[0].mxu0
        %v3077 = vadd.f32 0.0, %v3076
        %3078 = vmatprep.mubr.f32.mxu0 %v2741
        %3079 = vmatmul.mubr.f32.gmra.mrb[0].mxu0 %v2740
        %v3080 = vpop.f32.mrb[0].mxu0
        %v3081 = vadd.f32 0.0, %v3080
        %v3082 = vpop.f32.mrb[0].mxu0
        %v3083 = vadd.f32 0.0, %v3082
        %3084 = vmatprep.mubr.f32.mxu0 %v2743
        %3085 = vmatmul.mubr.f32.gmra.mrb[0].mxu0 %v2742
        %v3086 = vpop.f32.mrb[0].mxu0
        %v3087 = vadd.f32 0.0, %v3086
        %v3088 = vpop.f32.mrb[0].mxu0
        %v3089 = vadd.f32 0.0, %v3088
        %3090 = vmatprep.mubr.f32.mxu0 %v2745
        %3091 = vmatmul.mubr.f32.gmra.mrb[0].mxu0 %v2744
        %v3092 = vpop.f32.mrb[0].mxu0
        %v3093 = vadd.f32 0.0, %v3092
        %v3094 = vpop.f32.mrb[0].mxu0
        %v3095 = vadd.f32 0.0, %v3094
        %3096 = vmatprep.mubr.f32.mxu0 %v2747
        %3097 = vmatmul.mubr.f32.gmra.mrb[0].mxu0 %v2746
        %v3098 = vpop.f32.mrb[0].mxu0
        %v3099 = vadd.f32 0.0, %v3098
        %v3100 = vpop.f32.mrb[0].mxu0
        %v3101 = vadd.f32 0.0, %v3100
        %3102 = vdwg.mxu0
        %v3103 = vadd.s32 %v1001, 64
        %v3104 = vadd.s32 %v1001, 72
        %v3105 = vadd.s32 %v1001, 80
        %v3106 = vadd.s32 %v1001, 88
        %v3107 = vadd.s32 %v1001, 96
        %v3108 = vadd.s32 %v1001, 104
        %v3109 = vadd.s32 %v1001, 112
        %v3110 = vadd.s32 %v1001, 120
        %vm3111 = vcmp.eq.s32.totalorder %v3103, %v1007
        %vm3112 = vcmp.eq.s32.totalorder %v3104, %v1007
        %vm3113 = vcmp.eq.s32.totalorder %v3105, %v1007
        %vm3114 = vcmp.eq.s32.totalorder %v3106, %v1007
        %vm3115 = vcmp.eq.s32.totalorder %v3107, %v1007
        %vm3116 = vcmp.eq.s32.totalorder %v3108, %v1007
        %vm3117 = vcmp.eq.s32.totalorder %v3109, %v1007
        %vm3118 = vcmp.eq.s32.totalorder %v3110, %v1007
        %v3119 = vsel %vm3111, 1.0, 0.0
        %v3120 = vsel %vm3112, 1.0, 0.0
        %v3121 = vsel %vm3113, 1.0, 0.0
        %v3122 = vsel %vm3114, 1.0, 0.0
        %v3123 = vsel %vm3115, 1.0, 0.0
        %v3124 = vsel %vm3116, 1.0, 0.0
        %v3125 = vsel %vm3117, 1.0, 0.0
        %v3126 = vsel %vm3118, 1.0, 0.0
        %vm3127 = vcmp.eq.s32.totalorder %v3103, %v1016
        %vm3128 = vcmp.eq.s32.totalorder %v3104, %v1016
        %vm3129 = vcmp.eq.s32.totalorder %v3105, %v1016
        %vm3130 = vcmp.eq.s32.totalorder %v3106, %v1016
        %vm3131 = vcmp.eq.s32.totalorder %v3107, %v1016
        %vm3132 = vcmp.eq.s32.totalorder %v3108, %v1016
        %vm3133 = vcmp.eq.s32.totalorder %v3109, %v1016
        %vm3134 = vcmp.eq.s32.totalorder %v3110, %v1016
        %v3135 = vsel %vm3127, 1.0, 0.0
        %v3136 = vsel %vm3128, 1.0, 0.0
        %v3137 = vsel %vm3129, 1.0, 0.0
        %v3138 = vsel %vm3130, 1.0, 0.0
        %v3139 = vsel %vm3131, 1.0, 0.0
        %v3140 = vsel %vm3132, 1.0, 0.0
        %v3141 = vsel %vm3133, 1.0, 0.0
        %v3142 = vsel %vm3134, 1.0, 0.0
        %vm3143 = vcmp.eq.s32.totalorder %v3103, %v1025
        %vm3144 = vcmp.eq.s32.totalorder %v3104, %v1025
        %vm3145 = vcmp.eq.s32.totalorder %v3105, %v1025
        %vm3146 = vcmp.eq.s32.totalorder %v3106, %v1025
        %vm3147 = vcmp.eq.s32.totalorder %v3107, %v1025
        %vm3148 = vcmp.eq.s32.totalorder %v3108, %v1025
        %vm3149 = vcmp.eq.s32.totalorder %v3109, %v1025
        %vm3150 = vcmp.eq.s32.totalorder %v3110, %v1025
        %v3151 = vsel %vm3143, 1.0, 0.0
        %v3152 = vsel %vm3144, 1.0, 0.0
        %v3153 = vsel %vm3145, 1.0, 0.0
        %v3154 = vsel %vm3146, 1.0, 0.0
        %v3155 = vsel %vm3147, 1.0, 0.0
        %v3156 = vsel %vm3148, 1.0, 0.0
        %v3157 = vsel %vm3149, 1.0, 0.0
        %v3158 = vsel %vm3150, 1.0, 0.0
        %vm3159 = vcmp.eq.s32.totalorder %v3103, %v1034
        %vm3160 = vcmp.eq.s32.totalorder %v3104, %v1034
        %vm3161 = vcmp.eq.s32.totalorder %v3105, %v1034
        %vm3162 = vcmp.eq.s32.totalorder %v3106, %v1034
        %vm3163 = vcmp.eq.s32.totalorder %v3107, %v1034
        %vm3164 = vcmp.eq.s32.totalorder %v3108, %v1034
        %vm3165 = vcmp.eq.s32.totalorder %v3109, %v1034
        %vm3166 = vcmp.eq.s32.totalorder %v3110, %v1034
        %v3167 = vsel %vm3159, 1.0, 0.0
        %v3168 = vsel %vm3160, 1.0, 0.0
        %v3169 = vsel %vm3161, 1.0, 0.0
        %v3170 = vsel %vm3162, 1.0, 0.0
        %v3171 = vsel %vm3163, 1.0, 0.0
        %v3172 = vsel %vm3164, 1.0, 0.0
        %v3173 = vsel %vm3165, 1.0, 0.0
        %v3174 = vsel %vm3166, 1.0, 0.0
        %vm3175 = vcmask 523264
        %v3176 = vsel %vm3175, %v1021, 0
        %v3178 = vsel %vm3175, %v1022, 0
        %v3180 = vsel %vm3175, %v1023, 0
        %v3182 = vsel %vm3175, %v1024, 0
        %v3184 = vsel %vm3175, %v2120, 0
        %v3186 = vsel %vm3175, %v2121, 0
        %v3188 = vsel %vm3175, %v2122, 0
        %v3190 = vsel %vm3175, %v2123, 0
        %v3193 = vsel %vm3175, %v3135, 0
        %v3196 = vsel %vm3175, %v3136, 0
        %v3199 = vsel %vm3175, %v3137, 0
        %v3202 = vsel %vm3175, %v3138, 0
        %v3205 = vsel %vm3175, %v3139, 0
        %v3208 = vsel %vm3175, %v3140, 0
        %v3211 = vsel %vm3175, %v3141, 0
        %v3214 = vsel %vm3175, %v3142, 0
        %3216 = vmatprep.subr.mxu0 0.0
        %3217 = vmatpush1.msra.mxu0 %v2946
        %3218 = vmatprep.subr.mxu0 0.0
        %3219 = vmatpush1.msra.mxu0 %v2952
        %3220 = vmatprep.subr.mxu0 0.0
        %3221 = vmatpush1.msra.mxu0 %v2958
        %3222 = vmatprep.subr.mxu0 0.0
        %3223 = vmatpush1.msra.mxu0 %v2964
        %3224 = vmatprep.subr.mxu0 0.0
        %3225 = vmatpush1.msra.mxu0 %v2970
        %3226 = vmatprep.subr.mxu0 0.0
        %3227 = vmatpush1.msra.mxu0 %v2976
        %3228 = vmatprep.subr.mxu0 0.0
        %3229 = vmatpush1.msra.mxu0 %v2982
        %3230 = vmatprep.subr.mxu0 0.0
        %3231 = vmatpush1.msra.mxu0 %v2988
        %3232 = vmatprep.subr.mxu0 0.0
        %3233 = vmatpush1.msra.mxu0 0.0
        %3234 = vmatprep.subr.mxu0 0.0
        %3235 = vmatpush1.msra.mxu0 0.0
        %3236 = vmatprep.subr.mxu0 0.0
        %3237 = vmatpush1.msra.mxu0 0.0
        %3238 = vmatprep.subr.mxu0 0.0
        %3239 = vmatpush1.msra.mxu0 0.0
        %3240 = vmatprep.subr.mxu0 0.0
        %3241 = vmatpush1.msra.mxu0 0.0
        %3242 = vmatprep.subr.mxu0 0.0
        %3243 = vmatpush1.msra.mxu0 0.0
        %3244 = vmatprep.subr.mxu0 0.0
        %3245 = vmatpush1.msra.mxu0 0.0
        %3246 = vmatprep.subr.mxu0 0.0
        %3247 = vmatpush1.msra.mxu0 0.0
        %3248 = vmatprep.subr.mxu0 0.0
        %3249 = vmatpush1.msra.mxu0 0.0
        %3250 = vmatprep.subr.mxu0 0.0
        %3251 = vmatpush1.msra.mxu0 0.0
        %3252 = vmatprep.subr.mxu0 0.0
        %3253 = vmatpush1.msra.mxu0 0.0
        %3254 = vmatprep.subr.mxu0 0.0
        %3255 = vmatpush1.msra.mxu0 0.0
        %3256 = vmatprep.subr.mxu0 0.0
        %3257 = vmatpush1.msra.mxu0 0.0
        %3258 = vmatprep.subr.mxu0 0.0
        %3259 = vmatpush1.msra.mxu0 0.0
        %3260 = vmatprep.subr.mxu0 0.0
        %3261 = vmatpush1.msra.mxu0 0.0
        %3262 = vmatprep.subr.mxu0 0.0
        %3263 = vmatpush1.msra.mxu0 0.0
        %3264 = vmatprep.subr.mxu0 0.0
        %3265 = vmatpush1.msra.mxu0 0.0
        %3266 = vmatprep.subr.mxu0 0.0
        %3267 = vmatpush1.msra.mxu0 0.0
        %3268 = vmatprep.subr.mxu0 0.0
        %3269 = vmatpush1.msra.mxu0 0.0
        %3270 = vmatprep.subr.mxu0 0.0
        %3271 = vmatpush1.msra.mxu0 0.0
        %3272 = vmatprep.subr.mxu0 0.0
        %3273 = vmatpush1.msra.mxu0 0.0
        %3274 = vmatprep.subr.mxu0 0.0
        %3275 = vmatpush1.msra.mxu0 0.0
        %3276 = vmatprep.subr.mxu0 0.0
        %3277 = vmatpush1.msra.mxu0 0.0
        %3278 = vmatprep.subr.mxu0 0.0
        %3279 = vmatpush1.msra.mxu0 0.0
        %3280 = vmatprep.mubr.f32.mxu0 0.0
        %3281 = vmatmul.mubr.f32.gmra.mrb[0].mxu0 %v3176
        %v3282 = vpop.f32.mrb[0].mxu0
        %v3283 = vadd.f32 0.0, %v3282
        %v3284 = vpop.f32.mrb[0].mxu0
        %3285 = vmatprep.mubr.f32.mxu0 0.0
        %3286 = vmatmul.mubr.f32.gmra.mrb[0].mxu0 %v3178
        %v3287 = vpop.f32.mrb[0].mxu0
        %v3288 = vadd.f32 0.0, %v3287
        %v3289 = vpop.f32.mrb[0].mxu0
        %3290 = vmatprep.mubr.f32.mxu0 0.0
        %3291 = vmatmul.mubr.f32.gmra.mrb[0].mxu0 %v3180
        %v3292 = vpop.f32.mrb[0].mxu0
        %v3293 = vadd.f32 0.0, %v3292
        %v3294 = vpop.f32.mrb[0].mxu0
        %3295 = vmatprep.mubr.f32.mxu0 0.0
        %3296 = vmatmul.mubr.f32.gmra.mrb[0].mxu0 %v3182
        %v3297 = vpop.f32.mrb[0].mxu0
        %v3298 = vadd.f32 0.0, %v3297
        %v3299 = vpop.f32.mrb[0].mxu0
        %3300 = vmatprep.mubr.f32.mxu0 0.0
        %3301 = vmatmul.mubr.f32.gmra.mrb[0].mxu0 %v3184
        %v3302 = vpop.f32.mrb[0].mxu0
        %v3303 = vadd.f32 0.0, %v3302
        %v3304 = vpop.f32.mrb[0].mxu0
        %3305 = vmatprep.mubr.f32.mxu0 0.0
        %3306 = vmatmul.mubr.f32.gmra.mrb[0].mxu0 %v3186
        %v3307 = vpop.f32.mrb[0].mxu0
        %v3308 = vadd.f32 0.0, %v3307
        %v3309 = vpop.f32.mrb[0].mxu0
        %3310 = vmatprep.mubr.f32.mxu0 0.0
        %3311 = vmatmul.mubr.f32.gmra.mrb[0].mxu0 %v3188
        %v3312 = vpop.f32.mrb[0].mxu0
        %v3313 = vadd.f32 0.0, %v3312
        %v3314 = vpop.f32.mrb[0].mxu0
        %3315 = vmatprep.mubr.f32.mxu0 0.0
        %3316 = vmatmul.mubr.f32.gmra.mrb[0].mxu0 %v3190
        %v3317 = vpop.f32.mrb[0].mxu0
        %v3318 = vadd.f32 0.0, %v3317
        %v3319 = vpop.f32.mrb[0].mxu0
        %3320 = vmatprep.mubr.f32.mxu0 0.0
        %3321 = vmatmul.mubr.f32.gmra.mrb[0].mxu0 %v3193
        %v3322 = vpop.f32.mrb[0].mxu0
        %v3323 = vadd.f32 0.0, %v3322
        %v3324 = vpop.f32.mrb[0].mxu0
        %3325 = vmatprep.mubr.f32.mxu0 0.0
        %3326 = vmatmul.mubr.f32.gmra.mrb[0].mxu0 %v3196
        %v3327 = vpop.f32.mrb[0].mxu0
        %v3328 = vadd.f32 0.0, %v3327
        %v3329 = vpop.f32.mrb[0].mxu0
        %3330 = vmatprep.mubr.f32.mxu0 0.0
        %3331 = vmatmul.mubr.f32.gmra.mrb[0].mxu0 %v3199
        %v3332 = vpop.f32.mrb[0].mxu0
        %v3333 = vadd.f32 0.0, %v3332
        %v3334 = vpop.f32.mrb[0].mxu0
        %3335 = vmatprep.mubr.f32.mxu0 0.0
        %3336 = vmatmul.mubr.f32.gmra.mrb[0].mxu0 %v3202
        %v3337 = vpop.f32.mrb[0].mxu0
        %v3338 = vadd.f32 0.0, %v3337
        %v3339 = vpop.f32.mrb[0].mxu0
        %3340 = vmatprep.mubr.f32.mxu0 0.0
        %3341 = vmatmul.mubr.f32.gmra.mrb[0].mxu0 %v3205
        %v3342 = vpop.f32.mrb[0].mxu0
        %v3343 = vadd.f32 0.0, %v3342
        %v3344 = vpop.f32.mrb[0].mxu0
        %3345 = vmatprep.mubr.f32.mxu0 0.0
        %3346 = vmatmul.mubr.f32.gmra.mrb[0].mxu0 %v3208
        %v3347 = vpop.f32.mrb[0].mxu0
        %v3348 = vadd.f32 0.0, %v3347
        %v3349 = vpop.f32.mrb[0].mxu0
        %3350 = vmatprep.mubr.f32.mxu0 0.0
        %3351 = vmatmul.mubr.f32.gmra.mrb[0].mxu0 %v3211
        %v3352 = vpop.f32.mrb[0].mxu0
        %v3353 = vadd.f32 0.0, %v3352
        %v3354 = vpop.f32.mrb[0].mxu0
        %3355 = vmatprep.mubr.f32.mxu0 0.0
        %3356 = vmatmul.mubr.f32.gmra.mrb[0].mxu0 %v3214
        %v3357 = vpop.f32.mrb[0].mxu0
        %v3358 = vadd.f32 0.0, %v3357
        %v3359 = vpop.f32.mrb[0].mxu0
        %3360 = vdwg.mxu0
        %v3361 = vsel %vm3175, %v1012, 0
        %v3363 = vsel %vm3175, %v1013, 0
        %v3365 = vsel %vm3175, %v1014, 0
        %v3367 = vsel %vm3175, %v1015, 0
        %v3369 = vsel %vm3175, %v2112, 0
        %v3371 = vsel %vm3175, %v2113, 0
        %v3373 = vsel %vm3175, %v2114, 0
        %v3375 = vsel %vm3175, %v2115, 0
        %v3378 = vsel %vm3175, %v3119, 0
        %v3381 = vsel %vm3175, %v3120, 0
        %v3384 = vsel %vm3175, %v3121, 0
        %v3387 = vsel %vm3175, %v3122, 0
        %v3390 = vsel %vm3175, %v3123, 0
        %v3393 = vsel %vm3175, %v3124, 0
        %v3396 = vsel %vm3175, %v3125, 0
        %v3399 = vsel %vm3175, %v3126, 0
        %3401 = vmatprep.subr.mxu0 0.0
        %3402 = vmatpush1.msra.mxu0 %v2944
        %3403 = vmatprep.subr.mxu0 0.0
        %3404 = vmatpush1.msra.mxu0 %v2950
        %3405 = vmatprep.subr.mxu0 0.0
        %3406 = vmatpush1.msra.mxu0 %v2956
        %3407 = vmatprep.subr.mxu0 0.0
        %3408 = vmatpush1.msra.mxu0 %v2962
        %3409 = vmatprep.subr.mxu0 0.0
        %3410 = vmatpush1.msra.mxu0 %v2968
        %3411 = vmatprep.subr.mxu0 0.0
        %3412 = vmatpush1.msra.mxu0 %v2974
        %3413 = vmatprep.subr.mxu0 0.0
        %3414 = vmatpush1.msra.mxu0 %v2980
        %3415 = vmatprep.subr.mxu0 0.0
        %3416 = vmatpush1.msra.mxu0 %v2986
        %3417 = vmatprep.subr.mxu0 0.0
        %3418 = vmatpush1.msra.mxu0 0.0
        %3419 = vmatprep.subr.mxu0 0.0
        %3420 = vmatpush1.msra.mxu0 0.0
        %3421 = vmatprep.subr.mxu0 0.0
        %3422 = vmatpush1.msra.mxu0 0.0
        %3423 = vmatprep.subr.mxu0 0.0
        %3424 = vmatpush1.msra.mxu0 0.0
        %3425 = vmatprep.subr.mxu0 0.0
        %3426 = vmatpush1.msra.mxu0 0.0
        %3427 = vmatprep.subr.mxu0 0.0
        %3428 = vmatpush1.msra.mxu0 0.0
        %3429 = vmatprep.subr.mxu0 0.0
        %3430 = vmatpush1.msra.mxu0 0.0
        %3431 = vmatprep.subr.mxu0 0.0
        %3432 = vmatpush1.msra.mxu0 0.0
        %3433 = vmatprep.subr.mxu0 0.0
        %3434 = vmatpush1.msra.mxu0 0.0
        %3435 = vmatprep.subr.mxu0 0.0
        %3436 = vmatpush1.msra.mxu0 0.0
        %3437 = vmatprep.subr.mxu0 0.0
        %3438 = vmatpush1.msra.mxu0 0.0
        %3439 = vmatprep.subr.mxu0 0.0
        %3440 = vmatpush1.msra.mxu0 0.0
        %3441 = vmatprep.subr.mxu0 0.0
        %3442 = vmatpush1.msra.mxu0 0.0
        %3443 = vmatprep.subr.mxu0 0.0
        %3444 = vmatpush1.msra.mxu0 0.0
        %3445 = vmatprep.subr.mxu0 0.0
        %3446 = vmatpush1.msra.mxu0 0.0
        %3447 = vmatprep.subr.mxu0 0.0
        %3448 = vmatpush1.msra.mxu0 0.0
        %3449 = vmatprep.subr.mxu0 0.0
        %3450 = vmatpush1.msra.mxu0 0.0
        %3451 = vmatprep.subr.mxu0 0.0
        %3452 = vmatpush1.msra.mxu0 0.0
        %3453 = vmatprep.subr.mxu0 0.0
        %3454 = vmatpush1.msra.mxu0 0.0
        %3455 = vmatprep.subr.mxu0 0.0
        %3456 = vmatpush1.msra.mxu0 0.0
        %3457 = vmatprep.subr.mxu0 0.0
        %3458 = vmatpush1.msra.mxu0 0.0
        %3459 = vmatprep.subr.mxu0 0.0
        %3460 = vmatpush1.msra.mxu0 0.0
        %3461 = vmatprep.subr.mxu0 0.0
        %3462 = vmatpush1.msra.mxu0 0.0
        %3463 = vmatprep.subr.mxu0 0.0
        %3464 = vmatpush1.msra.mxu0 0.0
        %3465 = vmatprep.mubr.f32.mxu0 0.0
        %3466 = vmatmul.mubr.f32.gmra.mrb[0].mxu0 %v3361
        %v3467 = vpop.f32.mrb[0].mxu0
        %v3468 = vadd.f32 %v3283, %v3467
        %v3469 = vpop.f32.mrb[0].mxu0
        %3470 = vmatprep.mubr.f32.mxu0 0.0
        %3471 = vmatmul.mubr.f32.gmra.mrb[0].mxu0 %v3363
        %v3472 = vpop.f32.mrb[0].mxu0
        %v3473 = vadd.f32 %v3288, %v3472
        %v3474 = vpop.f32.mrb[0].mxu0
        %3475 = vmatprep.mubr.f32.mxu0 0.0
        %3476 = vmatmul.mubr.f32.gmra.mrb[0].mxu0 %v3365
        %v3477 = vpop.f32.mrb[0].mxu0
        %v3478 = vadd.f32 %v3293, %v3477
        %v3479 = vpop.f32.mrb[0].mxu0
        %3480 = vmatprep.mubr.f32.mxu0 0.0
        %3481 = vmatmul.mubr.f32.gmra.mrb[0].mxu0 %v3367
        %v3482 = vpop.f32.mrb[0].mxu0
        %v3483 = vadd.f32 %v3298, %v3482
        %v3484 = vpop.f32.mrb[0].mxu0
        %3485 = vmatprep.mubr.f32.mxu0 0.0
        %3486 = vmatmul.mubr.f32.gmra.mrb[0].mxu0 %v3369
        %v3487 = vpop.f32.mrb[0].mxu0
        %v3488 = vadd.f32 %v3303, %v3487
        %v3489 = vpop.f32.mrb[0].mxu0
        %3490 = vmatprep.mubr.f32.mxu0 0.0
        %3491 = vmatmul.mubr.f32.gmra.mrb[0].mxu0 %v3371
        %v3492 = vpop.f32.mrb[0].mxu0
        %v3493 = vadd.f32 %v3308, %v3492
        %v3494 = vpop.f32.mrb[0].mxu0
        %3495 = vmatprep.mubr.f32.mxu0 0.0
        %3496 = vmatmul.mubr.f32.gmra.mrb[0].mxu0 %v3373
        %v3497 = vpop.f32.mrb[0].mxu0
        %v3498 = vadd.f32 %v3313, %v3497
        %v3499 = vpop.f32.mrb[0].mxu0
        %3500 = vmatprep.mubr.f32.mxu0 0.0
        %3501 = vmatmul.mubr.f32.gmra.mrb[0].mxu0 %v3375
        %v3502 = vpop.f32.mrb[0].mxu0
        %v3503 = vadd.f32 %v3318, %v3502
        %v3504 = vpop.f32.mrb[0].mxu0
        %3505 = vmatprep.mubr.f32.mxu0 0.0
        %3506 = vmatmul.mubr.f32.gmra.mrb[0].mxu0 %v3378
        %v3507 = vpop.f32.mrb[0].mxu0
        %v3508 = vadd.f32 %v3323, %v3507
        %v3509 = vpop.f32.mrb[0].mxu0
        %3510 = vmatprep.mubr.f32.mxu0 0.0
        %3511 = vmatmul.mubr.f32.gmra.mrb[0].mxu0 %v3381
        %v3512 = vpop.f32.mrb[0].mxu0
        %v3513 = vadd.f32 %v3328, %v3512
        %v3514 = vpop.f32.mrb[0].mxu0
        %3515 = vmatprep.mubr.f32.mxu0 0.0
        %3516 = vmatmul.mubr.f32.gmra.mrb[0].mxu0 %v3384
        %v3517 = vpop.f32.mrb[0].mxu0
        %v3518 = vadd.f32 %v3333, %v3517
        %v3519 = vpop.f32.mrb[0].mxu0
        %3520 = vmatprep.mubr.f32.mxu0 0.0
        %3521 = vmatmul.mubr.f32.gmra.mrb[0].mxu0 %v3387
        %v3522 = vpop.f32.mrb[0].mxu0
        %v3523 = vadd.f32 %v3338, %v3522
        %v3524 = vpop.f32.mrb[0].mxu0
        %3525 = vmatprep.mubr.f32.mxu0 0.0
        %3526 = vmatmul.mubr.f32.gmra.mrb[0].mxu0 %v3390
        %v3527 = vpop.f32.mrb[0].mxu0
        %v3528 = vadd.f32 %v3343, %v3527
        %v3529 = vpop.f32.mrb[0].mxu0
        %3530 = vmatprep.mubr.f32.mxu0 0.0
        %3531 = vmatmul.mubr.f32.gmra.mrb[0].mxu0 %v3393
        %v3532 = vpop.f32.mrb[0].mxu0
        %v3533 = vadd.f32 %v3348, %v3532
        %v3534 = vpop.f32.mrb[0].mxu0
        %3535 = vmatprep.mubr.f32.mxu0 0.0
        %3536 = vmatmul.mubr.f32.gmra.mrb[0].mxu0 %v3396
        %v3537 = vpop.f32.mrb[0].mxu0
        %v3538 = vadd.f32 %v3353, %v3537
        %v3539 = vpop.f32.mrb[0].mxu0
        %3540 = vmatprep.mubr.f32.mxu0 0.0
        %3541 = vmatmul.mubr.f32.gmra.mrb[0].mxu0 %v3399
        %v3542 = vpop.f32.mrb[0].mxu0
        %v3543 = vadd.f32 %v3358, %v3542
        %v3544 = vpop.f32.mrb[0].mxu0
        %3545 = vdwg.mxu0
        %v3546 = vsel %vm3175, %v1030, 0
        %v3548 = vsel %vm3175, %v1031, 0
        %v3550 = vsel %vm3175, %v1032, 0
        %v3552 = vsel %vm3175, %v1033, 0
        %v3554 = vsel %vm3175, %v2128, 0
        %v3556 = vsel %vm3175, %v2129, 0
        %v3558 = vsel %vm3175, %v2130, 0
        %v3560 = vsel %vm3175, %v2131, 0
        %v3563 = vsel %vm3175, %v3151, 0
        %v3566 = vsel %vm3175, %v3152, 0
        %v3569 = vsel %vm3175, %v3153, 0
        %v3572 = vsel %vm3175, %v3154, 0
        %v3575 = vsel %vm3175, %v3155, 0
        %v3578 = vsel %vm3175, %v3156, 0
        %v3581 = vsel %vm3175, %v3157, 0
        %v3584 = vsel %vm3175, %v3158, 0
        %3586 = vmatprep.subr.mxu0 0.0
        %3587 = vmatpush1.msra.mxu0 %v3057
        %3588 = vmatprep.subr.mxu0 0.0
        %3589 = vmatpush1.msra.mxu0 %v3063
        %3590 = vmatprep.subr.mxu0 0.0
        %3591 = vmatpush1.msra.mxu0 %v3069
        %3592 = vmatprep.subr.mxu0 0.0
        %3593 = vmatpush1.msra.mxu0 %v3075
        %3594 = vmatprep.subr.mxu0 0.0
        %3595 = vmatpush1.msra.mxu0 %v3081
        %3596 = vmatprep.subr.mxu0 0.0
        %3597 = vmatpush1.msra.mxu0 %v3087
        %3598 = vmatprep.subr.mxu0 0.0
        %3599 = vmatpush1.msra.mxu0 %v3093
        %3600 = vmatprep.subr.mxu0 0.0
        %3601 = vmatpush1.msra.mxu0 %v3099
        %3602 = vmatprep.subr.mxu0 0.0
        %3603 = vmatpush1.msra.mxu0 0.0
        %3604 = vmatprep.subr.mxu0 0.0
        %3605 = vmatpush1.msra.mxu0 0.0
        %3606 = vmatprep.subr.mxu0 0.0
        %3607 = vmatpush1.msra.mxu0 0.0
        %3608 = vmatprep.subr.mxu0 0.0
        %3609 = vmatpush1.msra.mxu0 0.0
        %3610 = vmatprep.subr.mxu0 0.0
        %3611 = vmatpush1.msra.mxu0 0.0
        %3612 = vmatprep.subr.mxu0 0.0
        %3613 = vmatpush1.msra.mxu0 0.0
        %3614 = vmatprep.subr.mxu0 0.0
        %3615 = vmatpush1.msra.mxu0 0.0
        %3616 = vmatprep.subr.mxu0 0.0
        %3617 = vmatpush1.msra.mxu0 0.0
        %3618 = vmatprep.subr.mxu0 0.0
        %3619 = vmatpush1.msra.mxu0 0.0
        %3620 = vmatprep.subr.mxu0 0.0
        %3621 = vmatpush1.msra.mxu0 0.0
        %3622 = vmatprep.subr.mxu0 0.0
        %3623 = vmatpush1.msra.mxu0 0.0
        %3624 = vmatprep.subr.mxu0 0.0
        %3625 = vmatpush1.msra.mxu0 0.0
        %3626 = vmatprep.subr.mxu0 0.0
        %3627 = vmatpush1.msra.mxu0 0.0
        %3628 = vmatprep.subr.mxu0 0.0
        %3629 = vmatpush1.msra.mxu0 0.0
        %3630 = vmatprep.subr.mxu0 0.0
        %3631 = vmatpush1.msra.mxu0 0.0
        %3632 = vmatprep.subr.mxu0 0.0
        %3633 = vmatpush1.msra.mxu0 0.0
        %3634 = vmatprep.subr.mxu0 0.0
        %3635 = vmatpush1.msra.mxu0 0.0
        %3636 = vmatprep.subr.mxu0 0.0
        %3637 = vmatpush1.msra.mxu0 0.0
        %3638 = vmatprep.subr.mxu0 0.0
        %3639 = vmatpush1.msra.mxu0 0.0
        %3640 = vmatprep.subr.mxu0 0.0
        %3641 = vmatpush1.msra.mxu0 0.0
        %3642 = vmatprep.subr.mxu0 0.0
        %3643 = vmatpush1.msra.mxu0 0.0
        %3644 = vmatprep.subr.mxu0 0.0
        %3645 = vmatpush1.msra.mxu0 0.0
        %3646 = vmatprep.subr.mxu0 0.0
        %3647 = vmatpush1.msra.mxu0 0.0
        %3648 = vmatprep.subr.mxu0 0.0
        %3649 = vmatpush1.msra.mxu0 0.0
        %3650 = vmatprep.mubr.f32.mxu0 0.0
        %3651 = vmatmul.mubr.f32.gmra.mrb[0].mxu0 %v3546
        %v3652 = vpop.f32.mrb[0].mxu0
        %v3653 = vadd.f32 0.0, %v3652
        %v3654 = vpop.f32.mrb[0].mxu0
        %3655 = vmatprep.mubr.f32.mxu0 0.0
        %3656 = vmatmul.mubr.f32.gmra.mrb[0].mxu0 %v3548
        %v3657 = vpop.f32.mrb[0].mxu0
        %v3658 = vadd.f32 0.0, %v3657
        %v3659 = vpop.f32.mrb[0].mxu0
        %3660 = vmatprep.mubr.f32.mxu0 0.0
        %3661 = vmatmul.mubr.f32.gmra.mrb[0].mxu0 %v3550
        %v3662 = vpop.f32.mrb[0].mxu0
        %v3663 = vadd.f32 0.0, %v3662
        %v3664 = vpop.f32.mrb[0].mxu0
        %3665 = vmatprep.mubr.f32.mxu0 0.0
        %3666 = vmatmul.mubr.f32.gmra.mrb[0].mxu0 %v3552
        %v3667 = vpop.f32.mrb[0].mxu0
        %v3668 = vadd.f32 0.0, %v3667
        %v3669 = vpop.f32.mrb[0].mxu0
        %3670 = vmatprep.mubr.f32.mxu0 0.0
        %3671 = vmatmul.mubr.f32.gmra.mrb[0].mxu0 %v3554
        %v3672 = vpop.f32.mrb[0].mxu0
        %v3673 = vadd.f32 0.0, %v3672
        %v3674 = vpop.f32.mrb[0].mxu0
        %3675 = vmatprep.mubr.f32.mxu0 0.0
        %3676 = vmatmul.mubr.f32.gmra.mrb[0].mxu0 %v3556
        %v3677 = vpop.f32.mrb[0].mxu0
        %v3678 = vadd.f32 0.0, %v3677
        %v3679 = vpop.f32.mrb[0].mxu0
        %3680 = vmatprep.mubr.f32.mxu0 0.0
        %3681 = vmatmul.mubr.f32.gmra.mrb[0].mxu0 %v3558
        %v3682 = vpop.f32.mrb[0].mxu0
        %v3683 = vadd.f32 0.0, %v3682
        %v3684 = vpop.f32.mrb[0].mxu0
        %3685 = vmatprep.mubr.f32.mxu0 0.0
        %3686 = vmatmul.mubr.f32.gmra.mrb[0].mxu0 %v3560
        %v3687 = vpop.f32.mrb[0].mxu0
        %v3688 = vadd.f32 0.0, %v3687
        %v3689 = vpop.f32.mrb[0].mxu0
        %3690 = vmatprep.mubr.f32.mxu0 0.0
        %3691 = vmatmul.mubr.f32.gmra.mrb[0].mxu0 %v3563
        %v3692 = vpop.f32.mrb[0].mxu0
        %v3693 = vadd.f32 0.0, %v3692
        %v3694 = vpop.f32.mrb[0].mxu0
        %3695 = vmatprep.mubr.f32.mxu0 0.0
        %3696 = vmatmul.mubr.f32.gmra.mrb[0].mxu0 %v3566
        %v3697 = vpop.f32.mrb[0].mxu0
        %v3698 = vadd.f32 0.0, %v3697
        %v3699 = vpop.f32.mrb[0].mxu0
        %3700 = vmatprep.mubr.f32.mxu0 0.0
        %3701 = vmatmul.mubr.f32.gmra.mrb[0].mxu0 %v3569
        %v3702 = vpop.f32.mrb[0].mxu0
        %v3703 = vadd.f32 0.0, %v3702
        %v3704 = vpop.f32.mrb[0].mxu0
        %3705 = vmatprep.mubr.f32.mxu0 0.0
        %3706 = vmatmul.mubr.f32.gmra.mrb[0].mxu0 %v3572
        %v3707 = vpop.f32.mrb[0].mxu0
        %v3708 = vadd.f32 0.0, %v3707
        %v3709 = vpop.f32.mrb[0].mxu0
        %3710 = vmatprep.mubr.f32.mxu0 0.0
        %3711 = vmatmul.mubr.f32.gmra.mrb[0].mxu0 %v3575
        %v3712 = vpop.f32.mrb[0].mxu0
        %v3713 = vadd.f32 0.0, %v3712
        %v3714 = vpop.f32.mrb[0].mxu0
        %3715 = vmatprep.mubr.f32.mxu0 0.0
        %3716 = vmatmul.mubr.f32.gmra.mrb[0].mxu0 %v3578
        %v3717 = vpop.f32.mrb[0].mxu0
        %v3718 = vadd.f32 0.0, %v3717
        %v3719 = vpop.f32.mrb[0].mxu0
        %3720 = vmatprep.mubr.f32.mxu0 0.0
        %3721 = vmatmul.mubr.f32.gmra.mrb[0].mxu0 %v3581
        %v3722 = vpop.f32.mrb[0].mxu0
        %v3723 = vadd.f32 0.0, %v3722
        %v3724 = vpop.f32.mrb[0].mxu0
        %3725 = vmatprep.mubr.f32.mxu0 0.0
        %3726 = vmatmul.mubr.f32.gmra.mrb[0].mxu0 %v3584
        %v3727 = vpop.f32.mrb[0].mxu0
        %v3728 = vadd.f32 0.0, %v3727
        %v3729 = vpop.f32.mrb[0].mxu0
        %3730 = vdwg.mxu0
        %v3731 = vadd.f32 %v3468, %v3653
        %v3732 = vadd.f32 %v3473, %v3658
        %v3733 = vadd.f32 %v3478, %v3663
        %v3734 = vadd.f32 %v3483, %v3668
        %v3735 = vadd.f32 %v3488, %v3673
        %v3736 = vadd.f32 %v3493, %v3678
        %v3737 = vadd.f32 %v3498, %v3683
        %v3738 = vadd.f32 %v3503, %v3688
        %v3739 = vadd.f32 %v3508, %v3693
        %v3740 = vadd.f32 %v3513, %v3698
        %v3741 = vadd.f32 %v3518, %v3703
        %v3742 = vadd.f32 %v3523, %v3708
        %v3743 = vadd.f32 %v3528, %v3713
        %v3744 = vadd.f32 %v3533, %v3718
        %v3745 = vadd.f32 %v3538, %v3723
        %v3746 = vadd.f32 %v3543, %v3728
        %v3747 = vsel %vm3175, %v1039, 0
        %v3749 = vsel %vm3175, %v1040, 0
        %v3751 = vsel %vm3175, %v1041, 0
        %v3753 = vsel %vm3175, %v1042, 0
        %v3755 = vsel %vm3175, %v2136, 0
        %v3757 = vsel %vm3175, %v2137, 0
        %v3759 = vsel %vm3175, %v2138, 0
        %v3761 = vsel %vm3175, %v2139, 0
        %v3764 = vsel %vm3175, %v3167, 0
        %v3767 = vsel %vm3175, %v3168, 0
        %v3770 = vsel %vm3175, %v3169, 0
        %v3773 = vsel %vm3175, %v3170, 0
        %v3776 = vsel %vm3175, %v3171, 0
        %v3779 = vsel %vm3175, %v3172, 0
        %v3782 = vsel %vm3175, %v3173, 0
        %v3785 = vsel %vm3175, %v3174, 0
        %3787 = vmatprep.subr.mxu0 0.0
        %3788 = vmatpush1.msra.mxu0 %v3059
        %3789 = vmatprep.subr.mxu0 0.0
        %3790 = vmatpush1.msra.mxu0 %v3065
        %3791 = vmatprep.subr.mxu0 0.0
        %3792 = vmatpush1.msra.mxu0 %v3071
        %3793 = vmatprep.subr.mxu0 0.0
        %3794 = vmatpush1.msra.mxu0 %v3077
        %3795 = vmatprep.subr.mxu0 0.0
        %3796 = vmatpush1.msra.mxu0 %v3083
        %3797 = vmatprep.subr.mxu0 0.0
        %3798 = vmatpush1.msra.mxu0 %v3089
        %3799 = vmatprep.subr.mxu0 0.0
        %3800 = vmatpush1.msra.mxu0 %v3095
        %3801 = vmatprep.subr.mxu0 0.0
        %3802 = vmatpush1.msra.mxu0 %v3101
        %3803 = vmatprep.subr.mxu0 0.0
        %3804 = vmatpush1.msra.mxu0 0.0
        %3805 = vmatprep.subr.mxu0 0.0
        %3806 = vmatpush1.msra.mxu0 0.0
        %3807 = vmatprep.subr.mxu0 0.0
        %3808 = vmatpush1.msra.mxu0 0.0
        %3809 = vmatprep.subr.mxu0 0.0
        %3810 = vmatpush1.msra.mxu0 0.0
        %3811 = vmatprep.subr.mxu0 0.0
        %3812 = vmatpush1.msra.mxu0 0.0
        %3813 = vmatprep.subr.mxu0 0.0
        %3814 = vmatpush1.msra.mxu0 0.0
        %3815 = vmatprep.subr.mxu0 0.0
        %3816 = vmatpush1.msra.mxu0 0.0
        %3817 = vmatprep.subr.mxu0 0.0
        %3818 = vmatpush1.msra.mxu0 0.0
        %3819 = vmatprep.subr.mxu0 0.0
        %3820 = vmatpush1.msra.mxu0 0.0
        %3821 = vmatprep.subr.mxu0 0.0
        %3822 = vmatpush1.msra.mxu0 0.0
        %3823 = vmatprep.subr.mxu0 0.0
        %3824 = vmatpush1.msra.mxu0 0.0
        %3825 = vmatprep.subr.mxu0 0.0
        %3826 = vmatpush1.msra.mxu0 0.0
        %3827 = vmatprep.subr.mxu0 0.0
        %3828 = vmatpush1.msra.mxu0 0.0
        %3829 = vmatprep.subr.mxu0 0.0
        %3830 = vmatpush1.msra.mxu0 0.0
        %3831 = vmatprep.subr.mxu0 0.0
        %3832 = vmatpush1.msra.mxu0 0.0
        %3833 = vmatprep.subr.mxu0 0.0
        %3834 = vmatpush1.msra.mxu0 0.0
        %3835 = vmatprep.subr.mxu0 0.0
        %3836 = vmatpush1.msra.mxu0 0.0
        %3837 = vmatprep.subr.mxu0 0.0
        %3838 = vmatpush1.msra.mxu0 0.0
        %3839 = vmatprep.subr.mxu0 0.0
        %3840 = vmatpush1.msra.mxu0 0.0
        %3841 = vmatprep.subr.mxu0 0.0
        %3842 = vmatpush1.msra.mxu0 0.0
        %3843 = vmatprep.subr.mxu0 0.0
        %3844 = vmatpush1.msra.mxu0 0.0
        %3845 = vmatprep.subr.mxu0 0.0
        %3846 = vmatpush1.msra.mxu0 0.0
        %3847 = vmatprep.subr.mxu0 0.0
        %3848 = vmatpush1.msra.mxu0 0.0
        %3849 = vmatprep.subr.mxu0 0.0
        %3850 = vmatpush1.msra.mxu0 0.0
        %3851 = vmatprep.mubr.f32.mxu0 0.0
        %3852 = vmatmul.mubr.f32.gmra.mrb[0].mxu0 %v3747
        %v3853 = vpop.f32.mrb[0].mxu0
        %v3854 = vadd.f32 0.0, %v3853
        %v3855 = vpop.f32.mrb[0].mxu0
        %3856 = vmatprep.mubr.f32.mxu0 0.0
        %3857 = vmatmul.mubr.f32.gmra.mrb[0].mxu0 %v3749
        %v3858 = vpop.f32.mrb[0].mxu0
        %v3859 = vadd.f32 0.0, %v3858
        %v3860 = vpop.f32.mrb[0].mxu0
        %3861 = vmatprep.mubr.f32.mxu0 0.0
        %3862 = vmatmul.mubr.f32.gmra.mrb[0].mxu0 %v3751
        %v3863 = vpop.f32.mrb[0].mxu0
        %v3864 = vadd.f32 0.0, %v3863
        %v3865 = vpop.f32.mrb[0].mxu0
        %3866 = vmatprep.mubr.f32.mxu0 0.0
        %3867 = vmatmul.mubr.f32.gmra.mrb[0].mxu0 %v3753
        %v3868 = vpop.f32.mrb[0].mxu0
        %v3869 = vadd.f32 0.0, %v3868
        %v3870 = vpop.f32.mrb[0].mxu0
        %3871 = vmatprep.mubr.f32.mxu0 0.0
        %3872 = vmatmul.mubr.f32.gmra.mrb[0].mxu0 %v3755
        %v3873 = vpop.f32.mrb[0].mxu0
        %v3874 = vadd.f32 0.0, %v3873
        %v3875 = vpop.f32.mrb[0].mxu0
        %3876 = vmatprep.mubr.f32.mxu0 0.0
        %3877 = vmatmul.mubr.f32.gmra.mrb[0].mxu0 %v3757
        %v3878 = vpop.f32.mrb[0].mxu0
        %v3879 = vadd.f32 0.0, %v3878
        %v3880 = vpop.f32.mrb[0].mxu0
        %3881 = vmatprep.mubr.f32.mxu0 0.0
        %3882 = vmatmul.mubr.f32.gmra.mrb[0].mxu0 %v3759
        %v3883 = vpop.f32.mrb[0].mxu0
        %v3884 = vadd.f32 0.0, %v3883
        %v3885 = vpop.f32.mrb[0].mxu0
        %3886 = vmatprep.mubr.f32.mxu0 0.0
        %3887 = vmatmul.mubr.f32.gmra.mrb[0].mxu0 %v3761
        %v3888 = vpop.f32.mrb[0].mxu0
        %v3889 = vadd.f32 0.0, %v3888
        %v3890 = vpop.f32.mrb[0].mxu0
        %3891 = vmatprep.mubr.f32.mxu0 0.0
        %3892 = vmatmul.mubr.f32.gmra.mrb[0].mxu0 %v3764
        %v3893 = vpop.f32.mrb[0].mxu0
        %v3894 = vadd.f32 0.0, %v3893
        %v3895 = vpop.f32.mrb[0].mxu0
        %3896 = vmatprep.mubr.f32.mxu0 0.0
        %3897 = vmatmul.mubr.f32.gmra.mrb[0].mxu0 %v3767
        %v3898 = vpop.f32.mrb[0].mxu0
        %v3899 = vadd.f32 0.0, %v3898
        %v3900 = vpop.f32.mrb[0].mxu0
        %3901 = vmatprep.mubr.f32.mxu0 0.0
        %3902 = vmatmul.mubr.f32.gmra.mrb[0].mxu0 %v3770
        %v3903 = vpop.f32.mrb[0].mxu0
        %v3904 = vadd.f32 0.0, %v3903
        %v3905 = vpop.f32.mrb[0].mxu0
        %3906 = vmatprep.mubr.f32.mxu0 0.0
        %3907 = vmatmul.mubr.f32.gmra.mrb[0].mxu0 %v3773
        %v3908 = vpop.f32.mrb[0].mxu0
        %v3909 = vadd.f32 0.0, %v3908
        %v3910 = vpop.f32.mrb[0].mxu0
        %3911 = vmatprep.mubr.f32.mxu0 0.0
        %3912 = vmatmul.mubr.f32.gmra.mrb[0].mxu0 %v3776
        %v3913 = vpop.f32.mrb[0].mxu0
        %v3914 = vadd.f32 0.0, %v3913
        %v3915 = vpop.f32.mrb[0].mxu0
        %3916 = vmatprep.mubr.f32.mxu0 0.0
        %3917 = vmatmul.mubr.f32.gmra.mrb[0].mxu0 %v3779
        %v3918 = vpop.f32.mrb[0].mxu0
        %v3919 = vadd.f32 0.0, %v3918
        %v3920 = vpop.f32.mrb[0].mxu0
        %3921 = vmatprep.mubr.f32.mxu0 0.0
        %3922 = vmatmul.mubr.f32.gmra.mrb[0].mxu0 %v3782
        %v3923 = vpop.f32.mrb[0].mxu0
        %v3924 = vadd.f32 0.0, %v3923
        %v3925 = vpop.f32.mrb[0].mxu0
        %3926 = vmatprep.mubr.f32.mxu0 0.0
        %3927 = vmatmul.mubr.f32.gmra.mrb[0].mxu0 %v3785
        %v3928 = vpop.f32.mrb[0].mxu0
        %v3929 = vadd.f32 0.0, %v3928
        %v3930 = vpop.f32.mrb[0].mxu0
        %3931 = vdwg.mxu0
        %v3932 = vadd.f32 %v3731, %v3854
        %v3933 = vadd.f32 %v3732, %v3859
        %v3934 = vadd.f32 %v3733, %v3864
        %v3935 = vadd.f32 %v3734, %v3869
        %v3936 = vadd.f32 %v3735, %v3874
        %v3937 = vadd.f32 %v3736, %v3879
        %v3938 = vadd.f32 %v3737, %v3884
        %v3939 = vadd.f32 %v3738, %v3889
        %v3940 = vadd.f32 %v3739, %v3894
        %v3941 = vadd.f32 %v3740, %v3899
        %v3942 = vadd.f32 %v3741, %v3904
        %v3943 = vadd.f32 %v3742, %v3909
        %v3944 = vadd.f32 %v3743, %v3914
        %v3945 = vadd.f32 %v3744, %v3919
        %v3946 = vadd.f32 %v3745, %v3924
        %v3947 = vadd.f32 %v3746, %v3929
        %v3949 = vlaneseq
        %v3950 = vshrl.u32 %v3949, 7
        %v3951 = vsub.s32 0, %v3950
        %v3952 = vrot.slane %v2876, %v3951
        %v3954 = vadd.f32 %v3932, %v3952
        %v3955 = vadd.f32 %v3933, %v3952
        %v3956 = vadd.f32 %v3934, %v3952
        %v3957 = vadd.f32 %v3935, %v3952
        %v3958 = vadd.f32 %v3936, %v3952
        %v3959 = vadd.f32 %v3937, %v3952
        %v3960 = vadd.f32 %v3938, %v3952
        %v3961 = vadd.f32 %v3939, %v3952
        %v3962 = vadd.f32 %v3940, %v3952
        %v3963 = vadd.f32 %v3941, %v3952
        %v3964 = vadd.f32 %v3942, %v3952
        %v3965 = vadd.f32 %v3943, %v3952
        %v3966 = vadd.f32 %v3944, %v3952
        %v3967 = vadd.f32 %v3945, %v3952
        %v3968 = vadd.f32 %v3946, %v3952
        %v3969 = vadd.f32 %v3947, %v3952
        %v3970 = vsub.f32 0.0, %v3954
        %v3971 = vsub.f32 0.0, %v3955
        %v3972 = vsub.f32 0.0, %v3956
        %v3973 = vsub.f32 0.0, %v3957
        %v3974 = vsub.f32 0.0, %v3958
        %v3975 = vsub.f32 0.0, %v3959
        %v3976 = vsub.f32 0.0, %v3960
        %v3977 = vsub.f32 0.0, %v3961
        %v3978 = vsub.f32 0.0, %v3962
        %v3979 = vsub.f32 0.0, %v3963
        %v3980 = vsub.f32 0.0, %v3964
        %v3981 = vsub.f32 0.0, %v3965
        %v3982 = vsub.f32 0.0, %v3966
        %v3983 = vsub.f32 0.0, %v3967
        %v3984 = vsub.f32 0.0, %v3968
        %v3985 = vsub.f32 0.0, %v3969
        %v3986 = vmul.f32 %v3970, 1.442695
        %v3987 = vpow.pop %v3986
        %v3988 = vmul.f32 %v3971, 1.442695
        %v3989 = vpow.pop %v3988
        %v3990 = vmul.f32 %v3972, 1.442695
        %v3991 = vpow.pop %v3990
        %v3992 = vmul.f32 %v3973, 1.442695
        %v3993 = vpow.pop %v3992
        %v3994 = vmul.f32 %v3974, 1.442695
        %v3995 = vpow.pop %v3994
        %v3996 = vmul.f32 %v3975, 1.442695
        %v3997 = vpow.pop %v3996
        %v3998 = vmul.f32 %v3976, 1.442695
        %v3999 = vpow.pop %v3998
        %v4000 = vmul.f32 %v3977, 1.442695
        %v4001 = vpow.pop %v4000
        %v4002 = vmul.f32 %v3978, 1.442695
        %v4003 = vpow.pop %v4002
        %v4004 = vmul.f32 %v3979, 1.442695
        %v4005 = vpow.pop %v4004
        %v4006 = vmul.f32 %v3980, 1.442695
        %v4007 = vpow.pop %v4006
        %v4008 = vmul.f32 %v3981, 1.442695
        %v4009 = vpow.pop %v4008
        %v4010 = vmul.f32 %v3982, 1.442695
        %v4011 = vpow.pop %v4010
        %v4012 = vmul.f32 %v3983, 1.442695
        %v4013 = vpow.pop %v4012
        %v4014 = vmul.f32 %v3984, 1.442695
        %v4015 = vpow.pop %v4014
        %v4016 = vmul.f32 %v3985, 1.442695
        %v4017 = vpow.pop %v4016
        %v4018 = vadd.f32 %v3987, 1.0
        %v4019 = vadd.f32 %v3989, 1.0
        %v4020 = vadd.f32 %v3991, 1.0
        %v4021 = vadd.f32 %v3993, 1.0
        %v4022 = vadd.f32 %v3995, 1.0
        %v4023 = vadd.f32 %v3997, 1.0
        %v4024 = vadd.f32 %v3999, 1.0
        %v4025 = vadd.f32 %v4001, 1.0
        %v4026 = vadd.f32 %v4003, 1.0
        %v4027 = vadd.f32 %v4005, 1.0
        %v4028 = vadd.f32 %v4007, 1.0
        %v4029 = vadd.f32 %v4009, 1.0
        %v4030 = vadd.f32 %v4011, 1.0
        %v4031 = vadd.f32 %v4013, 1.0
        %v4032 = vadd.f32 %v4015, 1.0
        %v4033 = vadd.f32 %v4017, 1.0
        %v4034 = vrcp.pop %v4018
        %v4035 = vmul.f32 1.0, %v4034
        %v4036 = vrcp.pop %v4019
        %v4037 = vmul.f32 1.0, %v4036
        %v4038 = vrcp.pop %v4020
        %v4039 = vmul.f32 1.0, %v4038
        %v4040 = vrcp.pop %v4021
        %v4041 = vmul.f32 1.0, %v4040
        %v4042 = vrcp.pop %v4022
        %v4043 = vmul.f32 1.0, %v4042
        %v4044 = vrcp.pop %v4023
        %v4045 = vmul.f32 1.0, %v4044
        %v4046 = vrcp.pop %v4024
        %v4047 = vmul.f32 1.0, %v4046
        %v4048 = vrcp.pop %v4025
        %v4049 = vmul.f32 1.0, %v4048
        %v4050 = vrcp.pop %v4026
        %v4051 = vmul.f32 1.0, %v4050
        %v4052 = vrcp.pop %v4027
        %v4053 = vmul.f32 1.0, %v4052
        %v4054 = vrcp.pop %v4028
        %v4055 = vmul.f32 1.0, %v4054
        %v4056 = vrcp.pop %v4029
        %v4057 = vmul.f32 1.0, %v4056
        %v4058 = vrcp.pop %v4030
        %v4059 = vmul.f32 1.0, %v4058
        %v4060 = vrcp.pop %v4031
        %v4061 = vmul.f32 1.0, %v4060
        %v4062 = vrcp.pop %v4032
        %v4063 = vmul.f32 1.0, %v4062
        %v4064 = vrcp.pop %v4033
        %v4065 = vmul.f32 1.0, %v4064
        %4066 = vst [vmem:[%s425] sm:$0xff] %v4035
        %4067 = vst [vmem:[%s425 + $0x8] sm:$0xff] %v4037
        %4068 = vst [vmem:[%s425 + $0x10] sm:$0xff] %v4039
        %4069 = vst [vmem:[%s425 + $0x18] sm:$0xff] %v4041
        %4070 = vst [vmem:[%s425 + $0x20] sm:$0xff] %v4043
        %4071 = vst [vmem:[%s425 + $0x28] sm:$0xff] %v4045
        %4072 = vst [vmem:[%s425 + $0x30] sm:$0xff] %v4047
        %4073 = vst [vmem:[%s425 + $0x38] sm:$0xff] %v4049
        %4074 = vst [vmem:[%s425 + $0x40] sm:$0xff] %v4051
        %4075 = vst [vmem:[%s425 + $0x48] sm:$0xff] %v4053
        %4076 = vst [vmem:[%s425 + $0x50] sm:$0xff] %v4055
        %4077 = vst [vmem:[%s425 + $0x58] sm:$0xff] %v4057
        %4078 = vst [vmem:[%s425 + $0x60] sm:$0xff] %v4059
        %4079 = vst [vmem:[%s425 + $0x68] sm:$0xff] %v4061
        %4080 = vst [vmem:[%s425 + $0x70] sm:$0xff] %v4063
        %4081 = vst [vmem:[%s425 + $0x78] sm:$0xff] %v4065
        %s4082 = sand.u32 %s250, 1
        %s4083 = scalar_lea.sflag [#allocation4], %s4082
        %s4084 = sand.u32 %s250, 1
        %s4085 = smul.addr %s4084, 128
        %s4086 = scalar_lea.vmem [#allocation11], %s4085
        // Predicated region
        $region81: #{_lambda_.3} parent=59 // pred_check
          %p4087 = pneg %p260
        $region82: #{_lambda_.3} parent=59 // pred_check_branch
          %4089 = sbr.rel (%p4087) target = $region84
        $region83: #{_lambda_.3} parent=59 // pred_region
          %s4091 = ssub.s32 2048, 2048
          %4092 = vsyncadd %s4083, %s4091
          %s4093 = smul.addr %s27, 16
          %s4094 = smul.addr %s4093, 128
          %s4095 = scalar_lea.hbm %s10, %s4094
          %s4096 = sshll.u32 %s4086, 4
          %s4097 = int_to_ptr.vmem [resolvable:$true] %s4096
          %4102 = dma.vmem_to_hbm [thread:$0]  %s4097, 2048, %s4095, %s4083, 128, 128, 8
        $region84: #{_lambda_.3} parent=59 // pred_fallthru
          _
      $region60: #{_lambda_.3} parent=5 // pred_fallthru
        _
      %p4103 = scmp.le.s32.totalorder 2, %s22
      // Predicated region
      $region85: #{_lambda_.3} parent=5 // pred_check
        %p4104 = pneg %p4103
      $region86: #{_lambda_.3} parent=5 // pred_check_branch
        %4106 = sbr.rel (%p4104) target = $region88
      $region87: #{_lambda_.3} parent=5 // pred_region
        %s4107 = ssub.s32 %s22, 2
        // Predicated region
        $region89: #{_lambda_.3} parent=87 // pred_check
          %p4108 = pneg %p266
        $region90: #{_lambda_.3} parent=87 // pred_check_branch
          %4110 = sbr.rel (%p4108) target = $region92
        $region91: #{_lambda_.3} parent=87 // pred_region
          %s4111 = sand.u32 %s251, 1
          %s4112 = scalar_lea.sflag [#allocation4], %s4111
          %s4113 = sand.u32 %s251, 1
          %s4114 = smul.addr %s4113, 128
          %s4115 = scalar_lea.vmem [#allocation11], %s4114
          %4116 = dma.done %s4112, 2048
        $region92: #{_lambda_.3} parent=87 // pred_fallthru
          _
      $region88: #{_lambda_.3} parent=5 // pred_fallthru
        _
    $region6: #{_lambda_.3} parent=1 // loop_footer
      %s26 = sadd.s32 1, %s22
    $region7: #{_lambda_.3} parent=1 // loop_footer_branch
      %21 = sbr.rel target = $region3
    $region8: #{_lambda_.3} parent=1 // loop_exit
      _
    %4117 = vsyncpa [#allocation3], 1
    %s4118 = scalar_lea.sflag [#allocation3], 1
    %4119 = vsyncpa %s4118, 1
    %4120 = vsyncpa [#allocation6], 1
    %4121 = vsyncpa [#allocation9], 1
    %4122 = vsyncpa [#allocation4], 1
    %s4123 = scalar_lea.sflag [#allocation4], 1
    %4124 = vsyncpa %s4123, 1

</llo_original>
